<compile_context>
chip_gen: v7x
topology: tpu7x:2x2x1
jax: 0.10.0
libtpu: 0.0.40
codegen_flags: <defaults>
</compile_context>

<pallas_src>
import functools

import jax
import jax.numpy as jnp
from jax.experimental import pallas as pl
from jax.experimental.pallas import tpu as pltpu

LANES = 128


def _round_up(n, m):
    return -(-n // m) * m


# ---------------------------------------------------------------------------
# Pallas kernels
# ---------------------------------------------------------------------------
def _conv_relu_pool_kernel(p_ref, w_ref, b_ref, o_ref, *, n_rows):
    """Fused (valid 2x2 conv) + 2x2/2 max-pool + bias + ReLU, whole batch.

    p_ref : (4*N, K) bf16 im2col rows; rows [t*N : (t+1)*N] are pool tap t,
            row t*N + b*M_pad + m is pool pixel m of image b. K = kh*kw*C_in.
    w_ref : (K, 128) bf16 weights, out-channels zero-padded to 128 lanes.
    b_ref : (1, 128) f32 bias, zero-padded.
    o_ref : (N, 128) bf16 pooled activations, lane-dense (padded channels = 0).
    """
    y = jnp.dot(p_ref[...], w_ref[...], preferred_element_type=jnp.float32)
    n = n_rows
    pooled = jnp.maximum(jnp.maximum(y[0 * n:1 * n], y[1 * n:2 * n]),
                         jnp.maximum(y[2 * n:3 * n], y[3 * n:4 * n]))
    # bias + ReLU once, after the pool max (bias is tap-invariant, ReLU monotone)
    pooled = jnp.maximum(pooled + b_ref[...], 0.0)
    o_ref[...] = pooled.astype(o_ref.dtype)


def _mlp_kernel(x_ref, w1_ref, b1_ref, w2_ref, b2_ref, w3_ref, b3_ref, o_ref):
    """fc1+ReLU -> fc2+ReLU -> fc3, fully fused, VMEM resident, bf16 MXU / f32 VPU."""
    h = jnp.dot(x_ref[...], w1_ref[...], preferred_element_type=jnp.float32)
    h = jnp.maximum(h + b1_ref[...], 0.0)
    h = jnp.dot(h.astype(jnp.bfloat16), w2_ref[...],
                preferred_element_type=jnp.float32)
    h = jnp.maximum(h + b2_ref[...], 0.0)
    y = jnp.dot(h.astype(jnp.bfloat16), w3_ref[...],
                preferred_element_type=jnp.float32)
    o_ref[...] = y + b3_ref[...]          # (B, 128) lane-dense f32 store


# ---------------------------------------------------------------------------
# Kernel wrappers
# ---------------------------------------------------------------------------
def conv_relu_pool(patches, w, b, n_rows):
    """patches: (4*n_rows, K) bf16. Returns (n_rows, 128) bf16 lane-dense."""
    total, k = patches.shape
    n_out = w.shape[1]
    kernel = functools.partial(_conv_relu_pool_kernel, n_rows=n_rows)
    return pl.pallas_call(
        kernel,
        out_shape=jax.ShapeDtypeStruct((n_rows, n_out), jnp.bfloat16),
        grid=(1,),
        in_specs=[
            pl.BlockSpec((total, k), lambda i: (0, 0)),
            pl.BlockSpec((k, n_out), lambda i: (0, 0)),
            pl.BlockSpec((1, n_out), lambda i: (0, 0)),
        ],
        out_specs=pl.BlockSpec((n_rows, n_out), lambda i: (0, 0)),
        compiler_params=pltpu.CompilerParams(
            dimension_semantics=("arbitrary",)),
    )(patches, w, b)


def mlp_head(x, w1, b1, w2, b2, w3, b3):
    B = x.shape[0]
    return pl.pallas_call(
        _mlp_kernel,
        out_shape=jax.ShapeDtypeStruct((B, LANES), jnp.float32),
        grid=(1,),
        in_specs=[
            pl.BlockSpec(x.shape, lambda i: (0, 0)),
            pl.BlockSpec(w1.shape, lambda i: (0, 0)),
            pl.BlockSpec(b1.shape, lambda i: (0, 0)),
            pl.BlockSpec(w2.shape, lambda i: (0, 0)),
            pl.BlockSpec(b2.shape, lambda i: (0, 0)),
            pl.BlockSpec(w3.shape, lambda i: (0, 0)),
            pl.BlockSpec(b3.shape, lambda i: (0, 0)),
        ],
        out_specs=pl.BlockSpec((B, LANES), lambda i: (0, 0)),
        compiler_params=pltpu.CompilerParams(
            dimension_semantics=("arbitrary",)),
    )(x, w1, b1, w2, b2, w3, b3)


# ---------------------------------------------------------------------------
# Tiny XLA glue: strided-slice im2col rows for "conv 2x2 then pool 2x2"
# ---------------------------------------------------------------------------
def _pool_conv_patches(x, m_pad):
    """x: (B, H, W, C) NHWC. Returns a single (4*B*m_pad, 4*C) bf16 matrix.

    Rows are grouped by pool tap (di, dj); within a group, row b*m_pad + m is
    the im2col patch of conv-output pixel (2*ph+di, 2*pw+dj) for pool pixel
    m = ph*PW + pw of image b. Column order is (dy, dx, c). Rows m >= PH*PW
    are zero padding (their outputs are discarded / hit zero weight rows)."""
    B, H, W, C = x.shape
    PH, PW = (H - 1) // 2, (W - 1) // 2
    taps = []
    for di in range(2):
        for dj in range(2):
            cols = [
                x[:, di + dy: di + dy + 2 * PH: 2,
                     dj + dx: dj + dx + 2 * PW: 2, :]
                for dy in range(2) for dx in range(2)
            ]                                          # each (B, PH, PW, C)
            p = jnp.concatenate(cols, axis=-1)         # (B, PH, PW, 4C)
            p = p.reshape(B, PH * PW, 4 * C)
            p = jnp.pad(p, ((0, 0), (0, m_pad - PH * PW), (0, 0)))
            taps.append(p)
    out = jnp.stack(taps, axis=0)                      # (4, B, m_pad, 4C)
    return out.reshape(4 * B * m_pad, 4 * C).astype(jnp.bfloat16)


# ---------------------------------------------------------------------------
# Parameters: PyTorch-layout init + one-time kernel-layout preparation
# ---------------------------------------------------------------------------
def init_params(key, num_classes=10):
    ks = jax.random.split(key, 10)

    def w_init(k, shape, fan_in):
        return jax.random.normal(k, shape, jnp.float32) / jnp.sqrt(float(fan_in))

    return {
        "conv1_w": w_init(ks[0], (32, 3, 2, 2), 3 * 2 * 2),
        "conv1_b": w_init(ks[1], (32,), 3 * 2 * 2),
        "conv2_w": w_init(ks[2], (64, 32, 2, 2), 32 * 2 * 2),
        "conv2_b": w_init(ks[3], (64,), 32 * 2 * 2),
        "fc1_w": w_init(ks[4], (200, 64 * 7 * 7), 64 * 7 * 7),
        "fc1_b": w_init(ks[5], (200,), 64 * 7 * 7),
        "fc2_w": w_init(ks[6], (200, 200), 200),
        "fc2_b": w_init(ks[7], (200,), 200),
        "fc3_w": w_init(ks[8], (num_classes, 200), 200),
        "fc3_b": w_init(ks[9], (num_classes,), 200),
    }


def prepare_params(p, num_classes=10):
    """One-time repack: transpose to (K, N), zero-pad to lane/sublane friendly
    shapes, bf16-cast the MXU-side weights, and permute fc1 columns from the
    PyTorch (c,h,w) flatten to our (h,w,c) flatten with 64 extra zero rows for
    the padded spatial row. Runs once, never inside the forward."""
    def pad_to(a, rows, cols):
        return jnp.pad(a, ((0, rows - a.shape[0]), (0, cols - a.shape[1])))

    # conv weights (O,C,kh,kw) -> (kh,kw,C,O) -> (kh*kw*C, O), pad O -> 128 lanes
    c1w = pad_to(p["conv1_w"].transpose(2, 3, 1, 0).reshape(2 * 2 * 3, 32),
                 12, LANES).astype(jnp.bfloat16)
    c1b = pad_to(p["conv1_b"].reshape(1, 32), 1, LANES)            # f32
    c2w = pad_to(p["conv2_w"].transpose(2, 3, 1, 0).reshape(2 * 2 * 32, 64),
                 128, LANES).astype(jnp.bfloat16)
    c2b = pad_to(p["conv2_b"].reshape(1, 64), 1, LANES)            # f32

    # fc1: reorder K from (c,h,w) to (h,w,c), transpose to (K,N);
    # pad K 3136 -> 3200 (one extra zero spatial row) and N 200 -> 256.
    f1w = (p["fc1_w"].reshape(200, 64, 7, 7).transpose(0, 2, 3, 1)
           .reshape(200, 3136).T)
    f1w = pad_to(f1w, 3200, 256).astype(jnp.bfloat16)
    f1b = pad_to(p["fc1_b"].reshape(1, 200), 1, 256)                # f32
    f2w = pad_to(p["fc2_w"].T, 256, 256).astype(jnp.bfloat16)
    f2b = pad_to(p["fc2_b"].reshape(1, 200), 1, 256)                # f32
    f3w = pad_to(p["fc3_w"].T, 256, LANES).astype(jnp.bfloat16)
    f3b = pad_to(p["fc3_b"].reshape(1, num_classes), 1, LANES)      # f32

    return {"c1w": c1w, "c1b": c1b, "c2w": c2w, "c2b": c2b,
            "f1w": f1w, "f1b": f1b, "f2w": f2w, "f2b": f2b,
            "f3w": f3w, "f3b": f3b}


# ---------------------------------------------------------------------------
# Forward pass
# ---------------------------------------------------------------------------
def subnet_forward(kp, x, num_classes=10):
    # x: (B, 3, 32, 32) NCHW (PyTorch layout). One tiny transpose to NHWC.
    x = jnp.transpose(x, (0, 2, 3, 1))                     # (B, 32, 32, 3)
    B = x.shape[0]

    # Stage 1: conv1(3->32, 2x2) + ReLU + maxpool2  -> (B, 15, 15, 32)
    m1, m1p = 15 * 15, _round_up(15 * 15, 8)               # 225 -> 232
    p1 = _pool_conv_patches(x, m1p)                        # (4*B*232, 12) bf16
    y1 = conv_relu_pool(p1, kp["c1w"], kp["c1b"], B * m1p)  # (B*232, 128) bf16
    y1 = y1.reshape(B, m1p, LANES)[:, :m1, :32].reshape(B, 15, 15, 32)

    # Stage 2: conv2(32->64, 2x2) + ReLU + maxpool2 -> (B, 7, 7, 64)
    m2, m2p = 7 * 7, _round_up(7 * 7, 8)                   # 49 -> 56
    p2 = _pool_conv_patches(y1, m2p)                       # (4*B*56, 128) bf16
    y2 = conv_relu_pool(p2, kp["c2w"], kp["c2b"], B * m2p)  # (B*56, 128) bf16

    # FC head: keep 50 spatial rows x 64 ch = 3200 features; row 49 is junk but
    # hits the zero rows padded into f1w, so it contributes exactly 0.
    feat = y2.reshape(B, m2p, LANES)[:, :50, :64].reshape(B, 3200)
    logits = mlp_head(feat, kp["f1w"], kp["f1b"], kp["f2w"], kp["f2b"],
                      kp["f3w"], kp["f3b"])                # (B, 128) f32
    return logits[:, :num_classes]


if __name__ == "__main__":
    key = jax.random.PRNGKey(0)
    pkey, xkey = jax.random.split(key)
    params = init_params(pkey)
    kparams = prepare_params(params)          # one-time layout prep, not per step
    # Spatial size 32 is forced by fc1 expecting 64*7*7 features.
    x = jax.random.normal(xkey, (2, 3, 32, 32), jnp.float32)
    fwd = jax.jit(subnet_forward)
    out = jax.block_until_ready(fwd(kparams, x))
    assert out.shape == (2, 10) and out.dtype == jnp.float32
    print("KERNEL_OK")
</pallas_src>

<mosaic_0001>
module attributes {stable_mosaic.version = 11 : i64} {
  func.func @_conv_relu_pool_kernel(%arg0: i32, %arg1: memref<1856x12xbf16, #tpu.memory_space<vmem>>, %arg2: memref<12x128xbf16, #tpu.memory_space<vmem>>, %arg3: memref<1x128xf32, #tpu.memory_space<vmem>>, %arg4: memref<464x128xbf16, #tpu.memory_space<vmem>>) attributes {dimension_semantics = [#tpu.dimension_semantics<arbitrary>], iteration_bounds = array<i64: 1>, scalar_prefetch = 0 : i64, scratch_operands = 0 : i64, tpu.core_type = #tpu.core_type<tc>, window_params = [{pipeline_mode = #tpu.pipeline_mode<synchronous>, transform_indices = @transform_0, window_bounds = array<i64: 1856, 12>}, {pipeline_mode = #tpu.pipeline_mode<synchronous>, transform_indices = @transform_1, window_bounds = array<i64: 12, 128>}, {pipeline_mode = #tpu.pipeline_mode<synchronous>, transform_indices = @transform_2, window_bounds = array<i64: 1, 128>}, {pipeline_mode = #tpu.pipeline_mode<synchronous>, transform_indices = @transform_3, window_bounds = array<i64: 464, 128>}]} {
    %c0 = arith.constant 0 : index
    %c0_0 = arith.constant 0 : index
    %0 = vector.load %arg1[%c0, %c0_0] : memref<1856x12xbf16, #tpu.memory_space<vmem>>, vector<1856x12xbf16>
    %c0_1 = arith.constant 0 : index
    %c0_2 = arith.constant 0 : index
    %1 = vector.load %arg2[%c0_1, %c0_2] : memref<12x128xbf16, #tpu.memory_space<vmem>>, vector<12x128xbf16>
    %cst = arith.constant dense<0.000000e+00> : vector<1856x128xf32>
    %2 = tpu.matmul %0, %1, %cst {dimension_numbers = #tpu.dot_dimension_numbers<[1], [0], [0], [1], [0, 0, 1, 1], [], []>} : vector<1856x12xbf16>, vector<12x128xbf16>, vector<1856x128xf32> -> vector<1856x128xf32>
    %3 = vector.extract_strided_slice %2 {offsets = [0, 0], sizes = [464, 128], strides = [1, 1]} : vector<1856x128xf32> to vector<464x128xf32>
    %4 = vector.extract_strided_slice %2 {offsets = [464, 0], sizes = [464, 128], strides = [1, 1]} : vector<1856x128xf32> to vector<464x128xf32>
    %5 = arith.maximumf %3, %4 : vector<464x128xf32>
    %6 = vector.extract_strided_slice %2 {offsets = [928, 0], sizes = [464, 128], strides = [1, 1]} : vector<1856x128xf32> to vector<464x128xf32>
    %7 = vector.extract_strided_slice %2 {offsets = [1392, 0], sizes = [464, 128], strides = [1, 1]} : vector<1856x128xf32> to vector<464x128xf32>
    %8 = arith.maximumf %6, %7 : vector<464x128xf32>
    %9 = arith.maximumf %5, %8 : vector<464x128xf32>
    %c0_3 = arith.constant 0 : index
    %c0_4 = arith.constant 0 : index
    %10 = vector.load %arg3[%c0_3, %c0_4] : memref<1x128xf32, #tpu.memory_space<vmem>>, vector<1x128xf32>
    %11 = vector.broadcast %10 : vector<1x128xf32> to vector<464x128xf32>
    %12 = arith.addf %9, %11 : vector<464x128xf32>
    %cst_5 = arith.constant 0.000000e+00 : f32
    %13 = vector.broadcast %cst_5 : f32 to vector<464x128xf32>
    %14 = arith.maximumf %12, %13 : vector<464x128xf32>
    %15 = arith.truncf %14 : vector<464x128xf32> to vector<464x128xbf16>
    %c0_6 = arith.constant 0 : index
    %c0_7 = arith.constant 0 : index
    %16 = vector.load %arg4[%c0_6, %c0_7] : memref<464x128xbf16, #tpu.memory_space<vmem>>, vector<464x128xbf16>
    tpu.vector_store %arg4[%c0_6, %c0_7], %15 {strides = array<i32>} : memref<464x128xbf16, #tpu.memory_space<vmem>>, vector<464x128xbf16>,
    return
  }
  func.func @transform_0(%arg0: i32) -> (i32, i32) {
    %c0_i32 = arith.constant 0 : i32
    %c0_i32_0 = arith.constant 0 : i32
    %c0_i32_1 = arith.constant 0 : i32
    return %c0_i32, %c0_i32_0 : i32, i32
  }
  func.func @transform_1(%arg0: i32) -> (i32, i32) {
    %c0_i32 = arith.constant 0 : i32
    %c0_i32_0 = arith.constant 0 : i32
    %c0_i32_1 = arith.constant 0 : i32
    return %c0_i32, %c0_i32_0 : i32, i32
  }
  func.func @transform_2(%arg0: i32) -> (i32, i32) {
    %c0_i32 = arith.constant 0 : i32
    %c0_i32_0 = arith.constant 0 : i32
    %c0_i32_1 = arith.constant 0 : i32
    return %c0_i32, %c0_i32_0 : i32, i32
  }
  func.func @transform_3(%arg0: i32) -> (i32, i32) {
    %c0_i32 = arith.constant 0 : i32
    %c0_i32_0 = arith.constant 0 : i32
    %c0_i32_1 = arith.constant 0 : i32
    return %c0_i32, %c0_i32_0 : i32, i32
  }
}

module attributes {stable_mosaic.version = 11 : i64} {
  func.func @_conv_relu_pool_kernel(%arg0: i32, %arg1: memref<448x128xbf16, #tpu.memory_space<vmem>>, %arg2: memref<128x128xbf16, #tpu.memory_space<vmem>>, %arg3: memref<1x128xf32, #tpu.memory_space<vmem>>, %arg4: memref<112x128xbf16, #tpu.memory_space<vmem>>) attributes {dimension_semantics = [#tpu.dimension_semantics<arbitrary>], iteration_bounds = array<i64: 1>, scalar_prefetch = 0 : i64, scratch_operands = 0 : i64, tpu.core_type = #tpu.core_type<tc>, window_params = [{pipeline_mode = #tpu.pipeline_mode<synchronous>, transform_indices = @transform_0, window_bounds = array<i64: 448, 128>}, {pipeline_mode = #tpu.pipeline_mode<synchronous>, transform_indices = @transform_1, window_bounds = array<i64: 128, 128>}, {pipeline_mode = #tpu.pipeline_mode<synchronous>, transform_indices = @transform_2, window_bounds = array<i64: 1, 128>}, {pipeline_mode = #tpu.pipeline_mode<synchronous>, transform_indices = @transform_3, window_bounds = array<i64: 112, 128>}]} {
    %c0 = arith.constant 0 : index
    %c0_0 = arith.constant 0 : index
    %0 = vector.load %arg1[%c0, %c0_0] : memref<448x128xbf16, #tpu.memory_space<vmem>>, vector<448x128xbf16>
    %c0_1 = arith.constant 0 : index
    %c0_2 = arith.constant 0 : index
    %1 = vector.load %arg2[%c0_1, %c0_2] : memref<128x128xbf16, #tpu.memory_space<vmem>>, vector<128x128xbf16>
    %cst = arith.constant dense<0.000000e+00> : vector<448x128xf32>
    %2 = tpu.matmul %0, %1, %cst {dimension_numbers = #tpu.dot_dimension_numbers<[1], [0], [0], [1], [0, 0, 1, 1], [], []>} : vector<448x128xbf16>, vector<128x128xbf16>, vector<448x128xf32> -> vector<448x128xf32>
    %3 = vector.extract_strided_slice %2 {offsets = [0, 0], sizes = [112, 128], strides = [1, 1]} : vector<448x128xf32> to vector<112x128xf32>
    %4 = vector.extract_strided_slice %2 {offsets = [112, 0], sizes = [112, 128], strides = [1, 1]} : vector<448x128xf32> to vector<112x128xf32>
    %5 = arith.maximumf %3, %4 : vector<112x128xf32>
    %6 = vector.extract_strided_slice %2 {offsets = [224, 0], sizes = [112, 128], strides = [1, 1]} : vector<448x128xf32> to vector<112x128xf32>
    %7 = vector.extract_strided_slice %2 {offsets = [336, 0], sizes = [112, 128], strides = [1, 1]} : vector<448x128xf32> to vector<112x128xf32>
    %8 = arith.maximumf %6, %7 : vector<112x128xf32>
    %9 = arith.maximumf %5, %8 : vector<112x128xf32>
    %c0_3 = arith.constant 0 : index
    %c0_4 = arith.constant 0 : index
    %10 = vector.load %arg3[%c0_3, %c0_4] : memref<1x128xf32, #tpu.memory_space<vmem>>, vector<1x128xf32>
    %11 = vector.broadcast %10 : vector<1x128xf32> to vector<112x128xf32>
    %12 = arith.addf %9, %11 : vector<112x128xf32>
    %cst_5 = arith.constant 0.000000e+00 : f32
    %13 = vector.broadcast %cst_5 : f32 to vector<112x128xf32>
    %14 = arith.maximumf %12, %13 : vector<112x128xf32>
    %15 = arith.truncf %14 : vector<112x128xf32> to vector<112x128xbf16>
    %c0_6 = arith.constant 0 : index
    %c0_7 = arith.constant 0 : index
    %16 = vector.load %arg4[%c0_6, %c0_7] : memref<112x128xbf16, #tpu.memory_space<vmem>>, vector<112x128xbf16>
    tpu.vector_store %arg4[%c0_6, %c0_7], %15 {strides = array<i32>} : memref<112x128xbf16, #tpu.memory_space<vmem>>, vector<112x128xbf16>,
    return
  }
  func.func @transform_0(%arg0: i32) -> (i32, i32) {
    %c0_i32 = arith.constant 0 : i32
    %c0_i32_0 = arith.constant 0 : i32
    %c0_i32_1 = arith.constant 0 : i32
    return %c0_i32, %c0_i32_0 : i32, i32
  }
  func.func @transform_1(%arg0: i32) -> (i32, i32) {
    %c0_i32 = arith.constant 0 : i32
    %c0_i32_0 = arith.constant 0 : i32
    %c0_i32_1 = arith.constant 0 : i32
    return %c0_i32, %c0_i32_0 : i32, i32
  }
  func.func @transform_2(%arg0: i32) -> (i32, i32) {
    %c0_i32 = arith.constant 0 : i32
    %c0_i32_0 = arith.constant 0 : i32
    %c0_i32_1 = arith.constant 0 : i32
    return %c0_i32, %c0_i32_0 : i32, i32
  }
  func.func @transform_3(%arg0: i32) -> (i32, i32) {
    %c0_i32 = arith.constant 0 : i32
    %c0_i32_0 = arith.constant 0 : i32
    %c0_i32_1 = arith.constant 0 : i32
    return %c0_i32, %c0_i32_0 : i32, i32
  }
}

module attributes {stable_mosaic.version = 11 : i64} {
  func.func @_mlp_kernel(%arg0: i32, %arg1: memref<2x3200xbf16, #tpu.memory_space<vmem>>, %arg2: memref<3200x256xbf16, #tpu.memory_space<vmem>>, %arg3: memref<1x256xf32, #tpu.memory_space<vmem>>, %arg4: memref<256x256xbf16, #tpu.memory_space<vmem>>, %arg5: memref<1x256xf32, #tpu.memory_space<vmem>>, %arg6: memref<256x128xbf16, #tpu.memory_space<vmem>>, %arg7: memref<1x128xf32, #tpu.memory_space<vmem>>, %arg8: memref<2x128xf32, #tpu.memory_space<vmem>>) attributes {dimension_semantics = [#tpu.dimension_semantics<arbitrary>], iteration_bounds = array<i64: 1>, scalar_prefetch = 0 : i64, scratch_operands = 0 : i64, tpu.core_type = #tpu.core_type<tc>, window_params = [{pipeline_mode = #tpu.pipeline_mode<synchronous>, transform_indices = @transform_0, window_bounds = array<i64: 2, 3200>}, {pipeline_mode = #tpu.pipeline_mode<synchronous>, transform_indices = @transform_1, window_bounds = array<i64: 3200, 256>}, {pipeline_mode = #tpu.pipeline_mode<synchronous>, transform_indices = @transform_2, window_bounds = array<i64: 1, 256>}, {pipeline_mode = #tpu.pipeline_mode<synchronous>, transform_indices = @transform_3, window_bounds = array<i64: 256, 256>}, {pipeline_mode = #tpu.pipeline_mode<synchronous>, transform_indices = @transform_4, window_bounds = array<i64: 1, 256>}, {pipeline_mode = #tpu.pipeline_mode<synchronous>, transform_indices = @transform_5, window_bounds = array<i64: 256, 128>}, {pipeline_mode = #tpu.pipeline_mode<synchronous>, transform_indices = @transform_6, window_bounds = array<i64: 1, 128>}, {pipeline_mode = #tpu.pipeline_mode<synchronous>, transform_indices = @transform_7, window_bounds = array<i64: 2, 128>}]} {
    %c0 = arith.constant 0 : index
    %c0_0 = arith.constant 0 : index
    %0 = vector.load %arg1[%c0, %c0_0] : memref<2x3200xbf16, #tpu.memory_space<vmem>>, vector<2x3200xbf16>
    %c0_1 = arith.constant 0 : index
    %c0_2 = arith.constant 0 : index
    %1 = vector.load %arg2[%c0_1, %c0_2] : memref<3200x256xbf16, #tpu.memory_space<vmem>>, vector<3200x256xbf16>
    %cst = arith.constant dense<0.000000e+00> : vector<2x256xf32>
    %2 = tpu.matmul %0, %1, %cst {dimension_numbers = #tpu.dot_dimension_numbers<[1], [0], [0], [1], [0, 0, 1, 1], [], []>} : vector<2x3200xbf16>, vector<3200x256xbf16>, vector<2x256xf32> -> vector<2x256xf32>
    %c0_3 = arith.constant 0 : index
    %c0_4 = arith.constant 0 : index
    %3 = vector.load %arg3[%c0_3, %c0_4] : memref<1x256xf32, #tpu.memory_space<vmem>>, vector<1x256xf32>
    %4 = vector.broadcast %3 : vector<1x256xf32> to vector<2x256xf32>
    %5 = arith.addf %2, %4 : vector<2x256xf32>
    %cst_5 = arith.constant 0.000000e+00 : f32
    %6 = vector.broadcast %cst_5 : f32 to vector<2x256xf32>
    %7 = arith.maximumf %5, %6 : vector<2x256xf32>
    %8 = arith.truncf %7 : vector<2x256xf32> to vector<2x256xbf16>
    %c0_6 = arith.constant 0 : index
    %c0_7 = arith.constant 0 : index
    %9 = vector.load %arg4[%c0_6, %c0_7] : memref<256x256xbf16, #tpu.memory_space<vmem>>, vector<256x256xbf16>
    %cst_8 = arith.constant dense<0.000000e+00> : vector<2x256xf32>
    %10 = tpu.matmul %8, %9, %cst_8 {dimension_numbers = #tpu.dot_dimension_numbers<[1], [0], [0], [1], [0, 0, 1, 1], [], []>} : vector<2x256xbf16>, vector<256x256xbf16>, vector<2x256xf32> -> vector<2x256xf32>
    %c0_9 = arith.constant 0 : index
    %c0_10 = arith.constant 0 : index
    %11 = vector.load %arg5[%c0_9, %c0_10] : memref<1x256xf32, #tpu.memory_space<vmem>>, vector<1x256xf32>
    %12 = vector.broadcast %11 : vector<1x256xf32> to vector<2x256xf32>
    %13 = arith.addf %10, %12 : vector<2x256xf32>
    %cst_11 = arith.constant 0.000000e+00 : f32
    %14 = vector.broadcast %cst_11 : f32 to vector<2x256xf32>
    %15 = arith.maximumf %13, %14 : vector<2x256xf32>
    %16 = arith.truncf %15 : vector<2x256xf32> to vector<2x256xbf16>
    %c0_12 = arith.constant 0 : index
    %c0_13 = arith.constant 0 : index
    %17 = vector.load %arg6[%c0_12, %c0_13] : memref<256x128xbf16, #tpu.memory_space<vmem>>, vector<256x128xbf16>
    %cst_14 = arith.constant dense<0.000000e+00> : vector<2x128xf32>
    %18 = tpu.matmul %16, %17, %cst_14 {dimension_numbers = #tpu.dot_dimension_numbers<[1], [0], [0], [1], [0, 0, 1, 1], [], []>} : vector<2x256xbf16>, vector<256x128xbf16>, vector<2x128xf32> -> vector<2x128xf32>
    %c0_15 = arith.constant 0 : index
    %c0_16 = arith.constant 0 : index
    %19 = vector.load %arg7[%c0_15, %c0_16] : memref<1x128xf32, #tpu.memory_space<vmem>>, vector<1x128xf32>
    %20 = vector.broadcast %19 : vector<1x128xf32> to vector<2x128xf32>
    %21 = arith.addf %18, %20 : vector<2x128xf32>
    %c0_17 = arith.constant 0 : index
    %c0_18 = arith.constant 0 : index
    %22 = vector.load %arg8[%c0_17, %c0_18] : memref<2x128xf32, #tpu.memory_space<vmem>>, vector<2x128xf32>
    tpu.vector_store %arg8[%c0_17, %c0_18], %21 {strides = array<i32>} : memref<2x128xf32, #tpu.memory_space<vmem>>, vector<2x128xf32>,
    return
  }
  func.func @transform_0(%arg0: i32) -> (i32, i32) {
    %c0_i32 = arith.constant 0 : i32
    %c0_i32_0 = arith.constant 0 : i32
    %c0_i32_1 = arith.constant 0 : i32
    return %c0_i32, %c0_i32_0 : i32, i32
  }
  func.func @transform_1(%arg0: i32) -> (i32, i32) {
    %c0_i32 = arith.constant 0 : i32
    %c0_i32_0 = arith.constant 0 : i32
    %c0_i32_1 = arith.constant 0 : i32
    return %c0_i32, %c0_i32_0 : i32, i32
  }
  func.func @transform_2(%arg0: i32) -> (i32, i32) {
    %c0_i32 = arith.constant 0 : i32
    %c0_i32_0 = arith.constant 0 : i32
    %c0_i32_1 = arith.constant 0 : i32
    return %c0_i32, %c0_i32_0 : i32, i32
  }
  func.func @transform_3(%arg0: i32) -> (i32, i32) {
    %c0_i32 = arith.constant 0 : i32
    %c0_i32_0 = arith.constant 0 : i32
    %c0_i32_1 = arith.constant 0 : i32
    return %c0_i32, %c0_i32_0 : i32, i32
  }
  func.func @transform_4(%arg0: i32) -> (i32, i32) {
    %c0_i32 = arith.constant 0 : i32
    %c0_i32_0 = arith.constant 0 : i32
    %c0_i32_1 = arith.constant 0 : i32
    return %c0_i32, %c0_i32_0 : i32, i32
  }
  func.func @transform_5(%arg0: i32) -> (i32, i32) {
    %c0_i32 = arith.constant 0 : i32
    %c0_i32_0 = arith.constant 0 : i32
    %c0_i32_1 = arith.constant 0 : i32
    return %c0_i32, %c0_i32_0 : i32, i32
  }
  func.func @transform_6(%arg0: i32) -> (i32, i32) {
    %c0_i32 = arith.constant 0 : i32
    %c0_i32_0 = arith.constant 0 : i32
    %c0_i32_1 = arith.constant 0 : i32
    return %c0_i32, %c0_i32_0 : i32, i32
  }
  func.func @transform_7(%arg0: i32) -> (i32, i32) {
    %c0_i32 = arith.constant 0 : i32
    %c0_i32_0 = arith.constant 0 : i32
    %c0_i32_1 = arith.constant 0 : i32
    return %c0_i32, %c0_i32_0 : i32, i32
  }
}

</mosaic_0001>

<llo_original>
// kernel: subnet_forward.3
$region0: #{subnet_forward.3}
  #allocation0 [shape = 'u32[]', space=smem, size = 0x4, offset = 0x4, fixed_abs, tag = 'smem constant byte address 0x4 - core index']
  #allocation1 [shape = 'u32[144,128]{1,0:T(1,128)}', space=vmem, size = 0x12000, scoped, tag = 'internal scratch']
  %s0 = inlined_call_operand.vmem [shape: bf16[1856,12], index: 0, kind: input, shape index: {}]
  %s1 = inlined_call_operand.vmem [shape: bf16[12,128], index: 1, kind: input, shape index: {}]
  %s2 = inlined_call_operand.vmem [shape: f32[1,128], index: 2, kind: input, shape index: {}]
  %s3 = inlined_call_operand.vmem [shape: bf16[464,128], index: 3, kind: output, shape index: {}]
  %s4 = sld [smem:[#allocation0]]
  $region22: #{subnet_forward.3} parent=0
    _
  %s6 = ssub.s32 1, %s4
  %s7 = scalar_select 0, %s6, %s4
  // Predicated region
  $region2: #{subnet_forward.3} parent=0 // pred_check
    _
  $region3: #{subnet_forward.3} parent=0 // pred_check_branch
    %9 = sbr.rel (0) target = $region5
  $region4: #{subnet_forward.3} parent=0 // pred_region
    _
  $region5: #{subnet_forward.3} parent=0 // pred_fallthru
    _
  // Predicated region
  $region6: #{subnet_forward.3} parent=0 // pred_check
    _
  $region7: #{subnet_forward.3} parent=0 // pred_check_branch
    %11 = sbr.rel (0) target = $region9
  $region8: #{subnet_forward.3} parent=0 // pred_region
    _
  $region9: #{subnet_forward.3} parent=0 // pred_fallthru
    _
  // Predicated region
  $region10: #{subnet_forward.3} parent=0 // pred_check
    _
  $region11: #{subnet_forward.3} parent=0 // pred_check_branch
    %13 = sbr.rel (0) target = $region13
  $region12: #{subnet_forward.3} parent=0 // pred_region
    _
  $region13: #{subnet_forward.3} parent=0 // pred_fallthru
    _
  %v15 = vld [vmem:[%s0] sm:$0xf]
  %v16 = vld [vmem:[%s0 + $0x4] sm:$0xf]
  %v17 = vld [vmem:[%s0 + $0x8] sm:$0xf]
  %v18 = vld [vmem:[%s0 + $0xc] sm:$0xf]
  %v19 = vld [vmem:[%s0 + $0x10] sm:$0xf]
  %v20 = vld [vmem:[%s0 + $0x14] sm:$0xf]
  %v21 = vld [vmem:[%s0 + $0x18] sm:$0xf]
  %v22 = vld [vmem:[%s0 + $0x1c] sm:$0xf]
  %v23 = vld [vmem:[%s0 + $0x20] sm:$0xf]
  %v24 = vld [vmem:[%s0 + $0x24] sm:$0xf]
  %v25 = vld [vmem:[%s0 + $0x28] sm:$0xf]
  %v26 = vld [vmem:[%s0 + $0x2c] sm:$0xf]
  %v27 = vld [vmem:[%s0 + $0x30] sm:$0xf]
  %v28 = vld [vmem:[%s0 + $0x34] sm:$0xf]
  %v29 = vld [vmem:[%s0 + $0x38] sm:$0xf]
  %v30 = vld [vmem:[%s0 + $0x3c] sm:$0xf]
  %v31 = vld [vmem:[%s0 + $0x40] sm:$0xf]
  %v32 = vld [vmem:[%s0 + $0x44] sm:$0xf]
  %v33 = vld [vmem:[%s0 + $0x48] sm:$0xf]
  %v34 = vld [vmem:[%s0 + $0x4c] sm:$0xf]
  %v35 = vld [vmem:[%s0 + $0x50] sm:$0xf]
  %v36 = vld [vmem:[%s0 + $0x54] sm:$0xf]
  %v37 = vld [vmem:[%s0 + $0x58] sm:$0xf]
  %v38 = vld [vmem:[%s0 + $0x5c] sm:$0xf]
  %v39 = vld [vmem:[%s0 + $0x60] sm:$0xf]
  %v40 = vld [vmem:[%s0 + $0x64] sm:$0xf]
  %v41 = vld [vmem:[%s0 + $0x68] sm:$0xf]
  %v42 = vld [vmem:[%s0 + $0x6c] sm:$0xf]
  %v43 = vld [vmem:[%s0 + $0x70] sm:$0xf]
  %v44 = vld [vmem:[%s0 + $0x74] sm:$0xf]
  %v45 = vld [vmem:[%s0 + $0x78] sm:$0xf]
  %v46 = vld [vmem:[%s0 + $0x7c] sm:$0xf]
  %v47 = vld [vmem:[%s0 + $0x80] sm:$0xf]
  %v48 = vld [vmem:[%s0 + $0x84] sm:$0xf]
  %v49 = vld [vmem:[%s0 + $0x88] sm:$0xf]
  %v50 = vld [vmem:[%s0 + $0x8c] sm:$0xf]
  %v51 = vld [vmem:[%s0 + $0x90] sm:$0xf]
  %v52 = vld [vmem:[%s0 + $0x94] sm:$0xf]
  %v53 = vld [vmem:[%s0 + $0x98] sm:$0xf]
  %v54 = vld [vmem:[%s0 + $0x9c] sm:$0xf]
  %v55 = vld [vmem:[%s0 + $0xa0] sm:$0xf]
  %v56 = vld [vmem:[%s0 + $0xa4] sm:$0xf]
  %v57 = vld [vmem:[%s0 + $0xa8] sm:$0xf]
  %v58 = vld [vmem:[%s0 + $0xac] sm:$0xf]
  %v59 = vld [vmem:[%s0 + $0xb0] sm:$0xf]
  %v60 = vld [vmem:[%s0 + $0xb4] sm:$0xf]
  %v61 = vld [vmem:[%s0 + $0xb8] sm:$0xf]
  %v62 = vld [vmem:[%s0 + $0xbc] sm:$0xf]
  %v63 = vld [vmem:[%s0 + $0xc0] sm:$0xf]
  %v64 = vld [vmem:[%s0 + $0xc4] sm:$0xf]
  %v65 = vld [vmem:[%s0 + $0xc8] sm:$0xf]
  %v66 = vld [vmem:[%s0 + $0xcc] sm:$0xf]
  %v67 = vld [vmem:[%s0 + $0xd0] sm:$0xf]
  %v68 = vld [vmem:[%s0 + $0xd4] sm:$0xf]
  %v69 = vld [vmem:[%s0 + $0xd8] sm:$0xf]
  %v70 = vld [vmem:[%s0 + $0xdc] sm:$0xf]
  %v71 = vld [vmem:[%s0 + $0xe0] sm:$0xf]
  %v72 = vld [vmem:[%s0 + $0xe4] sm:$0xf]
  %v73 = vld [vmem:[%s0 + $0xe8] sm:$0xf]
  %v74 = vld [vmem:[%s0 + $0xec] sm:$0xf]
  %v75 = vld [vmem:[%s0 + $0xf0] sm:$0xf]
  %v76 = vld [vmem:[%s0 + $0xf4] sm:$0xf]
  %v77 = vld [vmem:[%s0 + $0xf8] sm:$0xf]
  %v78 = vld [vmem:[%s0 + $0xfc] sm:$0xf]
  %v79 = vld [vmem:[%s0 + $0x100] sm:$0xf]
  %v80 = vld [vmem:[%s0 + $0x104] sm:$0xf]
  %v81 = vld [vmem:[%s0 + $0x108] sm:$0xf]
  %v82 = vld [vmem:[%s0 + $0x10c] sm:$0xf]
  %v83 = vld [vmem:[%s0 + $0x110] sm:$0xf]
  %v84 = vld [vmem:[%s0 + $0x114] sm:$0xf]
  %v85 = vld [vmem:[%s0 + $0x118] sm:$0xf]
  %v86 = vld [vmem:[%s0 + $0x11c] sm:$0xf]
  %v87 = vld [vmem:[%s0 + $0x120] sm:$0xf]
  %v88 = vld [vmem:[%s0 + $0x124] sm:$0xf]
  %v89 = vld [vmem:[%s0 + $0x128] sm:$0xf]
  %v90 = vld [vmem:[%s0 + $0x12c] sm:$0xf]
  %v91 = vld [vmem:[%s0 + $0x130] sm:$0xf]
  %v92 = vld [vmem:[%s0 + $0x134] sm:$0xf]
  %v93 = vld [vmem:[%s0 + $0x138] sm:$0xf]
  %v94 = vld [vmem:[%s0 + $0x13c] sm:$0xf]
  %v95 = vld [vmem:[%s0 + $0x140] sm:$0xf]
  %v96 = vld [vmem:[%s0 + $0x144] sm:$0xf]
  %v97 = vld [vmem:[%s0 + $0x148] sm:$0xf]
  %v98 = vld [vmem:[%s0 + $0x14c] sm:$0xf]
  %v99 = vld [vmem:[%s0 + $0x150] sm:$0xf]
  %v100 = vld [vmem:[%s0 + $0x154] sm:$0xf]
  %v101 = vld [vmem:[%s0 + $0x158] sm:$0xf]
  %v102 = vld [vmem:[%s0 + $0x15c] sm:$0xf]
  %v103 = vld [vmem:[%s0 + $0x160] sm:$0xf]
  %v104 = vld [vmem:[%s0 + $0x164] sm:$0xf]
  %v105 = vld [vmem:[%s0 + $0x168] sm:$0xf]
  %v106 = vld [vmem:[%s0 + $0x16c] sm:$0xf]
  %v107 = vld [vmem:[%s0 + $0x170] sm:$0xf]
  %v108 = vld [vmem:[%s0 + $0x174] sm:$0xf]
  %v109 = vld [vmem:[%s0 + $0x178] sm:$0xf]
  %v110 = vld [vmem:[%s0 + $0x17c] sm:$0xf]
  %v111 = vld [vmem:[%s0 + $0x180] sm:$0xf]
  %v112 = vld [vmem:[%s0 + $0x184] sm:$0xf]
  %v113 = vld [vmem:[%s0 + $0x188] sm:$0xf]
  %v114 = vld [vmem:[%s0 + $0x18c] sm:$0xf]
  %v115 = vld [vmem:[%s0 + $0x190] sm:$0xf]
  %v116 = vld [vmem:[%s0 + $0x194] sm:$0xf]
  %v117 = vld [vmem:[%s0 + $0x198] sm:$0xf]
  %v118 = vld [vmem:[%s0 + $0x19c] sm:$0xf]
  %v119 = vld [vmem:[%s0 + $0x1a0] sm:$0xf]
  %v120 = vld [vmem:[%s0 + $0x1a4] sm:$0xf]
  %v121 = vld [vmem:[%s0 + $0x1a8] sm:$0xf]
  %v122 = vld [vmem:[%s0 + $0x1ac] sm:$0xf]
  %v123 = vld [vmem:[%s0 + $0x1b0] sm:$0xf]
  %v124 = vld [vmem:[%s0 + $0x1b4] sm:$0xf]
  %v125 = vld [vmem:[%s0 + $0x1b8] sm:$0xf]
  %v126 = vld [vmem:[%s0 + $0x1bc] sm:$0xf]
  %v127 = vld [vmem:[%s0 + $0x1c0] sm:$0xf]
  %v128 = vld [vmem:[%s0 + $0x1c4] sm:$0xf]
  %v129 = vld [vmem:[%s0 + $0x1c8] sm:$0xf]
  %v130 = vld [vmem:[%s0 + $0x1cc] sm:$0xf]
  %v131 = vld [vmem:[%s0 + $0x1d0] sm:$0xf]
  %v132 = vld [vmem:[%s0 + $0x1d4] sm:$0xf]
  %v133 = vld [vmem:[%s0 + $0x1d8] sm:$0xf]
  %v134 = vld [vmem:[%s0 + $0x1dc] sm:$0xf]
  %v135 = vld [vmem:[%s0 + $0x1e0] sm:$0xf]
  %v136 = vld [vmem:[%s0 + $0x1e4] sm:$0xf]
  %v137 = vld [vmem:[%s0 + $0x1e8] sm:$0xf]
  %v138 = vld [vmem:[%s0 + $0x1ec] sm:$0xf]
  %v139 = vld [vmem:[%s0 + $0x1f0] sm:$0xf]
  %v140 = vld [vmem:[%s0 + $0x1f4] sm:$0xf]
  %v141 = vld [vmem:[%s0 + $0x1f8] sm:$0xf]
  %v142 = vld [vmem:[%s0 + $0x1fc] sm:$0xf]
  %v143 = vld [vmem:[%s0 + $0x200] sm:$0xf]
  %v144 = vld [vmem:[%s0 + $0x204] sm:$0xf]
  %v145 = vld [vmem:[%s0 + $0x208] sm:$0xf]
  %v146 = vld [vmem:[%s0 + $0x20c] sm:$0xf]
  %v147 = vld [vmem:[%s0 + $0x210] sm:$0xf]
  %v148 = vld [vmem:[%s0 + $0x214] sm:$0xf]
  %v149 = vld [vmem:[%s0 + $0x218] sm:$0xf]
  %v150 = vld [vmem:[%s0 + $0x21c] sm:$0xf]
  %v151 = vld [vmem:[%s0 + $0x220] sm:$0xf]
  %v152 = vld [vmem:[%s0 + $0x224] sm:$0xf]
  %v153 = vld [vmem:[%s0 + $0x228] sm:$0xf]
  %v154 = vld [vmem:[%s0 + $0x22c] sm:$0xf]
  %v155 = vld [vmem:[%s0 + $0x230] sm:$0xf]
  %v156 = vld [vmem:[%s0 + $0x234] sm:$0xf]
  %v157 = vld [vmem:[%s0 + $0x238] sm:$0xf]
  %v158 = vld [vmem:[%s0 + $0x23c] sm:$0xf]
  %v159 = vld [vmem:[%s0 + $0x240] sm:$0xf]
  %v160 = vld [vmem:[%s0 + $0x244] sm:$0xf]
  %v161 = vld [vmem:[%s0 + $0x248] sm:$0xf]
  %v162 = vld [vmem:[%s0 + $0x24c] sm:$0xf]
  %v163 = vld [vmem:[%s0 + $0x250] sm:$0xf]
  %v164 = vld [vmem:[%s0 + $0x254] sm:$0xf]
  %v165 = vld [vmem:[%s0 + $0x258] sm:$0xf]
  %v166 = vld [vmem:[%s0 + $0x25c] sm:$0xf]
  %v167 = vld [vmem:[%s0 + $0x260] sm:$0xf]
  %v168 = vld [vmem:[%s0 + $0x264] sm:$0xf]
  %v169 = vld [vmem:[%s0 + $0x268] sm:$0xf]
  %v170 = vld [vmem:[%s0 + $0x26c] sm:$0xf]
  %v171 = vld [vmem:[%s0 + $0x270] sm:$0xf]
  %v172 = vld [vmem:[%s0 + $0x274] sm:$0xf]
  %v173 = vld [vmem:[%s0 + $0x278] sm:$0xf]
  %v174 = vld [vmem:[%s0 + $0x27c] sm:$0xf]
  %v175 = vld [vmem:[%s0 + $0x280] sm:$0xf]
  %v176 = vld [vmem:[%s0 + $0x284] sm:$0xf]
  %v177 = vld [vmem:[%s0 + $0x288] sm:$0xf]
  %v178 = vld [vmem:[%s0 + $0x28c] sm:$0xf]
  %v179 = vld [vmem:[%s0 + $0x290] sm:$0xf]
  %v180 = vld [vmem:[%s0 + $0x294] sm:$0xf]
  %v181 = vld [vmem:[%s0 + $0x298] sm:$0xf]
  %v182 = vld [vmem:[%s0 + $0x29c] sm:$0xf]
  %v183 = vld [vmem:[%s0 + $0x2a0] sm:$0xf]
  %v184 = vld [vmem:[%s0 + $0x2a4] sm:$0xf]
  %v185 = vld [vmem:[%s0 + $0x2a8] sm:$0xf]
  %v186 = vld [vmem:[%s0 + $0x2ac] sm:$0xf]
  %v187 = vld [vmem:[%s0 + $0x2b0] sm:$0xf]
  %v188 = vld [vmem:[%s0 + $0x2b4] sm:$0xf]
  %v189 = vld [vmem:[%s0 + $0x2b8] sm:$0xf]
  %v190 = vld [vmem:[%s0 + $0x2bc] sm:$0xf]
  %v191 = vld [vmem:[%s0 + $0x2c0] sm:$0xf]
  %v192 = vld [vmem:[%s0 + $0x2c4] sm:$0xf]
  %v193 = vld [vmem:[%s0 + $0x2c8] sm:$0xf]
  %v194 = vld [vmem:[%s0 + $0x2cc] sm:$0xf]
  %v195 = vld [vmem:[%s0 + $0x2d0] sm:$0xf]
  %v196 = vld [vmem:[%s0 + $0x2d4] sm:$0xf]
  %v197 = vld [vmem:[%s0 + $0x2d8] sm:$0xf]
  %v198 = vld [vmem:[%s0 + $0x2dc] sm:$0xf]
  %v199 = vld [vmem:[%s0 + $0x2e0] sm:$0xf]
  %v200 = vld [vmem:[%s0 + $0x2e4] sm:$0xf]
  %v201 = vld [vmem:[%s0 + $0x2e8] sm:$0xf]
  %v202 = vld [vmem:[%s0 + $0x2ec] sm:$0xf]
  %v203 = vld [vmem:[%s0 + $0x2f0] sm:$0xf]
  %v204 = vld [vmem:[%s0 + $0x2f4] sm:$0xf]
  %v205 = vld [vmem:[%s0 + $0x2f8] sm:$0xf]
  %v206 = vld [vmem:[%s0 + $0x2fc] sm:$0xf]
  %v207 = vld [vmem:[%s0 + $0x300] sm:$0xf]
  %v208 = vld [vmem:[%s0 + $0x304] sm:$0xf]
  %v209 = vld [vmem:[%s0 + $0x308] sm:$0xf]
  %v210 = vld [vmem:[%s0 + $0x30c] sm:$0xf]
  %v211 = vld [vmem:[%s0 + $0x310] sm:$0xf]
  %v212 = vld [vmem:[%s0 + $0x314] sm:$0xf]
  %v213 = vld [vmem:[%s0 + $0x318] sm:$0xf]
  %v214 = vld [vmem:[%s0 + $0x31c] sm:$0xf]
  %v215 = vld [vmem:[%s0 + $0x320] sm:$0xf]
  %v216 = vld [vmem:[%s0 + $0x324] sm:$0xf]
  %v217 = vld [vmem:[%s0 + $0x328] sm:$0xf]
  %v218 = vld [vmem:[%s0 + $0x32c] sm:$0xf]
  %v219 = vld [vmem:[%s0 + $0x330] sm:$0xf]
  %v220 = vld [vmem:[%s0 + $0x334] sm:$0xf]
  %v221 = vld [vmem:[%s0 + $0x338] sm:$0xf]
  %v222 = vld [vmem:[%s0 + $0x33c] sm:$0xf]
  %v223 = vld [vmem:[%s0 + $0x340] sm:$0xf]
  %v224 = vld [vmem:[%s0 + $0x344] sm:$0xf]
  %v225 = vld [vmem:[%s0 + $0x348] sm:$0xf]
  %v226 = vld [vmem:[%s0 + $0x34c] sm:$0xf]
  %v227 = vld [vmem:[%s0 + $0x350] sm:$0xf]
  %v228 = vld [vmem:[%s0 + $0x354] sm:$0xf]
  %v229 = vld [vmem:[%s0 + $0x358] sm:$0xf]
  %v230 = vld [vmem:[%s0 + $0x35c] sm:$0xf]
  %v231 = vld [vmem:[%s0 + $0x360] sm:$0xf]
  %v232 = vld [vmem:[%s0 + $0x364] sm:$0xf]
  %v233 = vld [vmem:[%s0 + $0x368] sm:$0xf]
  %v234 = vld [vmem:[%s0 + $0x36c] sm:$0xf]
  %v235 = vld [vmem:[%s0 + $0x370] sm:$0xf]
  %v236 = vld [vmem:[%s0 + $0x374] sm:$0xf]
  %v237 = vld [vmem:[%s0 + $0x378] sm:$0xf]
  %v238 = vld [vmem:[%s0 + $0x37c] sm:$0xf]
  %v239 = vld [vmem:[%s0 + $0x380] sm:$0xf]
  %v240 = vld [vmem:[%s0 + $0x384] sm:$0xf]
  %v241 = vld [vmem:[%s0 + $0x388] sm:$0xf]
  %v242 = vld [vmem:[%s0 + $0x38c] sm:$0xf]
  %v243 = vld [vmem:[%s0 + $0x390] sm:$0xf]
  %v244 = vld [vmem:[%s0 + $0x394] sm:$0xf]
  %v245 = vld [vmem:[%s0 + $0x398] sm:$0xf]
  %v246 = vld [vmem:[%s0 + $0x39c] sm:$0xf]
  %v247 = vld [vmem:[%s1] sm:$0xf]
  %v248 = vld [vmem:[%s1 + $0x4] sm:$0x3]
  %v481 = vunpack.c.l.b16 %v15
  %v482 = vunpack.c.l.b16 %v16
  %v483 = vunpack.c.l.b16 %v17
  %v484 = vunpack.c.l.b16 %v18
  %v485 = vunpack.c.l.b16 %v19
  %v486 = vunpack.c.l.b16 %v20
  %v487 = vunpack.c.l.b16 %v21
  %v488 = vunpack.c.l.b16 %v22
  %v489 = vunpack.c.l.b16 %v23
  %v490 = vunpack.c.l.b16 %v24
  %v491 = vunpack.c.l.b16 %v25
  %v492 = vunpack.c.l.b16 %v26
  %v493 = vunpack.c.l.b16 %v27
  %v494 = vunpack.c.l.b16 %v28
  %v495 = vunpack.c.l.b16 %v29
  %v496 = vunpack.c.l.b16 %v30
  %v497 = vunpack.c.l.b16 %v31
  %v498 = vunpack.c.l.b16 %v32
  %v499 = vunpack.c.l.b16 %v33
  %v500 = vunpack.c.l.b16 %v34
  %v501 = vunpack.c.l.b16 %v35
  %v502 = vunpack.c.l.b16 %v36
  %v503 = vunpack.c.l.b16 %v37
  %v504 = vunpack.c.l.b16 %v38
  %v505 = vunpack.c.l.b16 %v39
  %v506 = vunpack.c.l.b16 %v40
  %v507 = vunpack.c.l.b16 %v41
  %v508 = vunpack.c.l.b16 %v42
  %v509 = vunpack.c.l.b16 %v43
  %v510 = vunpack.c.l.b16 %v44
  %v511 = vunpack.c.l.b16 %v45
  %v512 = vunpack.c.l.b16 %v46
  %v513 = vunpack.c.l.b16 %v47
  %v514 = vunpack.c.l.b16 %v48
  %v515 = vunpack.c.l.b16 %v49
  %v516 = vunpack.c.l.b16 %v50
  %v517 = vunpack.c.l.b16 %v51
  %v518 = vunpack.c.l.b16 %v52
  %v519 = vunpack.c.l.b16 %v53
  %v520 = vunpack.c.l.b16 %v54
  %v521 = vunpack.c.l.b16 %v55
  %v522 = vunpack.c.l.b16 %v56
  %v523 = vunpack.c.l.b16 %v57
  %v524 = vunpack.c.l.b16 %v58
  %v525 = vunpack.c.l.b16 %v59
  %v526 = vunpack.c.l.b16 %v60
  %v527 = vunpack.c.l.b16 %v61
  %v528 = vunpack.c.l.b16 %v62
  %v529 = vunpack.c.l.b16 %v63
  %v530 = vunpack.c.l.b16 %v64
  %v531 = vunpack.c.l.b16 %v65
  %v532 = vunpack.c.l.b16 %v66
  %v533 = vunpack.c.l.b16 %v67
  %v534 = vunpack.c.l.b16 %v68
  %v535 = vunpack.c.l.b16 %v69
  %v536 = vunpack.c.l.b16 %v70
  %v537 = vunpack.c.l.b16 %v71
  %v538 = vunpack.c.l.b16 %v72
  %v539 = vunpack.c.l.b16 %v73
  %v540 = vunpack.c.l.b16 %v74
  %v541 = vunpack.c.l.b16 %v75
  %v542 = vunpack.c.l.b16 %v76
  %v543 = vunpack.c.l.b16 %v77
  %v544 = vunpack.c.l.b16 %v78
  %v545 = vunpack.c.l.b16 %v79
  %v546 = vunpack.c.l.b16 %v80
  %v547 = vunpack.c.l.b16 %v81
  %v548 = vunpack.c.l.b16 %v82
  %v549 = vunpack.c.l.b16 %v83
  %v550 = vunpack.c.l.b16 %v84
  %v551 = vunpack.c.l.b16 %v85
  %v552 = vunpack.c.l.b16 %v86
  %v553 = vunpack.c.l.b16 %v87
  %v554 = vunpack.c.l.b16 %v88
  %v555 = vunpack.c.l.b16 %v89
  %v556 = vunpack.c.l.b16 %v90
  %v557 = vunpack.c.l.b16 %v91
  %v558 = vunpack.c.l.b16 %v92
  %v559 = vunpack.c.l.b16 %v93
  %v560 = vunpack.c.l.b16 %v94
  %v561 = vunpack.c.l.b16 %v95
  %v562 = vunpack.c.l.b16 %v96
  %v563 = vunpack.c.l.b16 %v97
  %v564 = vunpack.c.l.b16 %v98
  %v565 = vunpack.c.l.b16 %v99
  %v566 = vunpack.c.l.b16 %v100
  %v567 = vunpack.c.l.b16 %v101
  %v568 = vunpack.c.l.b16 %v102
  %v569 = vunpack.c.l.b16 %v103
  %v570 = vunpack.c.l.b16 %v104
  %v571 = vunpack.c.l.b16 %v105
  %v572 = vunpack.c.l.b16 %v106
  %v573 = vunpack.c.l.b16 %v107
  %v574 = vunpack.c.l.b16 %v108
  %v575 = vunpack.c.l.b16 %v109
  %v576 = vunpack.c.l.b16 %v110
  %v577 = vunpack.c.l.b16 %v111
  %v578 = vunpack.c.l.b16 %v112
  %v579 = vunpack.c.l.b16 %v113
  %v580 = vunpack.c.l.b16 %v114
  %v581 = vunpack.c.l.b16 %v115
  %v582 = vunpack.c.l.b16 %v116
  %v583 = vunpack.c.l.b16 %v117
  %v584 = vunpack.c.l.b16 %v118
  %v585 = vunpack.c.l.b16 %v119
  %v586 = vunpack.c.l.b16 %v120
  %v587 = vunpack.c.l.b16 %v121
  %v588 = vunpack.c.l.b16 %v122
  %v589 = vunpack.c.l.b16 %v123
  %v590 = vunpack.c.l.b16 %v124
  %v591 = vunpack.c.l.b16 %v125
  %v592 = vunpack.c.l.b16 %v126
  %v593 = vunpack.c.l.b16 %v127
  %v594 = vunpack.c.l.b16 %v128
  %v595 = vunpack.c.l.b16 %v129
  %v596 = vunpack.c.l.b16 %v130
  %v597 = vunpack.c.l.b16 %v131
  %v598 = vunpack.c.l.b16 %v132
  %v599 = vunpack.c.l.b16 %v133
  %v600 = vunpack.c.l.b16 %v134
  %v601 = vunpack.c.l.b16 %v135
  %v602 = vunpack.c.l.b16 %v136
  %v603 = vunpack.c.l.b16 %v137
  %v604 = vunpack.c.l.b16 %v138
  %v605 = vunpack.c.l.b16 %v139
  %v606 = vunpack.c.l.b16 %v140
  %v607 = vunpack.c.l.b16 %v141
  %v608 = vunpack.c.l.b16 %v142
  %v609 = vunpack.c.l.b16 %v143
  %v610 = vunpack.c.l.b16 %v144
  %v611 = vunpack.c.l.b16 %v145
  %v612 = vunpack.c.l.b16 %v146
  %v613 = vunpack.c.l.b16 %v147
  %v614 = vunpack.c.l.b16 %v148
  %v615 = vunpack.c.l.b16 %v149
  %v616 = vunpack.c.l.b16 %v150
  %v617 = vunpack.c.l.b16 %v151
  %v618 = vunpack.c.l.b16 %v152
  %v619 = vunpack.c.l.b16 %v153
  %v620 = vunpack.c.l.b16 %v154
  %v621 = vunpack.c.l.b16 %v155
  %v622 = vunpack.c.l.b16 %v156
  %v623 = vunpack.c.l.b16 %v157
  %v624 = vunpack.c.l.b16 %v158
  %v625 = vunpack.c.l.b16 %v159
  %v626 = vunpack.c.l.b16 %v160
  %v627 = vunpack.c.l.b16 %v161
  %v628 = vunpack.c.l.b16 %v162
  %v629 = vunpack.c.l.b16 %v163
  %v630 = vunpack.c.l.b16 %v164
  %v631 = vunpack.c.l.b16 %v165
  %v632 = vunpack.c.l.b16 %v166
  %v633 = vunpack.c.l.b16 %v167
  %v634 = vunpack.c.l.b16 %v168
  %v635 = vunpack.c.l.b16 %v169
  %v636 = vunpack.c.l.b16 %v170
  %v637 = vunpack.c.l.b16 %v171
  %v638 = vunpack.c.l.b16 %v172
  %v639 = vunpack.c.l.b16 %v173
  %v640 = vunpack.c.l.b16 %v174
  %v641 = vunpack.c.l.b16 %v175
  %v642 = vunpack.c.l.b16 %v176
  %v643 = vunpack.c.l.b16 %v177
  %v644 = vunpack.c.l.b16 %v178
  %v645 = vunpack.c.l.b16 %v179
  %v646 = vunpack.c.l.b16 %v180
  %v647 = vunpack.c.l.b16 %v181
  %v648 = vunpack.c.l.b16 %v182
  %v649 = vunpack.c.l.b16 %v183
  %v650 = vunpack.c.l.b16 %v184
  %v651 = vunpack.c.l.b16 %v185
  %v652 = vunpack.c.l.b16 %v186
  %v653 = vunpack.c.l.b16 %v187
  %v654 = vunpack.c.l.b16 %v188
  %v655 = vunpack.c.l.b16 %v189
  %v656 = vunpack.c.l.b16 %v190
  %v657 = vunpack.c.l.b16 %v191
  %v658 = vunpack.c.l.b16 %v192
  %v659 = vunpack.c.l.b16 %v193
  %v660 = vunpack.c.l.b16 %v194
  %v661 = vunpack.c.l.b16 %v195
  %v662 = vunpack.c.l.b16 %v196
  %v663 = vunpack.c.l.b16 %v197
  %v664 = vunpack.c.l.b16 %v198
  %v665 = vunpack.c.l.b16 %v199
  %v666 = vunpack.c.l.b16 %v200
  %v667 = vunpack.c.l.b16 %v201
  %v668 = vunpack.c.l.b16 %v202
  %v669 = vunpack.c.l.b16 %v203
  %v670 = vunpack.c.l.b16 %v204
  %v671 = vunpack.c.l.b16 %v205
  %v672 = vunpack.c.l.b16 %v206
  %v673 = vunpack.c.l.b16 %v207
  %v674 = vunpack.c.l.b16 %v208
  %v675 = vunpack.c.l.b16 %v209
  %v676 = vunpack.c.l.b16 %v210
  %v677 = vunpack.c.l.b16 %v211
  %v678 = vunpack.c.l.b16 %v212
  %v679 = vunpack.c.l.b16 %v213
  %v680 = vunpack.c.l.b16 %v214
  %v681 = vunpack.c.l.b16 %v215
  %v682 = vunpack.c.l.b16 %v216
  %v683 = vunpack.c.l.b16 %v217
  %v684 = vunpack.c.l.b16 %v218
  %v685 = vunpack.c.l.b16 %v219
  %v686 = vunpack.c.l.b16 %v220
  %v687 = vunpack.c.l.b16 %v221
  %v688 = vunpack.c.l.b16 %v222
  %v689 = vunpack.c.l.b16 %v223
  %v690 = vunpack.c.l.b16 %v224
  %v691 = vunpack.c.l.b16 %v225
  %v692 = vunpack.c.l.b16 %v226
  %v693 = vunpack.c.l.b16 %v227
  %v694 = vunpack.c.l.b16 %v228
  %v695 = vunpack.c.l.b16 %v229
  %v696 = vunpack.c.l.b16 %v230
  %v697 = vunpack.c.l.b16 %v231
  %v698 = vunpack.c.l.b16 %v232
  %v699 = vunpack.c.l.b16 %v233
  %v700 = vunpack.c.l.b16 %v234
  %v701 = vunpack.c.l.b16 %v235
  %v702 = vunpack.c.l.b16 %v236
  %v703 = vunpack.c.l.b16 %v237
  %v704 = vunpack.c.l.b16 %v238
  %v705 = vunpack.c.l.b16 %v239
  %v706 = vunpack.c.l.b16 %v240
  %v707 = vunpack.c.l.b16 %v241
  %v708 = vunpack.c.l.b16 %v242
  %v709 = vunpack.c.l.b16 %v243
  %v710 = vunpack.c.l.b16 %v244
  %v711 = vunpack.c.l.b16 %v245
  %v712 = vunpack.c.l.b16 %v246
  %v713 = vpack.c.b16 %v482, %v481
  %v714 = vpack.c.b16 %v484, %v483
  %v715 = vpack.c.b16 %v486, %v485
  %v716 = vpack.c.b16 %v488, %v487
  %v717 = vpack.c.b16 %v490, %v489
  %v718 = vpack.c.b16 %v492, %v491
  %v719 = vpack.c.b16 %v494, %v493
  %v720 = vpack.c.b16 %v496, %v495
  %v721 = vpack.c.b16 %v498, %v497
  %v722 = vpack.c.b16 %v500, %v499
  %v723 = vpack.c.b16 %v502, %v501
  %v724 = vpack.c.b16 %v504, %v503
  %v725 = vpack.c.b16 %v506, %v505
  %v726 = vpack.c.b16 %v508, %v507
  %v727 = vpack.c.b16 %v510, %v509
  %v728 = vpack.c.b16 %v512, %v511
  %v729 = vpack.c.b16 %v514, %v513
  %v730 = vpack.c.b16 %v516, %v515
  %v731 = vpack.c.b16 %v518, %v517
  %v732 = vpack.c.b16 %v520, %v519
  %v733 = vpack.c.b16 %v522, %v521
  %v734 = vpack.c.b16 %v524, %v523
  %v735 = vpack.c.b16 %v526, %v525
  %v736 = vpack.c.b16 %v528, %v527
  %v737 = vpack.c.b16 %v530, %v529
  %v738 = vpack.c.b16 %v532, %v531
  %v739 = vpack.c.b16 %v534, %v533
  %v740 = vpack.c.b16 %v536, %v535
  %v741 = vpack.c.b16 %v538, %v537
  %v742 = vpack.c.b16 %v540, %v539
  %v743 = vpack.c.b16 %v542, %v541
  %v744 = vpack.c.b16 %v544, %v543
  %v745 = vpack.c.b16 %v546, %v545
  %v746 = vpack.c.b16 %v548, %v547
  %v747 = vpack.c.b16 %v550, %v549
  %v748 = vpack.c.b16 %v552, %v551
  %v749 = vpack.c.b16 %v554, %v553
  %v750 = vpack.c.b16 %v556, %v555
  %v751 = vpack.c.b16 %v558, %v557
  %v752 = vpack.c.b16 %v560, %v559
  %v753 = vpack.c.b16 %v562, %v561
  %v754 = vpack.c.b16 %v564, %v563
  %v755 = vpack.c.b16 %v566, %v565
  %v756 = vpack.c.b16 %v568, %v567
  %v757 = vpack.c.b16 %v570, %v569
  %v758 = vpack.c.b16 %v572, %v571
  %v759 = vpack.c.b16 %v574, %v573
  %v760 = vpack.c.b16 %v576, %v575
  %v761 = vpack.c.b16 %v578, %v577
  %v762 = vpack.c.b16 %v580, %v579
  %v763 = vpack.c.b16 %v582, %v581
  %v764 = vpack.c.b16 %v584, %v583
  %v765 = vpack.c.b16 %v586, %v585
  %v766 = vpack.c.b16 %v588, %v587
  %v767 = vpack.c.b16 %v590, %v589
  %v768 = vpack.c.b16 %v592, %v591
  %v769 = vpack.c.b16 %v594, %v593
  %v770 = vpack.c.b16 %v596, %v595
  %v771 = vpack.c.b16 %v598, %v597
  %v772 = vpack.c.b16 %v600, %v599
  %v773 = vpack.c.b16 %v602, %v601
  %v774 = vpack.c.b16 %v604, %v603
  %v775 = vpack.c.b16 %v606, %v605
  %v776 = vpack.c.b16 %v608, %v607
  %v777 = vpack.c.b16 %v610, %v609
  %v778 = vpack.c.b16 %v612, %v611
  %v779 = vpack.c.b16 %v614, %v613
  %v780 = vpack.c.b16 %v616, %v615
  %v781 = vpack.c.b16 %v618, %v617
  %v782 = vpack.c.b16 %v620, %v619
  %v783 = vpack.c.b16 %v622, %v621
  %v784 = vpack.c.b16 %v624, %v623
  %v785 = vpack.c.b16 %v626, %v625
  %v786 = vpack.c.b16 %v628, %v627
  %v787 = vpack.c.b16 %v630, %v629
  %v788 = vpack.c.b16 %v632, %v631
  %v789 = vpack.c.b16 %v634, %v633
  %v790 = vpack.c.b16 %v636, %v635
  %v791 = vpack.c.b16 %v638, %v637
  %v792 = vpack.c.b16 %v640, %v639
  %v793 = vpack.c.b16 %v642, %v641
  %v794 = vpack.c.b16 %v644, %v643
  %v795 = vpack.c.b16 %v646, %v645
  %v796 = vpack.c.b16 %v648, %v647
  %v797 = vpack.c.b16 %v650, %v649
  %v798 = vpack.c.b16 %v652, %v651
  %v799 = vpack.c.b16 %v654, %v653
  %v800 = vpack.c.b16 %v656, %v655
  %v801 = vpack.c.b16 %v658, %v657
  %v802 = vpack.c.b16 %v660, %v659
  %v803 = vpack.c.b16 %v662, %v661
  %v804 = vpack.c.b16 %v664, %v663
  %v805 = vpack.c.b16 %v666, %v665
  %v806 = vpack.c.b16 %v668, %v667
  %v807 = vpack.c.b16 %v670, %v669
  %v808 = vpack.c.b16 %v672, %v671
  %v809 = vpack.c.b16 %v674, %v673
  %v810 = vpack.c.b16 %v676, %v675
  %v811 = vpack.c.b16 %v678, %v677
  %v812 = vpack.c.b16 %v680, %v679
  %v813 = vpack.c.b16 %v682, %v681
  %v814 = vpack.c.b16 %v684, %v683
  %v815 = vpack.c.b16 %v686, %v685
  %v816 = vpack.c.b16 %v688, %v687
  %v817 = vpack.c.b16 %v690, %v689
  %v818 = vpack.c.b16 %v692, %v691
  %v819 = vpack.c.b16 %v694, %v693
  %v820 = vpack.c.b16 %v696, %v695
  %v821 = vpack.c.b16 %v698, %v697
  %v822 = vpack.c.b16 %v700, %v699
  %v823 = vpack.c.b16 %v702, %v701
  %v824 = vpack.c.b16 %v704, %v703
  %v825 = vpack.c.b16 %v706, %v705
  %v826 = vpack.c.b16 %v708, %v707
  %v827 = vpack.c.b16 %v710, %v709
  %v828 = vpack.c.b16 %v712, %v711
  %v831 = vunpack.c.l.b16 %v247
  %v832 = vunpack.c.l.b16 %v248
  %v833 = vpack.c.b16 %v832, %v831
  %vm834 = vcmask 97280
  %v836 = vsel %vm834, %v713, 0
  %v839 = vsel %vm834, %v714, 0
  %v842 = vsel %vm834, %v715, 0
  %v845 = vsel %vm834, %v716, 0
  %v848 = vsel %vm834, %v717, 0
  %v851 = vsel %vm834, %v718, 0
  %v854 = vsel %vm834, %v719, 0
  %v857 = vsel %vm834, %v720, 0
  %v860 = vsel %vm834, %v721, 0
  %v863 = vsel %vm834, %v722, 0
  %v866 = vsel %vm834, %v723, 0
  %v869 = vsel %vm834, %v724, 0
  %v872 = vsel %vm834, %v725, 0
  %v875 = vsel %vm834, %v726, 0
  %v878 = vsel %vm834, %v727, 0
  %v881 = vsel %vm834, %v728, 0
  %v884 = vsel %vm834, %v729, 0
  %v887 = vsel %vm834, %v730, 0
  %v890 = vsel %vm834, %v731, 0
  %v893 = vsel %vm834, %v732, 0
  %v896 = vsel %vm834, %v733, 0
  %v899 = vsel %vm834, %v734, 0
  %v902 = vsel %vm834, %v735, 0
  %v905 = vsel %vm834, %v736, 0
  %v908 = vsel %vm834, %v737, 0
  %v911 = vsel %vm834, %v738, 0
  %v914 = vsel %vm834, %v739, 0
  %v917 = vsel %vm834, %v740, 0
  %v920 = vsel %vm834, %v741, 0
  %v923 = vsel %vm834, %v742, 0
  %v926 = vsel %vm834, %v743, 0
  %v929 = vsel %vm834, %v744, 0
  %v932 = vsel %vm834, %v745, 0
  %v935 = vsel %vm834, %v746, 0
  %v938 = vsel %vm834, %v747, 0
  %v941 = vsel %vm834, %v748, 0
  %v944 = vsel %vm834, %v749, 0
  %v947 = vsel %vm834, %v750, 0
  %v950 = vsel %vm834, %v751, 0
  %v953 = vsel %vm834, %v752, 0
  %v956 = vsel %vm834, %v753, 0
  %v959 = vsel %vm834, %v754, 0
  %v962 = vsel %vm834, %v755, 0
  %v965 = vsel %vm834, %v756, 0
  %v968 = vsel %vm834, %v757, 0
  %v971 = vsel %vm834, %v758, 0
  %v974 = vsel %vm834, %v759, 0
  %v977 = vsel %vm834, %v760, 0
  %v980 = vsel %vm834, %v761, 0
  %v983 = vsel %vm834, %v762, 0
  %v986 = vsel %vm834, %v763, 0
  %v989 = vsel %vm834, %v764, 0
  %v992 = vsel %vm834, %v765, 0
  %v995 = vsel %vm834, %v766, 0
  %v998 = vsel %vm834, %v767, 0
  %v1001 = vsel %vm834, %v768, 0
  %v1004 = vsel %vm834, %v769, 0
  %v1007 = vsel %vm834, %v770, 0
  %v1010 = vsel %vm834, %v771, 0
  %v1013 = vsel %vm834, %v772, 0
  %v1016 = vsel %vm834, %v773, 0
  %v1019 = vsel %vm834, %v774, 0
  %v1022 = vsel %vm834, %v775, 0
  %v1025 = vsel %vm834, %v776, 0
  %v1028 = vsel %vm834, %v777, 0
  %v1031 = vsel %vm834, %v778, 0
  %v1034 = vsel %vm834, %v779, 0
  %v1037 = vsel %vm834, %v780, 0
  %v1040 = vsel %vm834, %v781, 0
  %v1043 = vsel %vm834, %v782, 0
  %v1046 = vsel %vm834, %v783, 0
  %v1049 = vsel %vm834, %v784, 0
  %v1052 = vsel %vm834, %v785, 0
  %v1055 = vsel %vm834, %v786, 0
  %v1058 = vsel %vm834, %v787, 0
  %v1061 = vsel %vm834, %v788, 0
  %v1064 = vsel %vm834, %v789, 0
  %v1067 = vsel %vm834, %v790, 0
  %v1070 = vsel %vm834, %v791, 0
  %v1073 = vsel %vm834, %v792, 0
  %v1076 = vsel %vm834, %v793, 0
  %v1079 = vsel %vm834, %v794, 0
  %v1082 = vsel %vm834, %v795, 0
  %v1085 = vsel %vm834, %v796, 0
  %v1088 = vsel %vm834, %v797, 0
  %v1091 = vsel %vm834, %v798, 0
  %v1094 = vsel %vm834, %v799, 0
  %v1097 = vsel %vm834, %v800, 0
  %v1100 = vsel %vm834, %v801, 0
  %v1103 = vsel %vm834, %v802, 0
  %v1106 = vsel %vm834, %v803, 0
  %v1109 = vsel %vm834, %v804, 0
  %v1112 = vsel %vm834, %v805, 0
  %v1115 = vsel %vm834, %v806, 0
  %v1118 = vsel %vm834, %v807, 0
  %v1121 = vsel %vm834, %v808, 0
  %v1124 = vsel %vm834, %v809, 0
  %v1127 = vsel %vm834, %v810, 0
  %v1130 = vsel %vm834, %v811, 0
  %v1133 = vsel %vm834, %v812, 0
  %v1136 = vsel %vm834, %v813, 0
  %v1139 = vsel %vm834, %v814, 0
  %v1142 = vsel %vm834, %v815, 0
  %v1145 = vsel %vm834, %v816, 0
  %v1148 = vsel %vm834, %v817, 0
  %v1151 = vsel %vm834, %v818, 0
  %v1154 = vsel %vm834, %v819, 0
  %v1157 = vsel %vm834, %v820, 0
  %v1160 = vsel %vm834, %v821, 0
  %v1163 = vsel %vm834, %v822, 0
  %v1166 = vsel %vm834, %v823, 0
  %v1169 = vsel %vm834, %v824, 0
  %v1172 = vsel %vm834, %v825, 0
  %v1175 = vsel %vm834, %v826, 0
  %v1178 = vsel %vm834, %v827, 0
  %v1181 = vsel %vm834, %v828, 0
  %vm1183 = vcmask 1045504
  %v1185 = vsel %vm1183, %v833, 0
  %1187 = vmatprep.subr.bf16.mxu0 0
  %1188 = vmatpush1.bf16.msra.mxu0 %v1185
  %1189 = vmatprep.subr.bf16.mxu0 0
  %1190 = vmatpush1.bf16.msra.mxu0 0
  %1191 = vmatprep.subr.bf16.mxu0 0
  %1192 = vmatpush1.bf16.msra.mxu0 0
  %1193 = vmatprep.subr.bf16.mxu0 0
  %1194 = vmatpush1.bf16.msra.mxu0 0
  %1195 = vmatprep.subr.bf16.mxu0 0
  %1196 = vmatpush1.bf16.msra.mxu0 0
  %1197 = vmatprep.subr.bf16.mxu0 0
  %1198 = vmatpush1.bf16.msra.mxu0 0
  %1199 = vmatprep.subr.bf16.mxu0 0
  %1200 = vmatpush1.bf16.msra.mxu0 0
  %1201 = vmatprep.subr.bf16.mxu0 0
  %1202 = vmatpush1.bf16.msra.mxu0 0
  %1203 = vmatprep.subr.bf16.mxu0 0
  %1204 = vmatpush1.bf16.msra.mxu0 0
  %1205 = vmatprep.subr.bf16.mxu0 0
  %1206 = vmatpush1.bf16.msra.mxu0 0
  %1207 = vmatprep.subr.bf16.mxu0 0
  %1208 = vmatpush1.bf16.msra.mxu0 0
  %1209 = vmatprep.subr.bf16.mxu0 0
  %1210 = vmatpush1.bf16.msra.mxu0 0
  %1211 = vmatprep.subr.bf16.mxu0 0
  %1212 = vmatpush1.bf16.msra.mxu0 0
  %1213 = vmatprep.subr.bf16.mxu0 0
  %1214 = vmatpush1.bf16.msra.mxu0 0
  %1215 = vmatprep.subr.bf16.mxu0 0
  %1216 = vmatpush1.bf16.msra.mxu0 0
  %1217 = vmatprep.subr.bf16.mxu0 0
  %1218 = vmatpush1.bf16.msra.mxu0 0
  %1219 = vmatprep.mubr.bf16.mxu0 0
  %1220 = vmatmul.mubr.bf16.gmra.mrb[0].mxu0 %v836
  %v1221 = vpop.f32.mrb[0].mxu0
  %v1222 = vadd.f32 0.0, %v1221
  %v1223 = vpop.f32.mrb[0].mxu0
  %v1224 = vpop.f32.mrb[0].mxu0
  %v1225 = vadd.f32 0.0, %v1224
  %v1226 = vpop.f32.mrb[0].mxu0
  %1227 = vmatprep.mubr.bf16.mxu0 0
  %1228 = vmatmul.mubr.bf16.gmra.mrb[0].mxu0 %v839
  %v1229 = vpop.f32.mrb[0].mxu0
  %v1230 = vadd.f32 0.0, %v1229
  %v1231 = vpop.f32.mrb[0].mxu0
  %v1232 = vpop.f32.mrb[0].mxu0
  %v1233 = vadd.f32 0.0, %v1232
  %v1234 = vpop.f32.mrb[0].mxu0
  %1235 = vmatprep.mubr.bf16.mxu0 0
  %1236 = vmatmul.mubr.bf16.gmra.mrb[0].mxu0 %v842
  %v1237 = vpop.f32.mrb[0].mxu0
  %v1238 = vadd.f32 0.0, %v1237
  %v1239 = vpop.f32.mrb[0].mxu0
  %v1240 = vpop.f32.mrb[0].mxu0
  %v1241 = vadd.f32 0.0, %v1240
  %v1242 = vpop.f32.mrb[0].mxu0
  %1243 = vmatprep.mubr.bf16.mxu0 0
  %1244 = vmatmul.mubr.bf16.gmra.mrb[0].mxu0 %v845
  %v1245 = vpop.f32.mrb[0].mxu0
  %v1246 = vadd.f32 0.0, %v1245
  %v1247 = vpop.f32.mrb[0].mxu0
  %v1248 = vpop.f32.mrb[0].mxu0
  %v1249 = vadd.f32 0.0, %v1248
  %v1250 = vpop.f32.mrb[0].mxu0
  %1251 = vmatprep.mubr.bf16.mxu0 0
  %1252 = vmatmul.mubr.bf16.gmra.mrb[0].mxu0 %v848
  %v1253 = vpop.f32.mrb[0].mxu0
  %v1254 = vadd.f32 0.0, %v1253
  %v1255 = vpop.f32.mrb[0].mxu0
  %v1256 = vpop.f32.mrb[0].mxu0
  %v1257 = vadd.f32 0.0, %v1256
  %v1258 = vpop.f32.mrb[0].mxu0
  %1259 = vmatprep.mubr.bf16.mxu0 0
  %1260 = vmatmul.mubr.bf16.gmra.mrb[0].mxu0 %v851
  %v1261 = vpop.f32.mrb[0].mxu0
  %v1262 = vadd.f32 0.0, %v1261
  %v1263 = vpop.f32.mrb[0].mxu0
  %v1264 = vpop.f32.mrb[0].mxu0
  %v1265 = vadd.f32 0.0, %v1264
  %v1266 = vpop.f32.mrb[0].mxu0
  %1267 = vmatprep.mubr.bf16.mxu0 0
  %1268 = vmatmul.mubr.bf16.gmra.mrb[0].mxu0 %v854
  %v1269 = vpop.f32.mrb[0].mxu0
  %v1270 = vadd.f32 0.0, %v1269
  %v1271 = vpop.f32.mrb[0].mxu0
  %v1272 = vpop.f32.mrb[0].mxu0
  %v1273 = vadd.f32 0.0, %v1272
  %v1274 = vpop.f32.mrb[0].mxu0
  %1275 = vmatprep.mubr.bf16.mxu0 0
  %1276 = vmatmul.mubr.bf16.gmra.mrb[0].mxu0 %v857
  %v1277 = vpop.f32.mrb[0].mxu0
  %v1278 = vadd.f32 0.0, %v1277
  %v1279 = vpop.f32.mrb[0].mxu0
  %v1280 = vpop.f32.mrb[0].mxu0
  %v1281 = vadd.f32 0.0, %v1280
  %v1282 = vpop.f32.mrb[0].mxu0
  %1283 = vmatprep.mubr.bf16.mxu0 0
  %1284 = vmatmul.mubr.bf16.gmra.mrb[0].mxu0 %v860
  %v1285 = vpop.f32.mrb[0].mxu0
  %v1286 = vadd.f32 0.0, %v1285
  %v1287 = vpop.f32.mrb[0].mxu0
  %v1288 = vpop.f32.mrb[0].mxu0
  %v1289 = vadd.f32 0.0, %v1288
  %v1290 = vpop.f32.mrb[0].mxu0
  %1291 = vmatprep.mubr.bf16.mxu0 0
  %1292 = vmatmul.mubr.bf16.gmra.mrb[0].mxu0 %v863
  %v1293 = vpop.f32.mrb[0].mxu0
  %v1294 = vadd.f32 0.0, %v1293
  %v1295 = vpop.f32.mrb[0].mxu0
  %v1296 = vpop.f32.mrb[0].mxu0
  %v1297 = vadd.f32 0.0, %v1296
  %v1298 = vpop.f32.mrb[0].mxu0
  %1299 = vmatprep.mubr.bf16.mxu0 0
  %1300 = vmatmul.mubr.bf16.gmra.mrb[0].mxu0 %v866
  %v1301 = vpop.f32.mrb[0].mxu0
  %v1302 = vadd.f32 0.0, %v1301
  %v1303 = vpop.f32.mrb[0].mxu0
  %v1304 = vpop.f32.mrb[0].mxu0
  %v1305 = vadd.f32 0.0, %v1304
  %v1306 = vpop.f32.mrb[0].mxu0
  %1307 = vmatprep.mubr.bf16.mxu0 0
  %1308 = vmatmul.mubr.bf16.gmra.mrb[0].mxu0 %v869
  %v1309 = vpop.f32.mrb[0].mxu0
  %v1310 = vadd.f32 0.0, %v1309
  %v1311 = vpop.f32.mrb[0].mxu0
  %v1312 = vpop.f32.mrb[0].mxu0
  %v1313 = vadd.f32 0.0, %v1312
  %v1314 = vpop.f32.mrb[0].mxu0
  %1315 = vmatprep.mubr.bf16.mxu0 0
  %1316 = vmatmul.mubr.bf16.gmra.mrb[0].mxu0 %v872
  %v1317 = vpop.f32.mrb[0].mxu0
  %v1318 = vadd.f32 0.0, %v1317
  %v1319 = vpop.f32.mrb[0].mxu0
  %v1320 = vpop.f32.mrb[0].mxu0
  %v1321 = vadd.f32 0.0, %v1320
  %v1322 = vpop.f32.mrb[0].mxu0
  %1323 = vmatprep.mubr.bf16.mxu0 0
  %1324 = vmatmul.mubr.bf16.gmra.mrb[0].mxu0 %v875
  %v1325 = vpop.f32.mrb[0].mxu0
  %v1326 = vadd.f32 0.0, %v1325
  %v1327 = vpop.f32.mrb[0].mxu0
  %v1328 = vpop.f32.mrb[0].mxu0
  %v1329 = vadd.f32 0.0, %v1328
  %v1330 = vpop.f32.mrb[0].mxu0
  %1331 = vmatprep.mubr.bf16.mxu0 0
  %1332 = vmatmul.mubr.bf16.gmra.mrb[0].mxu0 %v878
  %v1333 = vpop.f32.mrb[0].mxu0
  %v1334 = vadd.f32 0.0, %v1333
  %v1335 = vpop.f32.mrb[0].mxu0
  %v1336 = vpop.f32.mrb[0].mxu0
  %v1337 = vadd.f32 0.0, %v1336
  %v1338 = vpop.f32.mrb[0].mxu0
  %1339 = vmatprep.mubr.bf16.mxu0 0
  %1340 = vmatmul.mubr.bf16.gmra.mrb[0].mxu0 %v881
  %v1341 = vpop.f32.mrb[0].mxu0
  %v1342 = vadd.f32 0.0, %v1341
  %v1343 = vpop.f32.mrb[0].mxu0
  %v1344 = vpop.f32.mrb[0].mxu0
  %v1345 = vadd.f32 0.0, %v1344
  %v1346 = vpop.f32.mrb[0].mxu0
  %1347 = vmatprep.mubr.bf16.mxu0 0
  %1348 = vmatmul.mubr.bf16.gmra.mrb[0].mxu0 %v884
  %v1349 = vpop.f32.mrb[0].mxu0
  %v1350 = vadd.f32 0.0, %v1349
  %v1351 = vpop.f32.mrb[0].mxu0
  %v1352 = vpop.f32.mrb[0].mxu0
  %v1353 = vadd.f32 0.0, %v1352
  %v1354 = vpop.f32.mrb[0].mxu0
  %1355 = vmatprep.mubr.bf16.mxu0 0
  %1356 = vmatmul.mubr.bf16.gmra.mrb[0].mxu0 %v887
  %v1357 = vpop.f32.mrb[0].mxu0
  %v1358 = vadd.f32 0.0, %v1357
  %v1359 = vpop.f32.mrb[0].mxu0
  %v1360 = vpop.f32.mrb[0].mxu0
  %v1361 = vadd.f32 0.0, %v1360
  %v1362 = vpop.f32.mrb[0].mxu0
  %1363 = vmatprep.mubr.bf16.mxu0 0
  %1364 = vmatmul.mubr.bf16.gmra.mrb[0].mxu0 %v890
  %v1365 = vpop.f32.mrb[0].mxu0
  %v1366 = vadd.f32 0.0, %v1365
  %v1367 = vpop.f32.mrb[0].mxu0
  %v1368 = vpop.f32.mrb[0].mxu0
  %v1369 = vadd.f32 0.0, %v1368
  %v1370 = vpop.f32.mrb[0].mxu0
  %1371 = vmatprep.mubr.bf16.mxu0 0
  %1372 = vmatmul.mubr.bf16.gmra.mrb[0].mxu0 %v893
  %v1373 = vpop.f32.mrb[0].mxu0
  %v1374 = vadd.f32 0.0, %v1373
  %v1375 = vpop.f32.mrb[0].mxu0
  %v1376 = vpop.f32.mrb[0].mxu0
  %v1377 = vadd.f32 0.0, %v1376
  %v1378 = vpop.f32.mrb[0].mxu0
  %1379 = vmatprep.mubr.bf16.mxu0 0
  %1380 = vmatmul.mubr.bf16.gmra.mrb[0].mxu0 %v896
  %v1381 = vpop.f32.mrb[0].mxu0
  %v1382 = vadd.f32 0.0, %v1381
  %v1383 = vpop.f32.mrb[0].mxu0
  %v1384 = vpop.f32.mrb[0].mxu0
  %v1385 = vadd.f32 0.0, %v1384
  %v1386 = vpop.f32.mrb[0].mxu0
  %1387 = vmatprep.mubr.bf16.mxu0 0
  %1388 = vmatmul.mubr.bf16.gmra.mrb[0].mxu0 %v899
  %v1389 = vpop.f32.mrb[0].mxu0
  %v1390 = vadd.f32 0.0, %v1389
  %v1391 = vpop.f32.mrb[0].mxu0
  %v1392 = vpop.f32.mrb[0].mxu0
  %v1393 = vadd.f32 0.0, %v1392
  %v1394 = vpop.f32.mrb[0].mxu0
  %1395 = vmatprep.mubr.bf16.mxu0 0
  %1396 = vmatmul.mubr.bf16.gmra.mrb[0].mxu0 %v902
  %v1397 = vpop.f32.mrb[0].mxu0
  %v1398 = vadd.f32 0.0, %v1397
  %v1399 = vpop.f32.mrb[0].mxu0
  %v1400 = vpop.f32.mrb[0].mxu0
  %v1401 = vadd.f32 0.0, %v1400
  %v1402 = vpop.f32.mrb[0].mxu0
  %1403 = vmatprep.mubr.bf16.mxu0 0
  %1404 = vmatmul.mubr.bf16.gmra.mrb[0].mxu0 %v905
  %v1405 = vpop.f32.mrb[0].mxu0
  %v1406 = vadd.f32 0.0, %v1405
  %v1407 = vpop.f32.mrb[0].mxu0
  %v1408 = vpop.f32.mrb[0].mxu0
  %v1409 = vadd.f32 0.0, %v1408
  %v1410 = vpop.f32.mrb[0].mxu0
  %1411 = vmatprep.mubr.bf16.mxu0 0
  %1412 = vmatmul.mubr.bf16.gmra.mrb[0].mxu0 %v908
  %v1413 = vpop.f32.mrb[0].mxu0
  %v1414 = vadd.f32 0.0, %v1413
  %v1415 = vpop.f32.mrb[0].mxu0
  %v1416 = vpop.f32.mrb[0].mxu0
  %v1417 = vadd.f32 0.0, %v1416
  %v1418 = vpop.f32.mrb[0].mxu0
  %1419 = vmatprep.mubr.bf16.mxu0 0
  %1420 = vmatmul.mubr.bf16.gmra.mrb[0].mxu0 %v911
  %v1421 = vpop.f32.mrb[0].mxu0
  %v1422 = vadd.f32 0.0, %v1421
  %v1423 = vpop.f32.mrb[0].mxu0
  %v1424 = vpop.f32.mrb[0].mxu0
  %v1425 = vadd.f32 0.0, %v1424
  %v1426 = vpop.f32.mrb[0].mxu0
  %1427 = vmatprep.mubr.bf16.mxu0 0
  %1428 = vmatmul.mubr.bf16.gmra.mrb[0].mxu0 %v914
  %v1429 = vpop.f32.mrb[0].mxu0
  %v1430 = vadd.f32 0.0, %v1429
  %v1431 = vpop.f32.mrb[0].mxu0
  %v1432 = vpop.f32.mrb[0].mxu0
  %v1433 = vadd.f32 0.0, %v1432
  %v1434 = vpop.f32.mrb[0].mxu0
  %1435 = vmatprep.mubr.bf16.mxu0 0
  %1436 = vmatmul.mubr.bf16.gmra.mrb[0].mxu0 %v917
  %v1437 = vpop.f32.mrb[0].mxu0
  %v1438 = vadd.f32 0.0, %v1437
  %v1439 = vpop.f32.mrb[0].mxu0
  %v1440 = vpop.f32.mrb[0].mxu0
  %v1441 = vadd.f32 0.0, %v1440
  %v1442 = vpop.f32.mrb[0].mxu0
  %1443 = vmatprep.mubr.bf16.mxu0 0
  %1444 = vmatmul.mubr.bf16.gmra.mrb[0].mxu0 %v920
  %v1445 = vpop.f32.mrb[0].mxu0
  %v1446 = vadd.f32 0.0, %v1445
  %v1447 = vpop.f32.mrb[0].mxu0
  %v1448 = vpop.f32.mrb[0].mxu0
  %v1449 = vadd.f32 0.0, %v1448
  %v1450 = vpop.f32.mrb[0].mxu0
  %1451 = vmatprep.mubr.bf16.mxu0 0
  %1452 = vmatmul.mubr.bf16.gmra.mrb[0].mxu0 %v923
  %v1453 = vpop.f32.mrb[0].mxu0
  %v1454 = vadd.f32 0.0, %v1453
  %v1455 = vpop.f32.mrb[0].mxu0
  %v1456 = vpop.f32.mrb[0].mxu0
  %v1457 = vadd.f32 0.0, %v1456
  %v1458 = vpop.f32.mrb[0].mxu0
  %1459 = vmatprep.mubr.bf16.mxu0 0
  %1460 = vmatmul.mubr.bf16.gmra.mrb[0].mxu0 %v926
  %v1461 = vpop.f32.mrb[0].mxu0
  %v1462 = vadd.f32 0.0, %v1461
  %v1463 = vpop.f32.mrb[0].mxu0
  %v1464 = vpop.f32.mrb[0].mxu0
  %v1465 = vadd.f32 0.0, %v1464
  %v1466 = vpop.f32.mrb[0].mxu0
  %1467 = vmatprep.mubr.bf16.mxu0 0
  %1468 = vmatmul.mubr.bf16.gmra.mrb[0].mxu0 %v929
  %v1469 = vpop.f32.mrb[0].mxu0
  %v1470 = vadd.f32 0.0, %v1469
  %v1471 = vpop.f32.mrb[0].mxu0
  %v1472 = vpop.f32.mrb[0].mxu0
  %v1473 = vadd.f32 0.0, %v1472
  %v1474 = vpop.f32.mrb[0].mxu0
  %1475 = vmatprep.mubr.bf16.mxu0 0
  %1476 = vmatmul.mubr.bf16.gmra.mrb[0].mxu0 %v932
  %v1477 = vpop.f32.mrb[0].mxu0
  %v1478 = vadd.f32 0.0, %v1477
  %v1479 = vpop.f32.mrb[0].mxu0
  %v1480 = vpop.f32.mrb[0].mxu0
  %v1481 = vadd.f32 0.0, %v1480
  %v1482 = vpop.f32.mrb[0].mxu0
  %1483 = vmatprep.mubr.bf16.mxu0 0
  %1484 = vmatmul.mubr.bf16.gmra.mrb[0].mxu0 %v935
  %v1485 = vpop.f32.mrb[0].mxu0
  %v1486 = vadd.f32 0.0, %v1485
  %v1487 = vpop.f32.mrb[0].mxu0
  %v1488 = vpop.f32.mrb[0].mxu0
  %v1489 = vadd.f32 0.0, %v1488
  %v1490 = vpop.f32.mrb[0].mxu0
  %1491 = vmatprep.mubr.bf16.mxu0 0
  %1492 = vmatmul.mubr.bf16.gmra.mrb[0].mxu0 %v938
  %v1493 = vpop.f32.mrb[0].mxu0
  %v1494 = vadd.f32 0.0, %v1493
  %v1495 = vpop.f32.mrb[0].mxu0
  %v1496 = vpop.f32.mrb[0].mxu0
  %v1497 = vadd.f32 0.0, %v1496
  %v1498 = vpop.f32.mrb[0].mxu0
  %1499 = vmatprep.mubr.bf16.mxu0 0
  %1500 = vmatmul.mubr.bf16.gmra.mrb[0].mxu0 %v941
  %v1501 = vpop.f32.mrb[0].mxu0
  %v1502 = vadd.f32 0.0, %v1501
  %v1503 = vpop.f32.mrb[0].mxu0
  %v1504 = vpop.f32.mrb[0].mxu0
  %v1505 = vadd.f32 0.0, %v1504
  %v1506 = vpop.f32.mrb[0].mxu0
  %1507 = vmatprep.mubr.bf16.mxu0 0
  %1508 = vmatmul.mubr.bf16.gmra.mrb[0].mxu0 %v944
  %v1509 = vpop.f32.mrb[0].mxu0
  %v1510 = vadd.f32 0.0, %v1509
  %v1511 = vpop.f32.mrb[0].mxu0
  %v1512 = vpop.f32.mrb[0].mxu0
  %v1513 = vadd.f32 0.0, %v1512
  %v1514 = vpop.f32.mrb[0].mxu0
  %1515 = vmatprep.mubr.bf16.mxu0 0
  %1516 = vmatmul.mubr.bf16.gmra.mrb[0].mxu0 %v947
  %v1517 = vpop.f32.mrb[0].mxu0
  %v1518 = vadd.f32 0.0, %v1517
  %v1519 = vpop.f32.mrb[0].mxu0
  %v1520 = vpop.f32.mrb[0].mxu0
  %v1521 = vadd.f32 0.0, %v1520
  %v1522 = vpop.f32.mrb[0].mxu0
  %1523 = vmatprep.mubr.bf16.mxu0 0
  %1524 = vmatmul.mubr.bf16.gmra.mrb[0].mxu0 %v950
  %v1525 = vpop.f32.mrb[0].mxu0
  %v1526 = vadd.f32 0.0, %v1525
  %v1527 = vpop.f32.mrb[0].mxu0
  %v1528 = vpop.f32.mrb[0].mxu0
  %v1529 = vadd.f32 0.0, %v1528
  %v1530 = vpop.f32.mrb[0].mxu0
  %1531 = vmatprep.mubr.bf16.mxu0 0
  %1532 = vmatmul.mubr.bf16.gmra.mrb[0].mxu0 %v953
  %v1533 = vpop.f32.mrb[0].mxu0
  %v1534 = vadd.f32 0.0, %v1533
  %v1535 = vpop.f32.mrb[0].mxu0
  %v1536 = vpop.f32.mrb[0].mxu0
  %v1537 = vadd.f32 0.0, %v1536
  %v1538 = vpop.f32.mrb[0].mxu0
  %1539 = vmatprep.mubr.bf16.mxu0 0
  %1540 = vmatmul.mubr.bf16.gmra.mrb[0].mxu0 %v956
  %v1541 = vpop.f32.mrb[0].mxu0
  %v1542 = vadd.f32 0.0, %v1541
  %v1543 = vpop.f32.mrb[0].mxu0
  %v1544 = vpop.f32.mrb[0].mxu0
  %v1545 = vadd.f32 0.0, %v1544
  %v1546 = vpop.f32.mrb[0].mxu0
  %1547 = vmatprep.mubr.bf16.mxu0 0
  %1548 = vmatmul.mubr.bf16.gmra.mrb[0].mxu0 %v959
  %v1549 = vpop.f32.mrb[0].mxu0
  %v1550 = vadd.f32 0.0, %v1549
  %v1551 = vpop.f32.mrb[0].mxu0
  %v1552 = vpop.f32.mrb[0].mxu0
  %v1553 = vadd.f32 0.0, %v1552
  %v1554 = vpop.f32.mrb[0].mxu0
  %1555 = vmatprep.mubr.bf16.mxu0 0
  %1556 = vmatmul.mubr.bf16.gmra.mrb[0].mxu0 %v962
  %v1557 = vpop.f32.mrb[0].mxu0
  %v1558 = vadd.f32 0.0, %v1557
  %v1559 = vpop.f32.mrb[0].mxu0
  %v1560 = vpop.f32.mrb[0].mxu0
  %v1561 = vadd.f32 0.0, %v1560
  %v1562 = vpop.f32.mrb[0].mxu0
  %1563 = vmatprep.mubr.bf16.mxu0 0
  %1564 = vmatmul.mubr.bf16.gmra.mrb[0].mxu0 %v965
  %v1565 = vpop.f32.mrb[0].mxu0
  %v1566 = vadd.f32 0.0, %v1565
  %v1567 = vpop.f32.mrb[0].mxu0
  %v1568 = vpop.f32.mrb[0].mxu0
  %v1569 = vadd.f32 0.0, %v1568
  %v1570 = vpop.f32.mrb[0].mxu0
  %1571 = vmatprep.mubr.bf16.mxu0 0
  %1572 = vmatmul.mubr.bf16.gmra.mrb[0].mxu0 %v968
  %v1573 = vpop.f32.mrb[0].mxu0
  %v1574 = vadd.f32 0.0, %v1573
  %v1575 = vpop.f32.mrb[0].mxu0
  %v1576 = vpop.f32.mrb[0].mxu0
  %v1577 = vadd.f32 0.0, %v1576
  %v1578 = vpop.f32.mrb[0].mxu0
  %1579 = vmatprep.mubr.bf16.mxu0 0
  %1580 = vmatmul.mubr.bf16.gmra.mrb[0].mxu0 %v971
  %v1581 = vpop.f32.mrb[0].mxu0
  %v1582 = vadd.f32 0.0, %v1581
  %v1583 = vpop.f32.mrb[0].mxu0
  %v1584 = vpop.f32.mrb[0].mxu0
  %v1585 = vadd.f32 0.0, %v1584
  %v1586 = vpop.f32.mrb[0].mxu0
  %1587 = vmatprep.mubr.bf16.mxu0 0
  %1588 = vmatmul.mubr.bf16.gmra.mrb[0].mxu0 %v974
  %v1589 = vpop.f32.mrb[0].mxu0
  %v1590 = vadd.f32 0.0, %v1589
  %v1591 = vpop.f32.mrb[0].mxu0
  %v1592 = vpop.f32.mrb[0].mxu0
  %v1593 = vadd.f32 0.0, %v1592
  %v1594 = vpop.f32.mrb[0].mxu0
  %1595 = vmatprep.mubr.bf16.mxu0 0
  %1596 = vmatmul.mubr.bf16.gmra.mrb[0].mxu0 %v977
  %v1597 = vpop.f32.mrb[0].mxu0
  %v1598 = vadd.f32 0.0, %v1597
  %v1599 = vpop.f32.mrb[0].mxu0
  %v1600 = vpop.f32.mrb[0].mxu0
  %v1601 = vadd.f32 0.0, %v1600
  %v1602 = vpop.f32.mrb[0].mxu0
  %1603 = vmatprep.mubr.bf16.mxu0 0
  %1604 = vmatmul.mubr.bf16.gmra.mrb[0].mxu0 %v980
  %v1605 = vpop.f32.mrb[0].mxu0
  %v1606 = vadd.f32 0.0, %v1605
  %v1607 = vpop.f32.mrb[0].mxu0
  %v1608 = vpop.f32.mrb[0].mxu0
  %v1609 = vadd.f32 0.0, %v1608
  %v1610 = vpop.f32.mrb[0].mxu0
  %1611 = vmatprep.mubr.bf16.mxu0 0
  %1612 = vmatmul.mubr.bf16.gmra.mrb[0].mxu0 %v983
  %v1613 = vpop.f32.mrb[0].mxu0
  %v1614 = vadd.f32 0.0, %v1613
  %v1615 = vpop.f32.mrb[0].mxu0
  %v1616 = vpop.f32.mrb[0].mxu0
  %v1617 = vadd.f32 0.0, %v1616
  %v1618 = vpop.f32.mrb[0].mxu0
  %1619 = vmatprep.mubr.bf16.mxu0 0
  %1620 = vmatmul.mubr.bf16.gmra.mrb[0].mxu0 %v986
  %v1621 = vpop.f32.mrb[0].mxu0
  %v1622 = vadd.f32 0.0, %v1621
  %v1623 = vpop.f32.mrb[0].mxu0
  %v1624 = vpop.f32.mrb[0].mxu0
  %v1625 = vadd.f32 0.0, %v1624
  %v1626 = vpop.f32.mrb[0].mxu0
  %1627 = vmatprep.mubr.bf16.mxu0 0
  %1628 = vmatmul.mubr.bf16.gmra.mrb[0].mxu0 %v989
  %v1629 = vpop.f32.mrb[0].mxu0
  %v1630 = vadd.f32 0.0, %v1629
  %v1631 = vpop.f32.mrb[0].mxu0
  %v1632 = vpop.f32.mrb[0].mxu0
  %v1633 = vadd.f32 0.0, %v1632
  %v1634 = vpop.f32.mrb[0].mxu0
  %1635 = vmatprep.mubr.bf16.mxu0 0
  %1636 = vmatmul.mubr.bf16.gmra.mrb[0].mxu0 %v992
  %v1637 = vpop.f32.mrb[0].mxu0
  %v1638 = vadd.f32 0.0, %v1637
  %v1639 = vpop.f32.mrb[0].mxu0
  %v1640 = vpop.f32.mrb[0].mxu0
  %v1641 = vadd.f32 0.0, %v1640
  %v1642 = vpop.f32.mrb[0].mxu0
  %1643 = vmatprep.mubr.bf16.mxu0 0
  %1644 = vmatmul.mubr.bf16.gmra.mrb[0].mxu0 %v995
  %v1645 = vpop.f32.mrb[0].mxu0
  %v1646 = vadd.f32 0.0, %v1645
  %v1647 = vpop.f32.mrb[0].mxu0
  %v1648 = vpop.f32.mrb[0].mxu0
  %v1649 = vadd.f32 0.0, %v1648
  %v1650 = vpop.f32.mrb[0].mxu0
  %1651 = vmatprep.mubr.bf16.mxu0 0
  %1652 = vmatmul.mubr.bf16.gmra.mrb[0].mxu0 %v998
  %v1653 = vpop.f32.mrb[0].mxu0
  %v1654 = vadd.f32 0.0, %v1653
  %v1655 = vpop.f32.mrb[0].mxu0
  %v1656 = vpop.f32.mrb[0].mxu0
  %v1657 = vadd.f32 0.0, %v1656
  %v1658 = vpop.f32.mrb[0].mxu0
  %1659 = vmatprep.mubr.bf16.mxu0 0
  %1660 = vmatmul.mubr.bf16.gmra.mrb[0].mxu0 %v1001
  %v1661 = vpop.f32.mrb[0].mxu0
  %v1662 = vadd.f32 0.0, %v1661
  %v1663 = vpop.f32.mrb[0].mxu0
  %v1664 = vpop.f32.mrb[0].mxu0
  %v1665 = vadd.f32 0.0, %v1664
  %v1666 = vpop.f32.mrb[0].mxu0
  %1667 = vmatprep.mubr.bf16.mxu0 0
  %1668 = vmatmul.mubr.bf16.gmra.mrb[0].mxu0 %v1004
  %v1669 = vpop.f32.mrb[0].mxu0
  %v1670 = vadd.f32 0.0, %v1669
  %v1671 = vpop.f32.mrb[0].mxu0
  %v1672 = vpop.f32.mrb[0].mxu0
  %v1673 = vadd.f32 0.0, %v1672
  %v1674 = vpop.f32.mrb[0].mxu0
  %1675 = vmatprep.mubr.bf16.mxu0 0
  %1676 = vmatmul.mubr.bf16.gmra.mrb[0].mxu0 %v1007
  %v1677 = vpop.f32.mrb[0].mxu0
  %v1678 = vadd.f32 0.0, %v1677
  %v1679 = vpop.f32.mrb[0].mxu0
  %v1680 = vpop.f32.mrb[0].mxu0
  %v1681 = vadd.f32 0.0, %v1680
  %v1682 = vpop.f32.mrb[0].mxu0
  %1683 = vmatprep.mubr.bf16.mxu0 0
  %1684 = vmatmul.mubr.bf16.gmra.mrb[0].mxu0 %v1010
  %v1685 = vpop.f32.mrb[0].mxu0
  %v1686 = vadd.f32 0.0, %v1685
  %v1687 = vpop.f32.mrb[0].mxu0
  %v1688 = vpop.f32.mrb[0].mxu0
  %v1689 = vadd.f32 0.0, %v1688
  %v1690 = vpop.f32.mrb[0].mxu0
  %1691 = vmatprep.mubr.bf16.mxu0 0
  %1692 = vmatmul.mubr.bf16.gmra.mrb[0].mxu0 %v1013
  %v1693 = vpop.f32.mrb[0].mxu0
  %v1694 = vadd.f32 0.0, %v1693
  %v1695 = vpop.f32.mrb[0].mxu0
  %v1696 = vpop.f32.mrb[0].mxu0
  %v1697 = vadd.f32 0.0, %v1696
  %v1698 = vpop.f32.mrb[0].mxu0
  %1699 = vmatprep.mubr.bf16.mxu0 0
  %1700 = vmatmul.mubr.bf16.gmra.mrb[0].mxu0 %v1016
  %v1701 = vpop.f32.mrb[0].mxu0
  %v1702 = vadd.f32 0.0, %v1701
  %v1703 = vpop.f32.mrb[0].mxu0
  %v1704 = vpop.f32.mrb[0].mxu0
  %v1705 = vadd.f32 0.0, %v1704
  %v1706 = vpop.f32.mrb[0].mxu0
  %1707 = vmatprep.mubr.bf16.mxu0 0
  %1708 = vmatmul.mubr.bf16.gmra.mrb[0].mxu0 %v1019
  %v1709 = vpop.f32.mrb[0].mxu0
  %v1710 = vadd.f32 0.0, %v1709
  %v1711 = vpop.f32.mrb[0].mxu0
  %v1712 = vpop.f32.mrb[0].mxu0
  %v1713 = vadd.f32 0.0, %v1712
  %v1714 = vpop.f32.mrb[0].mxu0
  %1715 = vmatprep.mubr.bf16.mxu0 0
  %1716 = vmatmul.mubr.bf16.gmra.mrb[0].mxu0 %v1022
  %v1717 = vpop.f32.mrb[0].mxu0
  %v1718 = vadd.f32 0.0, %v1717
  %v1719 = vpop.f32.mrb[0].mxu0
  %v1720 = vpop.f32.mrb[0].mxu0
  %v1721 = vadd.f32 0.0, %v1720
  %v1722 = vpop.f32.mrb[0].mxu0
  %1723 = vmatprep.mubr.bf16.mxu0 0
  %1724 = vmatmul.mubr.bf16.gmra.mrb[0].mxu0 %v1025
  %v1725 = vpop.f32.mrb[0].mxu0
  %v1726 = vadd.f32 0.0, %v1725
  %v1727 = vpop.f32.mrb[0].mxu0
  %v1728 = vpop.f32.mrb[0].mxu0
  %v1729 = vadd.f32 0.0, %v1728
  %v1730 = vpop.f32.mrb[0].mxu0
  %1731 = vmatprep.mubr.bf16.mxu0 0
  %1732 = vmatmul.mubr.bf16.gmra.mrb[0].mxu0 %v1028
  %v1733 = vpop.f32.mrb[0].mxu0
  %v1734 = vadd.f32 0.0, %v1733
  %v1735 = vpop.f32.mrb[0].mxu0
  %v1736 = vpop.f32.mrb[0].mxu0
  %v1737 = vadd.f32 0.0, %v1736
  %v1738 = vpop.f32.mrb[0].mxu0
  %1739 = vmatprep.mubr.bf16.mxu0 0
  %1740 = vmatmul.mubr.bf16.gmra.mrb[0].mxu0 %v1031
  %v1741 = vpop.f32.mrb[0].mxu0
  %v1742 = vadd.f32 0.0, %v1741
  %v1743 = vpop.f32.mrb[0].mxu0
  %v1744 = vpop.f32.mrb[0].mxu0
  %v1745 = vadd.f32 0.0, %v1744
  %v1746 = vpop.f32.mrb[0].mxu0
  %1747 = vmatprep.mubr.bf16.mxu0 0
  %1748 = vmatmul.mubr.bf16.gmra.mrb[0].mxu0 %v1034
  %v1749 = vpop.f32.mrb[0].mxu0
  %v1750 = vadd.f32 0.0, %v1749
  %v1751 = vpop.f32.mrb[0].mxu0
  %v1752 = vpop.f32.mrb[0].mxu0
  %v1753 = vadd.f32 0.0, %v1752
  %v1754 = vpop.f32.mrb[0].mxu0
  %1755 = vmatprep.mubr.bf16.mxu0 0
  %1756 = vmatmul.mubr.bf16.gmra.mrb[0].mxu0 %v1037
  %v1757 = vpop.f32.mrb[0].mxu0
  %v1758 = vadd.f32 0.0, %v1757
  %v1759 = vpop.f32.mrb[0].mxu0
  %v1760 = vpop.f32.mrb[0].mxu0
  %v1761 = vadd.f32 0.0, %v1760
  %v1762 = vpop.f32.mrb[0].mxu0
  %1763 = vmatprep.mubr.bf16.mxu0 0
  %1764 = vmatmul.mubr.bf16.gmra.mrb[0].mxu0 %v1040
  %v1765 = vpop.f32.mrb[0].mxu0
  %v1766 = vadd.f32 0.0, %v1765
  %v1767 = vpop.f32.mrb[0].mxu0
  %v1768 = vpop.f32.mrb[0].mxu0
  %v1769 = vadd.f32 0.0, %v1768
  %v1770 = vpop.f32.mrb[0].mxu0
  %1771 = vmatprep.mubr.bf16.mxu0 0
  %1772 = vmatmul.mubr.bf16.gmra.mrb[0].mxu0 %v1043
  %v1773 = vpop.f32.mrb[0].mxu0
  %v1774 = vadd.f32 0.0, %v1773
  %v1775 = vpop.f32.mrb[0].mxu0
  %v1776 = vpop.f32.mrb[0].mxu0
  %v1777 = vadd.f32 0.0, %v1776
  %v1778 = vpop.f32.mrb[0].mxu0
  %1779 = vmatprep.mubr.bf16.mxu0 0
  %1780 = vmatmul.mubr.bf16.gmra.mrb[0].mxu0 %v1046
  %v1781 = vpop.f32.mrb[0].mxu0
  %v1782 = vadd.f32 0.0, %v1781
  %v1783 = vpop.f32.mrb[0].mxu0
  %v1784 = vpop.f32.mrb[0].mxu0
  %v1785 = vadd.f32 0.0, %v1784
  %v1786 = vpop.f32.mrb[0].mxu0
  %1787 = vmatprep.mubr.bf16.mxu0 0
  %1788 = vmatmul.mubr.bf16.gmra.mrb[0].mxu0 %v1049
  %v1789 = vpop.f32.mrb[0].mxu0
  %v1790 = vadd.f32 0.0, %v1789
  %v1791 = vpop.f32.mrb[0].mxu0
  %v1792 = vpop.f32.mrb[0].mxu0
  %v1793 = vadd.f32 0.0, %v1792
  %v1794 = vpop.f32.mrb[0].mxu0
  %1795 = vmatprep.mubr.bf16.mxu0 0
  %1796 = vmatmul.mubr.bf16.gmra.mrb[0].mxu0 %v1052
  %v1797 = vpop.f32.mrb[0].mxu0
  %v1798 = vadd.f32 0.0, %v1797
  %v1799 = vpop.f32.mrb[0].mxu0
  %v1800 = vpop.f32.mrb[0].mxu0
  %v1801 = vadd.f32 0.0, %v1800
  %v1802 = vpop.f32.mrb[0].mxu0
  %1803 = vmatprep.mubr.bf16.mxu0 0
  %1804 = vmatmul.mubr.bf16.gmra.mrb[0].mxu0 %v1055
  %v1805 = vpop.f32.mrb[0].mxu0
  %v1806 = vadd.f32 0.0, %v1805
  %v1807 = vpop.f32.mrb[0].mxu0
  %v1808 = vpop.f32.mrb[0].mxu0
  %v1809 = vadd.f32 0.0, %v1808
  %v1810 = vpop.f32.mrb[0].mxu0
  %1811 = vmatprep.mubr.bf16.mxu0 0
  %1812 = vmatmul.mubr.bf16.gmra.mrb[0].mxu0 %v1058
  %v1813 = vpop.f32.mrb[0].mxu0
  %v1814 = vadd.f32 0.0, %v1813
  %v1815 = vpop.f32.mrb[0].mxu0
  %v1816 = vpop.f32.mrb[0].mxu0
  %v1817 = vadd.f32 0.0, %v1816
  %v1818 = vpop.f32.mrb[0].mxu0
  %1819 = vmatprep.mubr.bf16.mxu0 0
  %1820 = vmatmul.mubr.bf16.gmra.mrb[0].mxu0 %v1061
  %v1821 = vpop.f32.mrb[0].mxu0
  %v1822 = vadd.f32 0.0, %v1821
  %v1823 = vpop.f32.mrb[0].mxu0
  %v1824 = vpop.f32.mrb[0].mxu0
  %v1825 = vadd.f32 0.0, %v1824
  %v1826 = vpop.f32.mrb[0].mxu0
  %1827 = vmatprep.mubr.bf16.mxu0 0
  %1828 = vmatmul.mubr.bf16.gmra.mrb[0].mxu0 %v1064
  %v1829 = vpop.f32.mrb[0].mxu0
  %v1830 = vadd.f32 0.0, %v1829
  %v1831 = vpop.f32.mrb[0].mxu0
  %v1832 = vpop.f32.mrb[0].mxu0
  %v1833 = vadd.f32 0.0, %v1832
  %v1834 = vpop.f32.mrb[0].mxu0
  %1835 = vmatprep.mubr.bf16.mxu0 0
  %1836 = vmatmul.mubr.bf16.gmra.mrb[0].mxu0 %v1067
  %v1837 = vpop.f32.mrb[0].mxu0
  %v1838 = vadd.f32 0.0, %v1837
  %v1839 = vpop.f32.mrb[0].mxu0
  %v1840 = vpop.f32.mrb[0].mxu0
  %v1841 = vadd.f32 0.0, %v1840
  %v1842 = vpop.f32.mrb[0].mxu0
  %1843 = vmatprep.mubr.bf16.mxu0 0
  %1844 = vmatmul.mubr.bf16.gmra.mrb[0].mxu0 %v1070
  %v1845 = vpop.f32.mrb[0].mxu0
  %v1846 = vadd.f32 0.0, %v1845
  %v1847 = vpop.f32.mrb[0].mxu0
  %v1848 = vpop.f32.mrb[0].mxu0
  %v1849 = vadd.f32 0.0, %v1848
  %v1850 = vpop.f32.mrb[0].mxu0
  %1851 = vmatprep.mubr.bf16.mxu0 0
  %1852 = vmatmul.mubr.bf16.gmra.mrb[0].mxu0 %v1073
  %v1853 = vpop.f32.mrb[0].mxu0
  %v1854 = vadd.f32 0.0, %v1853
  %v1855 = vpop.f32.mrb[0].mxu0
  %v1856 = vpop.f32.mrb[0].mxu0
  %v1857 = vadd.f32 0.0, %v1856
  %v1858 = vpop.f32.mrb[0].mxu0
  %1859 = vmatprep.mubr.bf16.mxu0 0
  %1860 = vmatmul.mubr.bf16.gmra.mrb[0].mxu0 %v1076
  %v1861 = vpop.f32.mrb[0].mxu0
  %v1862 = vadd.f32 0.0, %v1861
  %v1863 = vpop.f32.mrb[0].mxu0
  %v1864 = vpop.f32.mrb[0].mxu0
  %v1865 = vadd.f32 0.0, %v1864
  %v1866 = vpop.f32.mrb[0].mxu0
  %1867 = vmatprep.mubr.bf16.mxu0 0
  %1868 = vmatmul.mubr.bf16.gmra.mrb[0].mxu0 %v1079
  %v1869 = vpop.f32.mrb[0].mxu0
  %v1870 = vadd.f32 0.0, %v1869
  %v1871 = vpop.f32.mrb[0].mxu0
  %v1872 = vpop.f32.mrb[0].mxu0
  %v1873 = vadd.f32 0.0, %v1872
  %v1874 = vpop.f32.mrb[0].mxu0
  %1875 = vmatprep.mubr.bf16.mxu0 0
  %1876 = vmatmul.mubr.bf16.gmra.mrb[0].mxu0 %v1082
  %v1877 = vpop.f32.mrb[0].mxu0
  %v1878 = vadd.f32 0.0, %v1877
  %v1879 = vpop.f32.mrb[0].mxu0
  %v1880 = vpop.f32.mrb[0].mxu0
  %v1881 = vadd.f32 0.0, %v1880
  %v1882 = vpop.f32.mrb[0].mxu0
  %1883 = vmatprep.mubr.bf16.mxu0 0
  %1884 = vmatmul.mubr.bf16.gmra.mrb[0].mxu0 %v1085
  %v1885 = vpop.f32.mrb[0].mxu0
  %v1886 = vadd.f32 0.0, %v1885
  %v1887 = vpop.f32.mrb[0].mxu0
  %v1888 = vpop.f32.mrb[0].mxu0
  %v1889 = vadd.f32 0.0, %v1888
  %v1890 = vpop.f32.mrb[0].mxu0
  %1891 = vmatprep.mubr.bf16.mxu0 0
  %1892 = vmatmul.mubr.bf16.gmra.mrb[0].mxu0 %v1088
  %v1893 = vpop.f32.mrb[0].mxu0
  %v1894 = vadd.f32 0.0, %v1893
  %v1895 = vpop.f32.mrb[0].mxu0
  %v1896 = vpop.f32.mrb[0].mxu0
  %v1897 = vadd.f32 0.0, %v1896
  %v1898 = vpop.f32.mrb[0].mxu0
  %1899 = vmatprep.mubr.bf16.mxu0 0
  %1900 = vmatmul.mubr.bf16.gmra.mrb[0].mxu0 %v1091
  %v1901 = vpop.f32.mrb[0].mxu0
  %v1902 = vadd.f32 0.0, %v1901
  %v1903 = vpop.f32.mrb[0].mxu0
  %v1904 = vpop.f32.mrb[0].mxu0
  %v1905 = vadd.f32 0.0, %v1904
  %v1906 = vpop.f32.mrb[0].mxu0
  %1907 = vmatprep.mubr.bf16.mxu0 0
  %1908 = vmatmul.mubr.bf16.gmra.mrb[0].mxu0 %v1094
  %v1909 = vpop.f32.mrb[0].mxu0
  %v1910 = vadd.f32 0.0, %v1909
  %v1911 = vpop.f32.mrb[0].mxu0
  %v1912 = vpop.f32.mrb[0].mxu0
  %v1913 = vadd.f32 0.0, %v1912
  %v1914 = vpop.f32.mrb[0].mxu0
  %1915 = vmatprep.mubr.bf16.mxu0 0
  %1916 = vmatmul.mubr.bf16.gmra.mrb[0].mxu0 %v1097
  %v1917 = vpop.f32.mrb[0].mxu0
  %v1918 = vadd.f32 0.0, %v1917
  %v1919 = vpop.f32.mrb[0].mxu0
  %v1920 = vpop.f32.mrb[0].mxu0
  %v1921 = vadd.f32 0.0, %v1920
  %v1922 = vpop.f32.mrb[0].mxu0
  %1923 = vmatprep.mubr.bf16.mxu0 0
  %1924 = vmatmul.mubr.bf16.gmra.mrb[0].mxu0 %v1100
  %v1925 = vpop.f32.mrb[0].mxu0
  %v1926 = vadd.f32 0.0, %v1925
  %v1927 = vpop.f32.mrb[0].mxu0
  %v1928 = vpop.f32.mrb[0].mxu0
  %v1929 = vadd.f32 0.0, %v1928
  %v1930 = vpop.f32.mrb[0].mxu0
  %1931 = vmatprep.mubr.bf16.mxu0 0
  %1932 = vmatmul.mubr.bf16.gmra.mrb[0].mxu0 %v1103
  %v1933 = vpop.f32.mrb[0].mxu0
  %v1934 = vadd.f32 0.0, %v1933
  %v1935 = vpop.f32.mrb[0].mxu0
  %v1936 = vpop.f32.mrb[0].mxu0
  %v1937 = vadd.f32 0.0, %v1936
  %v1938 = vpop.f32.mrb[0].mxu0
  %1939 = vmatprep.mubr.bf16.mxu0 0
  %1940 = vmatmul.mubr.bf16.gmra.mrb[0].mxu0 %v1106
  %v1941 = vpop.f32.mrb[0].mxu0
  %v1942 = vadd.f32 0.0, %v1941
  %v1943 = vpop.f32.mrb[0].mxu0
  %v1944 = vpop.f32.mrb[0].mxu0
  %v1945 = vadd.f32 0.0, %v1944
  %v1946 = vpop.f32.mrb[0].mxu0
  %1947 = vmatprep.mubr.bf16.mxu0 0
  %1948 = vmatmul.mubr.bf16.gmra.mrb[0].mxu0 %v1109
  %v1949 = vpop.f32.mrb[0].mxu0
  %v1950 = vadd.f32 0.0, %v1949
  %v1951 = vpop.f32.mrb[0].mxu0
  %v1952 = vpop.f32.mrb[0].mxu0
  %v1953 = vadd.f32 0.0, %v1952
  %v1954 = vpop.f32.mrb[0].mxu0
  %1955 = vmatprep.mubr.bf16.mxu0 0
  %1956 = vmatmul.mubr.bf16.gmra.mrb[0].mxu0 %v1112
  %v1957 = vpop.f32.mrb[0].mxu0
  %v1958 = vadd.f32 0.0, %v1957
  %v1959 = vpop.f32.mrb[0].mxu0
  %v1960 = vpop.f32.mrb[0].mxu0
  %v1961 = vadd.f32 0.0, %v1960
  %v1962 = vpop.f32.mrb[0].mxu0
  %1963 = vmatprep.mubr.bf16.mxu0 0
  %1964 = vmatmul.mubr.bf16.gmra.mrb[0].mxu0 %v1115
  %v1965 = vpop.f32.mrb[0].mxu0
  %v1966 = vadd.f32 0.0, %v1965
  %v1967 = vpop.f32.mrb[0].mxu0
  %v1968 = vpop.f32.mrb[0].mxu0
  %v1969 = vadd.f32 0.0, %v1968
  %v1970 = vpop.f32.mrb[0].mxu0
  %1971 = vmatprep.mubr.bf16.mxu0 0
  %1972 = vmatmul.mubr.bf16.gmra.mrb[0].mxu0 %v1118
  %v1973 = vpop.f32.mrb[0].mxu0
  %v1974 = vadd.f32 0.0, %v1973
  %v1975 = vpop.f32.mrb[0].mxu0
  %v1976 = vpop.f32.mrb[0].mxu0
  %v1977 = vadd.f32 0.0, %v1976
  %v1978 = vpop.f32.mrb[0].mxu0
  %1979 = vmatprep.mubr.bf16.mxu0 0
  %1980 = vmatmul.mubr.bf16.gmra.mrb[0].mxu0 %v1121
  %v1981 = vpop.f32.mrb[0].mxu0
  %v1982 = vadd.f32 0.0, %v1981
  %v1983 = vpop.f32.mrb[0].mxu0
  %v1984 = vpop.f32.mrb[0].mxu0
  %v1985 = vadd.f32 0.0, %v1984
  %v1986 = vpop.f32.mrb[0].mxu0
  %1987 = vmatprep.mubr.bf16.mxu0 0
  %1988 = vmatmul.mubr.bf16.gmra.mrb[0].mxu0 %v1124
  %v1989 = vpop.f32.mrb[0].mxu0
  %v1990 = vadd.f32 0.0, %v1989
  %v1991 = vpop.f32.mrb[0].mxu0
  %v1992 = vpop.f32.mrb[0].mxu0
  %v1993 = vadd.f32 0.0, %v1992
  %v1994 = vpop.f32.mrb[0].mxu0
  %1995 = vmatprep.mubr.bf16.mxu0 0
  %1996 = vmatmul.mubr.bf16.gmra.mrb[0].mxu0 %v1127
  %v1997 = vpop.f32.mrb[0].mxu0
  %v1998 = vadd.f32 0.0, %v1997
  %v1999 = vpop.f32.mrb[0].mxu0
  %v2000 = vpop.f32.mrb[0].mxu0
  %v2001 = vadd.f32 0.0, %v2000
  %v2002 = vpop.f32.mrb[0].mxu0
  %2003 = vmatprep.mubr.bf16.mxu0 0
  %2004 = vmatmul.mubr.bf16.gmra.mrb[0].mxu0 %v1130
  %v2005 = vpop.f32.mrb[0].mxu0
  %v2006 = vadd.f32 0.0, %v2005
  %v2007 = vpop.f32.mrb[0].mxu0
  %v2008 = vpop.f32.mrb[0].mxu0
  %v2009 = vadd.f32 0.0, %v2008
  %v2010 = vpop.f32.mrb[0].mxu0
  %2011 = vmatprep.mubr.bf16.mxu0 0
  %2012 = vmatmul.mubr.bf16.gmra.mrb[0].mxu0 %v1133
  %v2013 = vpop.f32.mrb[0].mxu0
  %v2014 = vadd.f32 0.0, %v2013
  %v2015 = vpop.f32.mrb[0].mxu0
  %v2016 = vpop.f32.mrb[0].mxu0
  %v2017 = vadd.f32 0.0, %v2016
  %v2018 = vpop.f32.mrb[0].mxu0
  %2019 = vmatprep.mubr.bf16.mxu0 0
  %2020 = vmatmul.mubr.bf16.gmra.mrb[0].mxu0 %v1136
  %v2021 = vpop.f32.mrb[0].mxu0
  %v2022 = vadd.f32 0.0, %v2021
  %v2023 = vpop.f32.mrb[0].mxu0
  %v2024 = vpop.f32.mrb[0].mxu0
  %v2025 = vadd.f32 0.0, %v2024
  %v2026 = vpop.f32.mrb[0].mxu0
  %2027 = vmatprep.mubr.bf16.mxu0 0
  %2028 = vmatmul.mubr.bf16.gmra.mrb[0].mxu0 %v1139
  %v2029 = vpop.f32.mrb[0].mxu0
  %v2030 = vadd.f32 0.0, %v2029
  %v2031 = vpop.f32.mrb[0].mxu0
  %v2032 = vpop.f32.mrb[0].mxu0
  %v2033 = vadd.f32 0.0, %v2032
  %v2034 = vpop.f32.mrb[0].mxu0
  %2035 = vmatprep.mubr.bf16.mxu0 0
  %2036 = vmatmul.mubr.bf16.gmra.mrb[0].mxu0 %v1142
  %v2037 = vpop.f32.mrb[0].mxu0
  %v2038 = vadd.f32 0.0, %v2037
  %v2039 = vpop.f32.mrb[0].mxu0
  %v2040 = vpop.f32.mrb[0].mxu0
  %v2041 = vadd.f32 0.0, %v2040
  %v2042 = vpop.f32.mrb[0].mxu0
  %2043 = vmatprep.mubr.bf16.mxu0 0
  %2044 = vmatmul.mubr.bf16.gmra.mrb[0].mxu0 %v1145
  %v2045 = vpop.f32.mrb[0].mxu0
  %v2046 = vadd.f32 0.0, %v2045
  %v2047 = vpop.f32.mrb[0].mxu0
  %v2048 = vpop.f32.mrb[0].mxu0
  %v2049 = vadd.f32 0.0, %v2048
  %v2050 = vpop.f32.mrb[0].mxu0
  %2051 = vmatprep.mubr.bf16.mxu0 0
  %2052 = vmatmul.mubr.bf16.gmra.mrb[0].mxu0 %v1148
  %v2053 = vpop.f32.mrb[0].mxu0
  %v2054 = vadd.f32 0.0, %v2053
  %v2055 = vpop.f32.mrb[0].mxu0
  %v2056 = vpop.f32.mrb[0].mxu0
  %v2057 = vadd.f32 0.0, %v2056
  %v2058 = vpop.f32.mrb[0].mxu0
  %2059 = vmatprep.mubr.bf16.mxu0 0
  %2060 = vmatmul.mubr.bf16.gmra.mrb[0].mxu0 %v1151
  %v2061 = vpop.f32.mrb[0].mxu0
  %v2062 = vadd.f32 0.0, %v2061
  %v2063 = vpop.f32.mrb[0].mxu0
  %v2064 = vpop.f32.mrb[0].mxu0
  %v2065 = vadd.f32 0.0, %v2064
  %v2066 = vpop.f32.mrb[0].mxu0
  %2067 = vmatprep.mubr.bf16.mxu0 0
  %2068 = vmatmul.mubr.bf16.gmra.mrb[0].mxu0 %v1154
  %v2069 = vpop.f32.mrb[0].mxu0
  %v2070 = vadd.f32 0.0, %v2069
  %v2071 = vpop.f32.mrb[0].mxu0
  %v2072 = vpop.f32.mrb[0].mxu0
  %v2073 = vadd.f32 0.0, %v2072
  %v2074 = vpop.f32.mrb[0].mxu0
  %2075 = vmatprep.mubr.bf16.mxu0 0
  %2076 = vmatmul.mubr.bf16.gmra.mrb[0].mxu0 %v1157
  %v2077 = vpop.f32.mrb[0].mxu0
  %v2078 = vadd.f32 0.0, %v2077
  %v2079 = vpop.f32.mrb[0].mxu0
  %v2080 = vpop.f32.mrb[0].mxu0
  %v2081 = vadd.f32 0.0, %v2080
  %v2082 = vpop.f32.mrb[0].mxu0
  %2083 = vmatprep.mubr.bf16.mxu0 0
  %2084 = vmatmul.mubr.bf16.gmra.mrb[0].mxu0 %v1160
  %v2085 = vpop.f32.mrb[0].mxu0
  %v2086 = vadd.f32 0.0, %v2085
  %v2087 = vpop.f32.mrb[0].mxu0
  %v2088 = vpop.f32.mrb[0].mxu0
  %v2089 = vadd.f32 0.0, %v2088
  %v2090 = vpop.f32.mrb[0].mxu0
  %2091 = vmatprep.mubr.bf16.mxu0 0
  %2092 = vmatmul.mubr.bf16.gmra.mrb[0].mxu0 %v1163
  %v2093 = vpop.f32.mrb[0].mxu0
  %v2094 = vadd.f32 0.0, %v2093
  %v2095 = vpop.f32.mrb[0].mxu0
  %v2096 = vpop.f32.mrb[0].mxu0
  %v2097 = vadd.f32 0.0, %v2096
  %v2098 = vpop.f32.mrb[0].mxu0
  %2099 = vmatprep.mubr.bf16.mxu0 0
  %2100 = vmatmul.mubr.bf16.gmra.mrb[0].mxu0 %v1166
  %v2101 = vpop.f32.mrb[0].mxu0
  %v2102 = vadd.f32 0.0, %v2101
  %v2103 = vpop.f32.mrb[0].mxu0
  %v2104 = vpop.f32.mrb[0].mxu0
  %v2105 = vadd.f32 0.0, %v2104
  %v2106 = vpop.f32.mrb[0].mxu0
  %2107 = vmatprep.mubr.bf16.mxu0 0
  %2108 = vmatmul.mubr.bf16.gmra.mrb[0].mxu0 %v1169
  %v2109 = vpop.f32.mrb[0].mxu0
  %v2110 = vadd.f32 0.0, %v2109
  %v2111 = vpop.f32.mrb[0].mxu0
  %v2112 = vpop.f32.mrb[0].mxu0
  %v2113 = vadd.f32 0.0, %v2112
  %v2114 = vpop.f32.mrb[0].mxu0
  %2115 = vmatprep.mubr.bf16.mxu0 0
  %2116 = vmatmul.mubr.bf16.gmra.mrb[0].mxu0 %v1172
  %v2117 = vpop.f32.mrb[0].mxu0
  %v2118 = vadd.f32 0.0, %v2117
  %v2119 = vpop.f32.mrb[0].mxu0
  %v2120 = vpop.f32.mrb[0].mxu0
  %v2121 = vadd.f32 0.0, %v2120
  %v2122 = vpop.f32.mrb[0].mxu0
  %2123 = vmatprep.mubr.bf16.mxu0 0
  %2124 = vmatmul.mubr.bf16.gmra.mrb[0].mxu0 %v1175
  %v2125 = vpop.f32.mrb[0].mxu0
  %v2126 = vadd.f32 0.0, %v2125
  %v2127 = vpop.f32.mrb[0].mxu0
  %v2128 = vpop.f32.mrb[0].mxu0
  %v2129 = vadd.f32 0.0, %v2128
  %v2130 = vpop.f32.mrb[0].mxu0
  %2131 = vmatprep.mubr.bf16.mxu0 0
  %2132 = vmatmul.mubr.bf16.gmra.mrb[0].mxu0 %v1178
  %v2133 = vpop.f32.mrb[0].mxu0
  %v2134 = vadd.f32 0.0, %v2133
  %v2135 = vpop.f32.mrb[0].mxu0
  %v2136 = vpop.f32.mrb[0].mxu0
  %v2137 = vadd.f32 0.0, %v2136
  %v2138 = vpop.f32.mrb[0].mxu0
  %2139 = vmatprep.mubr.bf16.mxu0 0
  %2140 = vmatmul.mubr.bf16.gmra.mrb[0].mxu0 %v1181
  %v2141 = vpop.f32.mrb[0].mxu0
  %v2142 = vadd.f32 0.0, %v2141
  %v2143 = vpop.f32.mrb[0].mxu0
  %v2144 = vpop.f32.mrb[0].mxu0
  %v2145 = vadd.f32 0.0, %v2144
  %v2146 = vpop.f32.mrb[0].mxu0
  %2147 = vdwg.mxu0
  %v2148 = vmax.f32 %v1222, %v1454
  %v2149 = vmax.f32 %v1225, %v1457
  %v2150 = vmax.f32 %v1230, %v1462
  %v2151 = vmax.f32 %v1233, %v1465
  %v2152 = vmax.f32 %v1238, %v1470
  %v2153 = vmax.f32 %v1241, %v1473
  %v2154 = vmax.f32 %v1246, %v1478
  %v2155 = vmax.f32 %v1249, %v1481
  %v2156 = vmax.f32 %v1254, %v1486
  %v2157 = vmax.f32 %v1257, %v1489
  %v2158 = vmax.f32 %v1262, %v1494
  %v2159 = vmax.f32 %v1265, %v1497
  %v2160 = vmax.f32 %v1270, %v1502
  %v2161 = vmax.f32 %v1273, %v1505
  %v2162 = vmax.f32 %v1278, %v1510
  %v2163 = vmax.f32 %v1281, %v1513
  %v2164 = vmax.f32 %v1286, %v1518
  %v2165 = vmax.f32 %v1289, %v1521
  %v2166 = vmax.f32 %v1294, %v1526
  %v2167 = vmax.f32 %v1297, %v1529
  %v2168 = vmax.f32 %v1302, %v1534
  %v2169 = vmax.f32 %v1305, %v1537
  %v2170 = vmax.f32 %v1310, %v1542
  %v2171 = vmax.f32 %v1313, %v1545
  %v2172 = vmax.f32 %v1318, %v1550
  %v2173 = vmax.f32 %v1321, %v1553
  %v2174 = vmax.f32 %v1326, %v1558
  %v2175 = vmax.f32 %v1329, %v1561
  %v2176 = vmax.f32 %v1334, %v1566
  %v2177 = vmax.f32 %v1337, %v1569
  %v2178 = vmax.f32 %v1342, %v1574
  %v2179 = vmax.f32 %v1345, %v1577
  %v2180 = vmax.f32 %v1350, %v1582
  %v2181 = vmax.f32 %v1353, %v1585
  %v2182 = vmax.f32 %v1358, %v1590
  %v2183 = vmax.f32 %v1361, %v1593
  %v2184 = vmax.f32 %v1366, %v1598
  %v2185 = vmax.f32 %v1369, %v1601
  %v2186 = vmax.f32 %v1374, %v1606
  %v2187 = vmax.f32 %v1377, %v1609
  %v2188 = vmax.f32 %v1382, %v1614
  %v2189 = vmax.f32 %v1385, %v1617
  %v2190 = vmax.f32 %v1390, %v1622
  %v2191 = vmax.f32 %v1393, %v1625
  %v2192 = vmax.f32 %v1398, %v1630
  %v2193 = vmax.f32 %v1401, %v1633
  %v2194 = vmax.f32 %v1406, %v1638
  %v2195 = vmax.f32 %v1409, %v1641
  %v2196 = vmax.f32 %v1414, %v1646
  %v2197 = vmax.f32 %v1417, %v1649
  %v2198 = vmax.f32 %v1422, %v1654
  %v2199 = vmax.f32 %v1425, %v1657
  %v2200 = vmax.f32 %v1430, %v1662
  %v2201 = vmax.f32 %v1433, %v1665
  %v2202 = vmax.f32 %v1438, %v1670
  %v2203 = vmax.f32 %v1441, %v1673
  %v2204 = vmax.f32 %v1446, %v1678
  %v2205 = vmax.f32 %v1449, %v1681
  %v2206 = vmax.f32 %v1686, %v1918
  %v2207 = vmax.f32 %v1689, %v1921
  %v2208 = vmax.f32 %v1694, %v1926
  %v2209 = vmax.f32 %v1697, %v1929
  %v2210 = vmax.f32 %v1702, %v1934
  %v2211 = vmax.f32 %v1705, %v1937
  %v2212 = vmax.f32 %v1710, %v1942
  %v2213 = vmax.f32 %v1713, %v1945
  %v2214 = vmax.f32 %v1718, %v1950
  %v2215 = vmax.f32 %v1721, %v1953
  %v2216 = vmax.f32 %v1726, %v1958
  %v2217 = vmax.f32 %v1729, %v1961
  %v2218 = vmax.f32 %v1734, %v1966
  %v2219 = vmax.f32 %v1737, %v1969
  %v2220 = vmax.f32 %v1742, %v1974
  %v2221 = vmax.f32 %v1745, %v1977
  %v2222 = vmax.f32 %v1750, %v1982
  %v2223 = vmax.f32 %v1753, %v1985
  %v2224 = vmax.f32 %v1758, %v1990
  %v2225 = vmax.f32 %v1761, %v1993
  %v2226 = vmax.f32 %v1766, %v1998
  %v2227 = vmax.f32 %v1769, %v2001
  %v2228 = vmax.f32 %v1774, %v2006
  %v2229 = vmax.f32 %v1777, %v2009
  %v2230 = vmax.f32 %v1782, %v2014
  %v2231 = vmax.f32 %v1785, %v2017
  %v2232 = vmax.f32 %v1790, %v2022
  %v2233 = vmax.f32 %v1793, %v2025
  %v2234 = vmax.f32 %v1798, %v2030
  %v2235 = vmax.f32 %v1801, %v2033
  %v2236 = vmax.f32 %v1806, %v2038
  %v2237 = vmax.f32 %v1809, %v2041
  %v2238 = vmax.f32 %v1814, %v2046
  %v2239 = vmax.f32 %v1817, %v2049
  %v2240 = vmax.f32 %v1822, %v2054
  %v2241 = vmax.f32 %v1825, %v2057
  %v2242 = vmax.f32 %v1830, %v2062
  %v2243 = vmax.f32 %v1833, %v2065
  %v2244 = vmax.f32 %v1838, %v2070
  %v2245 = vmax.f32 %v1841, %v2073
  %v2246 = vmax.f32 %v1846, %v2078
  %v2247 = vmax.f32 %v1849, %v2081
  %v2248 = vmax.f32 %v1854, %v2086
  %v2249 = vmax.f32 %v1857, %v2089
  %v2250 = vmax.f32 %v1862, %v2094
  %v2251 = vmax.f32 %v1865, %v2097
  %v2252 = vmax.f32 %v1870, %v2102
  %v2253 = vmax.f32 %v1873, %v2105
  %v2254 = vmax.f32 %v1878, %v2110
  %v2255 = vmax.f32 %v1881, %v2113
  %v2256 = vmax.f32 %v1886, %v2118
  %v2257 = vmax.f32 %v1889, %v2121
  %v2258 = vmax.f32 %v1894, %v2126
  %v2259 = vmax.f32 %v1897, %v2129
  %v2260 = vmax.f32 %v1902, %v2134
  %v2261 = vmax.f32 %v1905, %v2137
  %v2262 = vmax.f32 %v1910, %v2142
  %v2263 = vmax.f32 %v1913, %v2145
  %v2264 = vmax.f32 %v2148, %v2206
  %v2265 = vmax.f32 %v2149, %v2207
  %v2266 = vmax.f32 %v2150, %v2208
  %v2267 = vmax.f32 %v2151, %v2209
  %v2268 = vmax.f32 %v2152, %v2210
  %v2269 = vmax.f32 %v2153, %v2211
  %v2270 = vmax.f32 %v2154, %v2212
  %v2271 = vmax.f32 %v2155, %v2213
  %v2272 = vmax.f32 %v2156, %v2214
  %v2273 = vmax.f32 %v2157, %v2215
  %v2274 = vmax.f32 %v2158, %v2216
  %v2275 = vmax.f32 %v2159, %v2217
  %v2276 = vmax.f32 %v2160, %v2218
  %v2277 = vmax.f32 %v2161, %v2219
  %v2278 = vmax.f32 %v2162, %v2220
  %v2279 = vmax.f32 %v2163, %v2221
  %v2280 = vmax.f32 %v2164, %v2222
  %v2281 = vmax.f32 %v2165, %v2223
  %v2282 = vmax.f32 %v2166, %v2224
  %v2283 = vmax.f32 %v2167, %v2225
  %v2284 = vmax.f32 %v2168, %v2226
  %v2285 = vmax.f32 %v2169, %v2227
  %v2286 = vmax.f32 %v2170, %v2228
  %v2287 = vmax.f32 %v2171, %v2229
  %v2288 = vmax.f32 %v2172, %v2230
  %v2289 = vmax.f32 %v2173, %v2231
  %v2290 = vmax.f32 %v2174, %v2232
  %v2291 = vmax.f32 %v2175, %v2233
  %v2292 = vmax.f32 %v2176, %v2234
  %v2293 = vmax.f32 %v2177, %v2235
  %v2294 = vmax.f32 %v2178, %v2236
  %v2295 = vmax.f32 %v2179, %v2237
  %v2296 = vmax.f32 %v2180, %v2238
  %v2297 = vmax.f32 %v2181, %v2239
  %v2298 = vmax.f32 %v2182, %v2240
  %v2299 = vmax.f32 %v2183, %v2241
  %v2300 = vmax.f32 %v2184, %v2242
  %v2301 = vmax.f32 %v2185, %v2243
  %v2302 = vmax.f32 %v2186, %v2244
  %v2303 = vmax.f32 %v2187, %v2245
  %v2304 = vmax.f32 %v2188, %v2246
  %v2305 = vmax.f32 %v2189, %v2247
  %v2306 = vmax.f32 %v2190, %v2248
  %v2307 = vmax.f32 %v2191, %v2249
  %v2308 = vmax.f32 %v2192, %v2250
  %v2309 = vmax.f32 %v2193, %v2251
  %v2310 = vmax.f32 %v2194, %v2252
  %v2311 = vmax.f32 %v2195, %v2253
  %v2312 = vmax.f32 %v2196, %v2254
  %v2313 = vmax.f32 %v2197, %v2255
  %v2314 = vmax.f32 %v2198, %v2256
  %v2315 = vmax.f32 %v2199, %v2257
  %v2316 = vmax.f32 %v2200, %v2258
  %v2317 = vmax.f32 %v2201, %v2259
  %v2318 = vmax.f32 %v2202, %v2260
  %v2319 = vmax.f32 %v2203, %v2261
  %v2320 = vmax.f32 %v2204, %v2262
  %v2321 = vmax.f32 %v2205, %v2263
  %v2322 = vld [vmem:[%s2] sm:$0x1]
  %v2324 = vlaneseq
  %v2325 = vshrl.u32 %v2324, 7
  %v2326 = vsub.s32 0, %v2325
  %v2327 = vrot.slane %v2322, %v2326
  %v2329 = vadd.f32 %v2264, %v2327
  %v2330 = vadd.f32 %v2265, %v2327
  %v2331 = vadd.f32 %v2266, %v2327
  %v2332 = vadd.f32 %v2267, %v2327
  %v2333 = vadd.f32 %v2268, %v2327
  %v2334 = vadd.f32 %v2269, %v2327
  %v2335 = vadd.f32 %v2270, %v2327
  %v2336 = vadd.f32 %v2271, %v2327
  %v2337 = vadd.f32 %v2272, %v2327
  %v2338 = vadd.f32 %v2273, %v2327
  %v2339 = vadd.f32 %v2274, %v2327
  %v2340 = vadd.f32 %v2275, %v2327
  %v2341 = vadd.f32 %v2276, %v2327
  %v2342 = vadd.f32 %v2277, %v2327
  %v2343 = vadd.f32 %v2278, %v2327
  %v2344 = vadd.f32 %v2279, %v2327
  %v2345 = vadd.f32 %v2280, %v2327
  %v2346 = vadd.f32 %v2281, %v2327
  %v2347 = vadd.f32 %v2282, %v2327
  %v2348 = vadd.f32 %v2283, %v2327
  %v2349 = vadd.f32 %v2284, %v2327
  %v2350 = vadd.f32 %v2285, %v2327
  %v2351 = vadd.f32 %v2286, %v2327
  %v2352 = vadd.f32 %v2287, %v2327
  %v2353 = vadd.f32 %v2288, %v2327
  %v2354 = vadd.f32 %v2289, %v2327
  %v2355 = vadd.f32 %v2290, %v2327
  %v2356 = vadd.f32 %v2291, %v2327
  %v2357 = vadd.f32 %v2292, %v2327
  %v2358 = vadd.f32 %v2293, %v2327
  %v2359 = vadd.f32 %v2294, %v2327
  %v2360 = vadd.f32 %v2295, %v2327
  %v2361 = vadd.f32 %v2296, %v2327
  %v2362 = vadd.f32 %v2297, %v2327
  %v2363 = vadd.f32 %v2298, %v2327
  %v2364 = vadd.f32 %v2299, %v2327
  %v2365 = vadd.f32 %v2300, %v2327
  %v2366 = vadd.f32 %v2301, %v2327
  %v2367 = vadd.f32 %v2302, %v2327
  %v2368 = vadd.f32 %v2303, %v2327
  %v2369 = vadd.f32 %v2304, %v2327
  %v2370 = vadd.f32 %v2305, %v2327
  %v2371 = vadd.f32 %v2306, %v2327
  %v2372 = vadd.f32 %v2307, %v2327
  %v2373 = vadd.f32 %v2308, %v2327
  %v2374 = vadd.f32 %v2309, %v2327
  %v2375 = vadd.f32 %v2310, %v2327
  %v2376 = vadd.f32 %v2311, %v2327
  %v2377 = vadd.f32 %v2312, %v2327
  %v2378 = vadd.f32 %v2313, %v2327
  %v2379 = vadd.f32 %v2314, %v2327
  %v2380 = vadd.f32 %v2315, %v2327
  %v2381 = vadd.f32 %v2316, %v2327
  %v2382 = vadd.f32 %v2317, %v2327
  %v2383 = vadd.f32 %v2318, %v2327
  %v2384 = vadd.f32 %v2319, %v2327
  %v2385 = vadd.f32 %v2320, %v2327
  %v2386 = vadd.f32 %v2321, %v2327
  %v2387 = vmax.f32 %v2329, 0.0
  %v2388 = vmax.f32 %v2330, 0.0
  %v2389 = vmax.f32 %v2331, 0.0
  %v2390 = vmax.f32 %v2332, 0.0
  %v2391 = vmax.f32 %v2333, 0.0
  %v2392 = vmax.f32 %v2334, 0.0
  %v2393 = vmax.f32 %v2335, 0.0
  %v2394 = vmax.f32 %v2336, 0.0
  %v2395 = vmax.f32 %v2337, 0.0
  %v2396 = vmax.f32 %v2338, 0.0
  %v2397 = vmax.f32 %v2339, 0.0
  %v2398 = vmax.f32 %v2340, 0.0
  %v2399 = vmax.f32 %v2341, 0.0
  %v2400 = vmax.f32 %v2342, 0.0
  %v2401 = vmax.f32 %v2343, 0.0
  %v2402 = vmax.f32 %v2344, 0.0
  %v2403 = vmax.f32 %v2345, 0.0
  %v2404 = vmax.f32 %v2346, 0.0
  %v2405 = vmax.f32 %v2347, 0.0
  %v2406 = vmax.f32 %v2348, 0.0
  %v2407 = vmax.f32 %v2349, 0.0
  %v2408 = vmax.f32 %v2350, 0.0
  %v2409 = vmax.f32 %v2351, 0.0
  %v2410 = vmax.f32 %v2352, 0.0
  %v2411 = vmax.f32 %v2353, 0.0
  %v2412 = vmax.f32 %v2354, 0.0
  %v2413 = vmax.f32 %v2355, 0.0
  %v2414 = vmax.f32 %v2356, 0.0
  %v2415 = vmax.f32 %v2357, 0.0
  %v2416 = vmax.f32 %v2358, 0.0
  %v2417 = vmax.f32 %v2359, 0.0
  %v2418 = vmax.f32 %v2360, 0.0
  %v2419 = vmax.f32 %v2361, 0.0
  %v2420 = vmax.f32 %v2362, 0.0
  %v2421 = vmax.f32 %v2363, 0.0
  %v2422 = vmax.f32 %v2364, 0.0
  %v2423 = vmax.f32 %v2365, 0.0
  %v2424 = vmax.f32 %v2366, 0.0
  %v2425 = vmax.f32 %v2367, 0.0
  %v2426 = vmax.f32 %v2368, 0.0
  %v2427 = vmax.f32 %v2369, 0.0
  %v2428 = vmax.f32 %v2370, 0.0
  %v2429 = vmax.f32 %v2371, 0.0
  %v2430 = vmax.f32 %v2372, 0.0
  %v2431 = vmax.f32 %v2373, 0.0
  %v2432 = vmax.f32 %v2374, 0.0
  %v2433 = vmax.f32 %v2375, 0.0
  %v2434 = vmax.f32 %v2376, 0.0
  %v2435 = vmax.f32 %v2377, 0.0
  %v2436 = vmax.f32 %v2378, 0.0
  %v2437 = vmax.f32 %v2379, 0.0
  %v2438 = vmax.f32 %v2380, 0.0
  %v2439 = vmax.f32 %v2381, 0.0
  %v2440 = vmax.f32 %v2382, 0.0
  %v2441 = vmax.f32 %v2383, 0.0
  %v2442 = vmax.f32 %v2384, 0.0
  %v2443 = vmax.f32 %v2385, 0.0
  %v2444 = vmax.f32 %v2386, 0.0
  %v2445 = vpack.c.bf16 %v2388, %v2387
  %v2446 = vpack.c.bf16 %v2390, %v2389
  %v2447 = vpack.c.bf16 %v2392, %v2391
  %v2448 = vpack.c.bf16 %v2394, %v2393
  %v2449 = vpack.c.bf16 %v2396, %v2395
  %v2450 = vpack.c.bf16 %v2398, %v2397
  %v2451 = vpack.c.bf16 %v2400, %v2399
  %v2452 = vpack.c.bf16 %v2402, %v2401
  %v2453 = vpack.c.bf16 %v2404, %v2403
  %v2454 = vpack.c.bf16 %v2406, %v2405
  %v2455 = vpack.c.bf16 %v2408, %v2407
  %v2456 = vpack.c.bf16 %v2410, %v2409
  %v2457 = vpack.c.bf16 %v2412, %v2411
  %v2458 = vpack.c.bf16 %v2414, %v2413
  %v2459 = vpack.c.bf16 %v2416, %v2415
  %v2460 = vpack.c.bf16 %v2418, %v2417
  %v2461 = vpack.c.bf16 %v2420, %v2419
  %v2462 = vpack.c.bf16 %v2422, %v2421
  %v2463 = vpack.c.bf16 %v2424, %v2423
  %v2464 = vpack.c.bf16 %v2426, %v2425
  %v2465 = vpack.c.bf16 %v2428, %v2427
  %v2466 = vpack.c.bf16 %v2430, %v2429
  %v2467 = vpack.c.bf16 %v2432, %v2431
  %v2468 = vpack.c.bf16 %v2434, %v2433
  %v2469 = vpack.c.bf16 %v2436, %v2435
  %v2470 = vpack.c.bf16 %v2438, %v2437
  %v2471 = vpack.c.bf16 %v2440, %v2439
  %v2472 = vpack.c.bf16 %v2442, %v2441
  %v2473 = vpack.c.bf16 %v2444, %v2443
  %v2503 = vunpack.c.l.b16 %v2445
  %v2504 = vunpack.c.h.b16 %v2445
  %v2505 = vunpack.c.l.b16 %v2446
  %v2506 = vunpack.c.h.b16 %v2446
  %v2507 = vunpack.c.l.b16 %v2447
  %v2508 = vunpack.c.h.b16 %v2447
  %v2509 = vunpack.c.l.b16 %v2448
  %v2510 = vunpack.c.h.b16 %v2448
  %v2511 = vunpack.c.l.b16 %v2449
  %v2512 = vunpack.c.h.b16 %v2449
  %v2513 = vunpack.c.l.b16 %v2450
  %v2514 = vunpack.c.h.b16 %v2450
  %v2515 = vunpack.c.l.b16 %v2451
  %v2516 = vunpack.c.h.b16 %v2451
  %v2517 = vunpack.c.l.b16 %v2452
  %v2518 = vunpack.c.h.b16 %v2452
  %v2519 = vunpack.c.l.b16 %v2453
  %v2520 = vunpack.c.h.b16 %v2453
  %v2521 = vunpack.c.l.b16 %v2454
  %v2522 = vunpack.c.h.b16 %v2454
  %v2523 = vunpack.c.l.b16 %v2455
  %v2524 = vunpack.c.h.b16 %v2455
  %v2525 = vunpack.c.l.b16 %v2456
  %v2526 = vunpack.c.h.b16 %v2456
  %v2527 = vunpack.c.l.b16 %v2457
  %v2528 = vunpack.c.h.b16 %v2457
  %v2529 = vunpack.c.l.b16 %v2458
  %v2530 = vunpack.c.h.b16 %v2458
  %v2531 = vunpack.c.l.b16 %v2459
  %v2532 = vunpack.c.h.b16 %v2459
  %v2533 = vunpack.c.l.b16 %v2460
  %v2534 = vunpack.c.h.b16 %v2460
  %v2535 = vunpack.c.l.b16 %v2461
  %v2536 = vunpack.c.h.b16 %v2461
  %v2537 = vunpack.c.l.b16 %v2462
  %v2538 = vunpack.c.h.b16 %v2462
  %v2539 = vunpack.c.l.b16 %v2463
  %v2540 = vunpack.c.h.b16 %v2463
  %v2541 = vunpack.c.l.b16 %v2464
  %v2542 = vunpack.c.h.b16 %v2464
  %v2543 = vunpack.c.l.b16 %v2465
  %v2544 = vunpack.c.h.b16 %v2465
  %v2545 = vunpack.c.l.b16 %v2466
  %v2546 = vunpack.c.h.b16 %v2466
  %v2547 = vunpack.c.l.b16 %v2467
  %v2548 = vunpack.c.h.b16 %v2467
  %v2549 = vunpack.c.l.b16 %v2468
  %v2550 = vunpack.c.h.b16 %v2468
  %v2551 = vunpack.c.l.b16 %v2469
  %v2552 = vunpack.c.h.b16 %v2469
  %v2553 = vunpack.c.l.b16 %v2470
  %v2554 = vunpack.c.h.b16 %v2470
  %v2555 = vunpack.c.l.b16 %v2471
  %v2556 = vunpack.c.h.b16 %v2471
  %v2557 = vunpack.c.l.b16 %v2472
  %v2558 = vunpack.c.h.b16 %v2472
  %v2559 = vunpack.c.l.b16 %v2473
  %v2560 = vunpack.c.h.b16 %v2473
  %v2561 = vpack.c.b16 %v2503, %v2503
  %v2562 = vpack.c.b16 %v2504, %v2504
  %v2563 = vpack.c.b16 %v2505, %v2505
  %v2564 = vpack.c.b16 %v2506, %v2506
  %v2565 = vpack.c.b16 %v2507, %v2507
  %v2566 = vpack.c.b16 %v2508, %v2508
  %v2567 = vpack.c.b16 %v2509, %v2509
  %v2568 = vpack.c.b16 %v2510, %v2510
  %v2569 = vpack.c.b16 %v2511, %v2511
  %v2570 = vpack.c.b16 %v2512, %v2512
  %v2571 = vpack.c.b16 %v2513, %v2513
  %v2572 = vpack.c.b16 %v2514, %v2514
  %v2573 = vpack.c.b16 %v2515, %v2515
  %v2574 = vpack.c.b16 %v2516, %v2516
  %v2575 = vpack.c.b16 %v2517, %v2517
  %v2576 = vpack.c.b16 %v2518, %v2518
  %v2577 = vpack.c.b16 %v2519, %v2519
  %v2578 = vpack.c.b16 %v2520, %v2520
  %v2579 = vpack.c.b16 %v2521, %v2521
  %v2580 = vpack.c.b16 %v2522, %v2522
  %v2581 = vpack.c.b16 %v2523, %v2523
  %v2582 = vpack.c.b16 %v2524, %v2524
  %v2583 = vpack.c.b16 %v2525, %v2525
  %v2584 = vpack.c.b16 %v2526, %v2526
  %v2585 = vpack.c.b16 %v2527, %v2527
  %v2586 = vpack.c.b16 %v2528, %v2528
  %v2587 = vpack.c.b16 %v2529, %v2529
  %v2588 = vpack.c.b16 %v2530, %v2530
  %v2589 = vpack.c.b16 %v2531, %v2531
  %v2590 = vpack.c.b16 %v2532, %v2532
  %v2591 = vpack.c.b16 %v2533, %v2533
  %v2592 = vpack.c.b16 %v2534, %v2534
  %v2593 = vpack.c.b16 %v2535, %v2535
  %v2594 = vpack.c.b16 %v2536, %v2536
  %v2595 = vpack.c.b16 %v2537, %v2537
  %v2596 = vpack.c.b16 %v2538, %v2538
  %v2597 = vpack.c.b16 %v2539, %v2539
  %v2598 = vpack.c.b16 %v2540, %v2540
  %v2599 = vpack.c.b16 %v2541, %v2541
  %v2600 = vpack.c.b16 %v2542, %v2542
  %v2601 = vpack.c.b16 %v2543, %v2543
  %v2602 = vpack.c.b16 %v2544, %v2544
  %v2603 = vpack.c.b16 %v2545, %v2545
  %v2604 = vpack.c.b16 %v2546, %v2546
  %v2605 = vpack.c.b16 %v2547, %v2547
  %v2606 = vpack.c.b16 %v2548, %v2548
  %v2607 = vpack.c.b16 %v2549, %v2549
  %v2608 = vpack.c.b16 %v2550, %v2550
  %v2609 = vpack.c.b16 %v2551, %v2551
  %v2610 = vpack.c.b16 %v2552, %v2552
  %v2611 = vpack.c.b16 %v2553, %v2553
  %v2612 = vpack.c.b16 %v2554, %v2554
  %v2613 = vpack.c.b16 %v2555, %v2555
  %v2614 = vpack.c.b16 %v2556, %v2556
  %v2615 = vpack.c.b16 %v2557, %v2557
  %v2616 = vpack.c.b16 %v2558, %v2558
  %v2617 = vpack.c.b16 %v2559, %v2559
  %v2618 = vpack.c.b16 %v2560, %v2560
  %2677 = vst [vmem:[%s3] sm:$0xf] %v2561
  %2678 = vst [vmem:[%s3 + $0x4] sm:$0xf] %v2562
  %2679 = vst [vmem:[%s3 + $0x8] sm:$0xf] %v2563
  %2680 = vst [vmem:[%s3 + $0xc] sm:$0xf] %v2564
  %2681 = vst [vmem:[%s3 + $0x10] sm:$0xf] %v2565
  %2682 = vst [vmem:[%s3 + $0x14] sm:$0xf] %v2566
  %2683 = vst [vmem:[%s3 + $0x18] sm:$0xf] %v2567
  %2684 = vst [vmem:[%s3 + $0x1c] sm:$0xf] %v2568
  %2685 = vst [vmem:[%s3 + $0x20] sm:$0xf] %v2569
  %2686 = vst [vmem:[%s3 + $0x24] sm:$0xf] %v2570
  %2687 = vst [vmem:[%s3 + $0x28] sm:$0xf] %v2571
  %2688 = vst [vmem:[%s3 + $0x2c] sm:$0xf] %v2572
  %2689 = vst [vmem:[%s3 + $0x30] sm:$0xf] %v2573
  %2690 = vst [vmem:[%s3 + $0x34] sm:$0xf] %v2574
  %2691 = vst [vmem:[%s3 + $0x38] sm:$0xf] %v2575
  %2692 = vst [vmem:[%s3 + $0x3c] sm:$0xf] %v2576
  %2693 = vst [vmem:[%s3 + $0x40] sm:$0xf] %v2577
  %2694 = vst [vmem:[%s3 + $0x44] sm:$0xf] %v2578
  %2695 = vst [vmem:[%s3 + $0x48] sm:$0xf] %v2579
  %2696 = vst [vmem:[%s3 + $0x4c] sm:$0xf] %v2580
  %2697 = vst [vmem:[%s3 + $0x50] sm:$0xf] %v2581
  %2698 = vst [vmem:[%s3 + $0x54] sm:$0xf] %v2582
  %2699 = vst [vmem:[%s3 + $0x58] sm:$0xf] %v2583
  %2700 = vst [vmem:[%s3 + $0x5c] sm:$0xf] %v2584
  %2701 = vst [vmem:[%s3 + $0x60] sm:$0xf] %v2585
  %2702 = vst [vmem:[%s3 + $0x64] sm:$0xf] %v2586
  %2703 = vst [vmem:[%s3 + $0x68] sm:$0xf] %v2587
  %2704 = vst [vmem:[%s3 + $0x6c] sm:$0xf] %v2588
  %2705 = vst [vmem:[%s3 + $0x70] sm:$0xf] %v2589
  %2706 = vst [vmem:[%s3 + $0x74] sm:$0xf] %v2590
  %2707 = vst [vmem:[%s3 + $0x78] sm:$0xf] %v2591
  %2708 = vst [vmem:[%s3 + $0x7c] sm:$0xf] %v2592
  %2709 = vst [vmem:[%s3 + $0x80] sm:$0xf] %v2593
  %2710 = vst [vmem:[%s3 + $0x84] sm:$0xf] %v2594
  %2711 = vst [vmem:[%s3 + $0x88] sm:$0xf] %v2595
  %2712 = vst [vmem:[%s3 + $0x8c] sm:$0xf] %v2596
  %2713 = vst [vmem:[%s3 + $0x90] sm:$0xf] %v2597
  %2714 = vst [vmem:[%s3 + $0x94] sm:$0xf] %v2598
  %2715 = vst [vmem:[%s3 + $0x98] sm:$0xf] %v2599
  %2716 = vst [vmem:[%s3 + $0x9c] sm:$0xf] %v2600
  %2717 = vst [vmem:[%s3 + $0xa0] sm:$0xf] %v2601
  %2718 = vst [vmem:[%s3 + $0xa4] sm:$0xf] %v2602
  %2719 = vst [vmem:[%s3 + $0xa8] sm:$0xf] %v2603
  %2720 = vst [vmem:[%s3 + $0xac] sm:$0xf] %v2604
  %2721 = vst [vmem:[%s3 + $0xb0] sm:$0xf] %v2605
  %2722 = vst [vmem:[%s3 + $0xb4] sm:$0xf] %v2606
  %2723 = vst [vmem:[%s3 + $0xb8] sm:$0xf] %v2607
  %2724 = vst [vmem:[%s3 + $0xbc] sm:$0xf] %v2608
  %2725 = vst [vmem:[%s3 + $0xc0] sm:$0xf] %v2609
  %2726 = vst [vmem:[%s3 + $0xc4] sm:$0xf] %v2610
  %2727 = vst [vmem:[%s3 + $0xc8] sm:$0xf] %v2611
  %2728 = vst [vmem:[%s3 + $0xcc] sm:$0xf] %v2612
  %2729 = vst [vmem:[%s3 + $0xd0] sm:$0xf] %v2613
  %2730 = vst [vmem:[%s3 + $0xd4] sm:$0xf] %v2614
  %2731 = vst [vmem:[%s3 + $0xd8] sm:$0xf] %v2615
  %2732 = vst [vmem:[%s3 + $0xdc] sm:$0xf] %v2616
  %2733 = vst [vmem:[%s3 + $0xe0] sm:$0xf] %v2617
  %2734 = vst [vmem:[%s3 + $0xe4] sm:$0xf] %v2618
  // Predicated region
  $region14: #{subnet_forward.3} parent=0 // pred_check
    _
  $region15: #{subnet_forward.3} parent=0 // pred_check_branch
    %2736 = sbr.rel (0) target = $region17
  $region16: #{subnet_forward.3} parent=0 // pred_region
    _
  $region17: #{subnet_forward.3} parent=0 // pred_fallthru
    _
  // Predicated region
  $region18: #{subnet_forward.3} parent=0 // pred_check
    _
  $region19: #{subnet_forward.3} parent=0 // pred_check_branch
    %2738 = sbr.rel (0) target = $region21
  $region20: #{subnet_forward.3} parent=0 // pred_region
    _
  $region21: #{subnet_forward.3} parent=0 // pred_fallthru
    _

// kernel: subnet_forward.4
$region0: #{subnet_forward.4}
  #allocation0 [shape = 'u32[]', space=smem, size = 0x4, offset = 0x4, fixed_abs, tag = 'smem constant byte address 0x4 - core index']
  #allocation1 [shape = 'u32[144,128]{1,0:T(1,128)}', space=vmem, size = 0x12000, scoped, tag = 'internal scratch']
  %s0 = inlined_call_operand.vmem [shape: bf16[448,128], index: 0, kind: input, shape index: {}]
  %s1 = inlined_call_operand.vmem [shape: bf16[128,128], index: 1, kind: input, shape index: {}]
  %s2 = inlined_call_operand.vmem [shape: f32[1,128], index: 2, kind: input, shape index: {}]
  %s3 = inlined_call_operand.vmem [shape: bf16[112,128], index: 3, kind: output, shape index: {}]
  %s4 = sld [smem:[#allocation0]]
  $region22: #{subnet_forward.4} parent=0
    _
  %s6 = ssub.s32 1, %s4
  %s7 = scalar_select 0, %s6, %s4
  // Predicated region
  $region2: #{subnet_forward.4} parent=0 // pred_check
    _
  $region3: #{subnet_forward.4} parent=0 // pred_check_branch
    %9 = sbr.rel (0) target = $region5
  $region4: #{subnet_forward.4} parent=0 // pred_region
    _
  $region5: #{subnet_forward.4} parent=0 // pred_fallthru
    _
  // Predicated region
  $region6: #{subnet_forward.4} parent=0 // pred_check
    _
  $region7: #{subnet_forward.4} parent=0 // pred_check_branch
    %11 = sbr.rel (0) target = $region9
  $region8: #{subnet_forward.4} parent=0 // pred_region
    _
  $region9: #{subnet_forward.4} parent=0 // pred_fallthru
    _
  // Predicated region
  $region10: #{subnet_forward.4} parent=0 // pred_check
    _
  $region11: #{subnet_forward.4} parent=0 // pred_check_branch
    %13 = sbr.rel (0) target = $region13
  $region12: #{subnet_forward.4} parent=0 // pred_region
    _
  $region13: #{subnet_forward.4} parent=0 // pred_fallthru
    _
  %v15 = vld [vmem:[%s0] sm:$0xf]
  %v16 = vld [vmem:[%s0 + $0x4] sm:$0xf]
  %v17 = vld [vmem:[%s0 + $0x8] sm:$0xf]
  %v18 = vld [vmem:[%s0 + $0xc] sm:$0xf]
  %v19 = vld [vmem:[%s0 + $0x10] sm:$0xf]
  %v20 = vld [vmem:[%s0 + $0x14] sm:$0xf]
  %v21 = vld [vmem:[%s0 + $0x18] sm:$0xf]
  %v22 = vld [vmem:[%s0 + $0x1c] sm:$0xf]
  %v23 = vld [vmem:[%s0 + $0x20] sm:$0xf]
  %v24 = vld [vmem:[%s0 + $0x24] sm:$0xf]
  %v25 = vld [vmem:[%s0 + $0x28] sm:$0xf]
  %v26 = vld [vmem:[%s0 + $0x2c] sm:$0xf]
  %v27 = vld [vmem:[%s0 + $0x30] sm:$0xf]
  %v28 = vld [vmem:[%s0 + $0x34] sm:$0xf]
  %v29 = vld [vmem:[%s0 + $0x38] sm:$0xf]
  %v30 = vld [vmem:[%s0 + $0x3c] sm:$0xf]
  %v31 = vld [vmem:[%s0 + $0x40] sm:$0xf]
  %v32 = vld [vmem:[%s0 + $0x44] sm:$0xf]
  %v33 = vld [vmem:[%s0 + $0x48] sm:$0xf]
  %v34 = vld [vmem:[%s0 + $0x4c] sm:$0xf]
  %v35 = vld [vmem:[%s0 + $0x50] sm:$0xf]
  %v36 = vld [vmem:[%s0 + $0x54] sm:$0xf]
  %v37 = vld [vmem:[%s0 + $0x58] sm:$0xf]
  %v38 = vld [vmem:[%s0 + $0x5c] sm:$0xf]
  %v39 = vld [vmem:[%s0 + $0x60] sm:$0xf]
  %v40 = vld [vmem:[%s0 + $0x64] sm:$0xf]
  %v41 = vld [vmem:[%s0 + $0x68] sm:$0xf]
  %v42 = vld [vmem:[%s0 + $0x6c] sm:$0xf]
  %v43 = vld [vmem:[%s0 + $0x70] sm:$0xf]
  %v44 = vld [vmem:[%s0 + $0x74] sm:$0xf]
  %v45 = vld [vmem:[%s0 + $0x78] sm:$0xf]
  %v46 = vld [vmem:[%s0 + $0x7c] sm:$0xf]
  %v47 = vld [vmem:[%s0 + $0x80] sm:$0xf]
  %v48 = vld [vmem:[%s0 + $0x84] sm:$0xf]
  %v49 = vld [vmem:[%s0 + $0x88] sm:$0xf]
  %v50 = vld [vmem:[%s0 + $0x8c] sm:$0xf]
  %v51 = vld [vmem:[%s0 + $0x90] sm:$0xf]
  %v52 = vld [vmem:[%s0 + $0x94] sm:$0xf]
  %v53 = vld [vmem:[%s0 + $0x98] sm:$0xf]
  %v54 = vld [vmem:[%s0 + $0x9c] sm:$0xf]
  %v55 = vld [vmem:[%s0 + $0xa0] sm:$0xf]
  %v56 = vld [vmem:[%s0 + $0xa4] sm:$0xf]
  %v57 = vld [vmem:[%s0 + $0xa8] sm:$0xf]
  %v58 = vld [vmem:[%s0 + $0xac] sm:$0xf]
  %v59 = vld [vmem:[%s0 + $0xb0] sm:$0xf]
  %v60 = vld [vmem:[%s0 + $0xb4] sm:$0xf]
  %v61 = vld [vmem:[%s0 + $0xb8] sm:$0xf]
  %v62 = vld [vmem:[%s0 + $0xbc] sm:$0xf]
  %v63 = vld [vmem:[%s0 + $0xc0] sm:$0xf]
  %v64 = vld [vmem:[%s0 + $0xc4] sm:$0xf]
  %v65 = vld [vmem:[%s0 + $0xc8] sm:$0xf]
  %v66 = vld [vmem:[%s0 + $0xcc] sm:$0xf]
  %v67 = vld [vmem:[%s0 + $0xd0] sm:$0xf]
  %v68 = vld [vmem:[%s0 + $0xd4] sm:$0xf]
  %v69 = vld [vmem:[%s0 + $0xd8] sm:$0xf]
  %v70 = vld [vmem:[%s0 + $0xdc] sm:$0xf]
  %v71 = vld [vmem:[%s1] sm:$0xf]
  %v72 = vld [vmem:[%s1 + $0x4] sm:$0xf]
  %v73 = vld [vmem:[%s1 + $0x8] sm:$0xf]
  %v74 = vld [vmem:[%s1 + $0xc] sm:$0xf]
  %v75 = vld [vmem:[%s1 + $0x10] sm:$0xf]
  %v76 = vld [vmem:[%s1 + $0x14] sm:$0xf]
  %v77 = vld [vmem:[%s1 + $0x18] sm:$0xf]
  %v78 = vld [vmem:[%s1 + $0x1c] sm:$0xf]
  %v79 = vld [vmem:[%s1 + $0x20] sm:$0xf]
  %v80 = vld [vmem:[%s1 + $0x24] sm:$0xf]
  %v81 = vld [vmem:[%s1 + $0x28] sm:$0xf]
  %v82 = vld [vmem:[%s1 + $0x2c] sm:$0xf]
  %v83 = vld [vmem:[%s1 + $0x30] sm:$0xf]
  %v84 = vld [vmem:[%s1 + $0x34] sm:$0xf]
  %v85 = vld [vmem:[%s1 + $0x38] sm:$0xf]
  %v86 = vld [vmem:[%s1 + $0x3c] sm:$0xf]
  %v143 = vunpack.c.l.b16 %v15
  %v144 = vunpack.c.l.b16 %v16
  %v145 = vunpack.c.l.b16 %v17
  %v146 = vunpack.c.l.b16 %v18
  %v147 = vunpack.c.l.b16 %v19
  %v148 = vunpack.c.l.b16 %v20
  %v149 = vunpack.c.l.b16 %v21
  %v150 = vunpack.c.l.b16 %v22
  %v151 = vunpack.c.l.b16 %v23
  %v152 = vunpack.c.l.b16 %v24
  %v153 = vunpack.c.l.b16 %v25
  %v154 = vunpack.c.l.b16 %v26
  %v155 = vunpack.c.l.b16 %v27
  %v156 = vunpack.c.l.b16 %v28
  %v157 = vunpack.c.l.b16 %v29
  %v158 = vunpack.c.l.b16 %v30
  %v159 = vunpack.c.l.b16 %v31
  %v160 = vunpack.c.l.b16 %v32
  %v161 = vunpack.c.l.b16 %v33
  %v162 = vunpack.c.l.b16 %v34
  %v163 = vunpack.c.l.b16 %v35
  %v164 = vunpack.c.l.b16 %v36
  %v165 = vunpack.c.l.b16 %v37
  %v166 = vunpack.c.l.b16 %v38
  %v167 = vunpack.c.l.b16 %v39
  %v168 = vunpack.c.l.b16 %v40
  %v169 = vunpack.c.l.b16 %v41
  %v170 = vunpack.c.l.b16 %v42
  %v171 = vunpack.c.l.b16 %v43
  %v172 = vunpack.c.l.b16 %v44
  %v173 = vunpack.c.l.b16 %v45
  %v174 = vunpack.c.l.b16 %v46
  %v175 = vunpack.c.l.b16 %v47
  %v176 = vunpack.c.l.b16 %v48
  %v177 = vunpack.c.l.b16 %v49
  %v178 = vunpack.c.l.b16 %v50
  %v179 = vunpack.c.l.b16 %v51
  %v180 = vunpack.c.l.b16 %v52
  %v181 = vunpack.c.l.b16 %v53
  %v182 = vunpack.c.l.b16 %v54
  %v183 = vunpack.c.l.b16 %v55
  %v184 = vunpack.c.l.b16 %v56
  %v185 = vunpack.c.l.b16 %v57
  %v186 = vunpack.c.l.b16 %v58
  %v187 = vunpack.c.l.b16 %v59
  %v188 = vunpack.c.l.b16 %v60
  %v189 = vunpack.c.l.b16 %v61
  %v190 = vunpack.c.l.b16 %v62
  %v191 = vunpack.c.l.b16 %v63
  %v192 = vunpack.c.l.b16 %v64
  %v193 = vunpack.c.l.b16 %v65
  %v194 = vunpack.c.l.b16 %v66
  %v195 = vunpack.c.l.b16 %v67
  %v196 = vunpack.c.l.b16 %v68
  %v197 = vunpack.c.l.b16 %v69
  %v198 = vunpack.c.l.b16 %v70
  %v199 = vpack.c.b16 %v144, %v143
  %v200 = vpack.c.b16 %v146, %v145
  %v201 = vpack.c.b16 %v148, %v147
  %v202 = vpack.c.b16 %v150, %v149
  %v203 = vpack.c.b16 %v152, %v151
  %v204 = vpack.c.b16 %v154, %v153
  %v205 = vpack.c.b16 %v156, %v155
  %v206 = vpack.c.b16 %v158, %v157
  %v207 = vpack.c.b16 %v160, %v159
  %v208 = vpack.c.b16 %v162, %v161
  %v209 = vpack.c.b16 %v164, %v163
  %v210 = vpack.c.b16 %v166, %v165
  %v211 = vpack.c.b16 %v168, %v167
  %v212 = vpack.c.b16 %v170, %v169
  %v213 = vpack.c.b16 %v172, %v171
  %v214 = vpack.c.b16 %v174, %v173
  %v215 = vpack.c.b16 %v176, %v175
  %v216 = vpack.c.b16 %v178, %v177
  %v217 = vpack.c.b16 %v180, %v179
  %v218 = vpack.c.b16 %v182, %v181
  %v219 = vpack.c.b16 %v184, %v183
  %v220 = vpack.c.b16 %v186, %v185
  %v221 = vpack.c.b16 %v188, %v187
  %v222 = vpack.c.b16 %v190, %v189
  %v223 = vpack.c.b16 %v192, %v191
  %v224 = vpack.c.b16 %v194, %v193
  %v225 = vpack.c.b16 %v196, %v195
  %v226 = vpack.c.b16 %v198, %v197
  %v271 = vunpack.c.l.b16 %v71
  %v272 = vunpack.c.l.b16 %v72
  %v273 = vunpack.c.l.b16 %v73
  %v274 = vunpack.c.l.b16 %v74
  %v275 = vunpack.c.l.b16 %v75
  %v276 = vunpack.c.l.b16 %v76
  %v277 = vunpack.c.l.b16 %v77
  %v278 = vunpack.c.l.b16 %v78
  %v279 = vunpack.c.l.b16 %v79
  %v280 = vunpack.c.l.b16 %v80
  %v281 = vunpack.c.l.b16 %v81
  %v282 = vunpack.c.l.b16 %v82
  %v283 = vunpack.c.l.b16 %v83
  %v284 = vunpack.c.l.b16 %v84
  %v285 = vunpack.c.l.b16 %v85
  %v286 = vunpack.c.l.b16 %v86
  %v287 = vpack.c.b16 %v272, %v271
  %v288 = vpack.c.b16 %v274, %v273
  %v289 = vpack.c.b16 %v276, %v275
  %v290 = vpack.c.b16 %v278, %v277
  %v291 = vpack.c.b16 %v280, %v279
  %v292 = vpack.c.b16 %v282, %v281
  %v293 = vpack.c.b16 %v284, %v283
  %v294 = vpack.c.b16 %v286, %v285
  %303 = vmatprep.subr.bf16.mxu0 0
  %304 = vmatpush1.bf16.msra.mxu0 %v287
  %305 = vmatprep.subr.bf16.mxu0 0
  %306 = vmatpush1.bf16.msra.mxu0 %v288
  %307 = vmatprep.subr.bf16.mxu0 0
  %308 = vmatpush1.bf16.msra.mxu0 %v289
  %309 = vmatprep.subr.bf16.mxu0 0
  %310 = vmatpush1.bf16.msra.mxu0 %v290
  %311 = vmatprep.subr.bf16.mxu0 0
  %312 = vmatpush1.bf16.msra.mxu0 %v291
  %313 = vmatprep.subr.bf16.mxu0 0
  %314 = vmatpush1.bf16.msra.mxu0 %v292
  %315 = vmatprep.subr.bf16.mxu0 0
  %316 = vmatpush1.bf16.msra.mxu0 %v293
  %317 = vmatprep.subr.bf16.mxu0 0
  %318 = vmatpush1.bf16.msra.mxu0 %v294
  %319 = vmatprep.subr.bf16.mxu0 0
  %320 = vmatpush1.bf16.msra.mxu0 0
  %321 = vmatprep.subr.bf16.mxu0 0
  %322 = vmatpush1.bf16.msra.mxu0 0
  %323 = vmatprep.subr.bf16.mxu0 0
  %324 = vmatpush1.bf16.msra.mxu0 0
  %325 = vmatprep.subr.bf16.mxu0 0
  %326 = vmatpush1.bf16.msra.mxu0 0
  %327 = vmatprep.subr.bf16.mxu0 0
  %328 = vmatpush1.bf16.msra.mxu0 0
  %329 = vmatprep.subr.bf16.mxu0 0
  %330 = vmatpush1.bf16.msra.mxu0 0
  %331 = vmatprep.subr.bf16.mxu0 0
  %332 = vmatpush1.bf16.msra.mxu0 0
  %333 = vmatprep.subr.bf16.mxu0 0
  %334 = vmatpush1.bf16.msra.mxu0 0
  %335 = vmatprep.mubr.bf16.mxu0 0
  %336 = vmatmul.mubr.bf16.gmra.mrb[0].mxu0 %v199
  %v337 = vpop.f32.mrb[0].mxu0
  %v338 = vadd.f32 0.0, %v337
  %v339 = vpop.f32.mrb[0].mxu0
  %v340 = vpop.f32.mrb[0].mxu0
  %v341 = vadd.f32 0.0, %v340
  %v342 = vpop.f32.mrb[0].mxu0
  %343 = vmatprep.mubr.bf16.mxu0 0
  %344 = vmatmul.mubr.bf16.gmra.mrb[0].mxu0 %v200
  %v345 = vpop.f32.mrb[0].mxu0
  %v346 = vadd.f32 0.0, %v345
  %v347 = vpop.f32.mrb[0].mxu0
  %v348 = vpop.f32.mrb[0].mxu0
  %v349 = vadd.f32 0.0, %v348
  %v350 = vpop.f32.mrb[0].mxu0
  %351 = vmatprep.mubr.bf16.mxu0 0
  %352 = vmatmul.mubr.bf16.gmra.mrb[0].mxu0 %v201
  %v353 = vpop.f32.mrb[0].mxu0
  %v354 = vadd.f32 0.0, %v353
  %v355 = vpop.f32.mrb[0].mxu0
  %v356 = vpop.f32.mrb[0].mxu0
  %v357 = vadd.f32 0.0, %v356
  %v358 = vpop.f32.mrb[0].mxu0
  %359 = vmatprep.mubr.bf16.mxu0 0
  %360 = vmatmul.mubr.bf16.gmra.mrb[0].mxu0 %v202
  %v361 = vpop.f32.mrb[0].mxu0
  %v362 = vadd.f32 0.0, %v361
  %v363 = vpop.f32.mrb[0].mxu0
  %v364 = vpop.f32.mrb[0].mxu0
  %v365 = vadd.f32 0.0, %v364
  %v366 = vpop.f32.mrb[0].mxu0
  %367 = vmatprep.mubr.bf16.mxu0 0
  %368 = vmatmul.mubr.bf16.gmra.mrb[0].mxu0 %v203
  %v369 = vpop.f32.mrb[0].mxu0
  %v370 = vadd.f32 0.0, %v369
  %v371 = vpop.f32.mrb[0].mxu0
  %v372 = vpop.f32.mrb[0].mxu0
  %v373 = vadd.f32 0.0, %v372
  %v374 = vpop.f32.mrb[0].mxu0
  %375 = vmatprep.mubr.bf16.mxu0 0
  %376 = vmatmul.mubr.bf16.gmra.mrb[0].mxu0 %v204
  %v377 = vpop.f32.mrb[0].mxu0
  %v378 = vadd.f32 0.0, %v377
  %v379 = vpop.f32.mrb[0].mxu0
  %v380 = vpop.f32.mrb[0].mxu0
  %v381 = vadd.f32 0.0, %v380
  %v382 = vpop.f32.mrb[0].mxu0
  %383 = vmatprep.mubr.bf16.mxu0 0
  %384 = vmatmul.mubr.bf16.gmra.mrb[0].mxu0 %v205
  %v385 = vpop.f32.mrb[0].mxu0
  %v386 = vadd.f32 0.0, %v385
  %v387 = vpop.f32.mrb[0].mxu0
  %v388 = vpop.f32.mrb[0].mxu0
  %v389 = vadd.f32 0.0, %v388
  %v390 = vpop.f32.mrb[0].mxu0
  %391 = vmatprep.mubr.bf16.mxu0 0
  %392 = vmatmul.mubr.bf16.gmra.mrb[0].mxu0 %v206
  %v393 = vpop.f32.mrb[0].mxu0
  %v394 = vadd.f32 0.0, %v393
  %v395 = vpop.f32.mrb[0].mxu0
  %v396 = vpop.f32.mrb[0].mxu0
  %v397 = vadd.f32 0.0, %v396
  %v398 = vpop.f32.mrb[0].mxu0
  %399 = vmatprep.mubr.bf16.mxu0 0
  %400 = vmatmul.mubr.bf16.gmra.mrb[0].mxu0 %v207
  %v401 = vpop.f32.mrb[0].mxu0
  %v402 = vadd.f32 0.0, %v401
  %v403 = vpop.f32.mrb[0].mxu0
  %v404 = vpop.f32.mrb[0].mxu0
  %v405 = vadd.f32 0.0, %v404
  %v406 = vpop.f32.mrb[0].mxu0
  %407 = vmatprep.mubr.bf16.mxu0 0
  %408 = vmatmul.mubr.bf16.gmra.mrb[0].mxu0 %v208
  %v409 = vpop.f32.mrb[0].mxu0
  %v410 = vadd.f32 0.0, %v409
  %v411 = vpop.f32.mrb[0].mxu0
  %v412 = vpop.f32.mrb[0].mxu0
  %v413 = vadd.f32 0.0, %v412
  %v414 = vpop.f32.mrb[0].mxu0
  %415 = vmatprep.mubr.bf16.mxu0 0
  %416 = vmatmul.mubr.bf16.gmra.mrb[0].mxu0 %v209
  %v417 = vpop.f32.mrb[0].mxu0
  %v418 = vadd.f32 0.0, %v417
  %v419 = vpop.f32.mrb[0].mxu0
  %v420 = vpop.f32.mrb[0].mxu0
  %v421 = vadd.f32 0.0, %v420
  %v422 = vpop.f32.mrb[0].mxu0
  %423 = vmatprep.mubr.bf16.mxu0 0
  %424 = vmatmul.mubr.bf16.gmra.mrb[0].mxu0 %v210
  %v425 = vpop.f32.mrb[0].mxu0
  %v426 = vadd.f32 0.0, %v425
  %v427 = vpop.f32.mrb[0].mxu0
  %v428 = vpop.f32.mrb[0].mxu0
  %v429 = vadd.f32 0.0, %v428
  %v430 = vpop.f32.mrb[0].mxu0
  %431 = vmatprep.mubr.bf16.mxu0 0
  %432 = vmatmul.mubr.bf16.gmra.mrb[0].mxu0 %v211
  %v433 = vpop.f32.mrb[0].mxu0
  %v434 = vadd.f32 0.0, %v433
  %v435 = vpop.f32.mrb[0].mxu0
  %v436 = vpop.f32.mrb[0].mxu0
  %v437 = vadd.f32 0.0, %v436
  %v438 = vpop.f32.mrb[0].mxu0
  %439 = vmatprep.mubr.bf16.mxu0 0
  %440 = vmatmul.mubr.bf16.gmra.mrb[0].mxu0 %v212
  %v441 = vpop.f32.mrb[0].mxu0
  %v442 = vadd.f32 0.0, %v441
  %v443 = vpop.f32.mrb[0].mxu0
  %v444 = vpop.f32.mrb[0].mxu0
  %v445 = vadd.f32 0.0, %v444
  %v446 = vpop.f32.mrb[0].mxu0
  %447 = vmatprep.mubr.bf16.mxu0 0
  %448 = vmatmul.mubr.bf16.gmra.mrb[0].mxu0 %v213
  %v449 = vpop.f32.mrb[0].mxu0
  %v450 = vadd.f32 0.0, %v449
  %v451 = vpop.f32.mrb[0].mxu0
  %v452 = vpop.f32.mrb[0].mxu0
  %v453 = vadd.f32 0.0, %v452
  %v454 = vpop.f32.mrb[0].mxu0
  %455 = vmatprep.mubr.bf16.mxu0 0
  %456 = vmatmul.mubr.bf16.gmra.mrb[0].mxu0 %v214
  %v457 = vpop.f32.mrb[0].mxu0
  %v458 = vadd.f32 0.0, %v457
  %v459 = vpop.f32.mrb[0].mxu0
  %v460 = vpop.f32.mrb[0].mxu0
  %v461 = vadd.f32 0.0, %v460
  %v462 = vpop.f32.mrb[0].mxu0
  %463 = vmatprep.mubr.bf16.mxu0 0
  %464 = vmatmul.mubr.bf16.gmra.mrb[0].mxu0 %v215
  %v465 = vpop.f32.mrb[0].mxu0
  %v466 = vadd.f32 0.0, %v465
  %v467 = vpop.f32.mrb[0].mxu0
  %v468 = vpop.f32.mrb[0].mxu0
  %v469 = vadd.f32 0.0, %v468
  %v470 = vpop.f32.mrb[0].mxu0
  %471 = vmatprep.mubr.bf16.mxu0 0
  %472 = vmatmul.mubr.bf16.gmra.mrb[0].mxu0 %v216
  %v473 = vpop.f32.mrb[0].mxu0
  %v474 = vadd.f32 0.0, %v473
  %v475 = vpop.f32.mrb[0].mxu0
  %v476 = vpop.f32.mrb[0].mxu0
  %v477 = vadd.f32 0.0, %v476
  %v478 = vpop.f32.mrb[0].mxu0
  %479 = vmatprep.mubr.bf16.mxu0 0
  %480 = vmatmul.mubr.bf16.gmra.mrb[0].mxu0 %v217
  %v481 = vpop.f32.mrb[0].mxu0
  %v482 = vadd.f32 0.0, %v481
  %v483 = vpop.f32.mrb[0].mxu0
  %v484 = vpop.f32.mrb[0].mxu0
  %v485 = vadd.f32 0.0, %v484
  %v486 = vpop.f32.mrb[0].mxu0
  %487 = vmatprep.mubr.bf16.mxu0 0
  %488 = vmatmul.mubr.bf16.gmra.mrb[0].mxu0 %v218
  %v489 = vpop.f32.mrb[0].mxu0
  %v490 = vadd.f32 0.0, %v489
  %v491 = vpop.f32.mrb[0].mxu0
  %v492 = vpop.f32.mrb[0].mxu0
  %v493 = vadd.f32 0.0, %v492
  %v494 = vpop.f32.mrb[0].mxu0
  %495 = vmatprep.mubr.bf16.mxu0 0
  %496 = vmatmul.mubr.bf16.gmra.mrb[0].mxu0 %v219
  %v497 = vpop.f32.mrb[0].mxu0
  %v498 = vadd.f32 0.0, %v497
  %v499 = vpop.f32.mrb[0].mxu0
  %v500 = vpop.f32.mrb[0].mxu0
  %v501 = vadd.f32 0.0, %v500
  %v502 = vpop.f32.mrb[0].mxu0
  %503 = vmatprep.mubr.bf16.mxu0 0
  %504 = vmatmul.mubr.bf16.gmra.mrb[0].mxu0 %v220
  %v505 = vpop.f32.mrb[0].mxu0
  %v506 = vadd.f32 0.0, %v505
  %v507 = vpop.f32.mrb[0].mxu0
  %v508 = vpop.f32.mrb[0].mxu0
  %v509 = vadd.f32 0.0, %v508
  %v510 = vpop.f32.mrb[0].mxu0
  %511 = vmatprep.mubr.bf16.mxu0 0
  %512 = vmatmul.mubr.bf16.gmra.mrb[0].mxu0 %v221
  %v513 = vpop.f32.mrb[0].mxu0
  %v514 = vadd.f32 0.0, %v513
  %v515 = vpop.f32.mrb[0].mxu0
  %v516 = vpop.f32.mrb[0].mxu0
  %v517 = vadd.f32 0.0, %v516
  %v518 = vpop.f32.mrb[0].mxu0
  %519 = vmatprep.mubr.bf16.mxu0 0
  %520 = vmatmul.mubr.bf16.gmra.mrb[0].mxu0 %v222
  %v521 = vpop.f32.mrb[0].mxu0
  %v522 = vadd.f32 0.0, %v521
  %v523 = vpop.f32.mrb[0].mxu0
  %v524 = vpop.f32.mrb[0].mxu0
  %v525 = vadd.f32 0.0, %v524
  %v526 = vpop.f32.mrb[0].mxu0
  %527 = vmatprep.mubr.bf16.mxu0 0
  %528 = vmatmul.mubr.bf16.gmra.mrb[0].mxu0 %v223
  %v529 = vpop.f32.mrb[0].mxu0
  %v530 = vadd.f32 0.0, %v529
  %v531 = vpop.f32.mrb[0].mxu0
  %v532 = vpop.f32.mrb[0].mxu0
  %v533 = vadd.f32 0.0, %v532
  %v534 = vpop.f32.mrb[0].mxu0
  %535 = vmatprep.mubr.bf16.mxu0 0
  %536 = vmatmul.mubr.bf16.gmra.mrb[0].mxu0 %v224
  %v537 = vpop.f32.mrb[0].mxu0
  %v538 = vadd.f32 0.0, %v537
  %v539 = vpop.f32.mrb[0].mxu0
  %v540 = vpop.f32.mrb[0].mxu0
  %v541 = vadd.f32 0.0, %v540
  %v542 = vpop.f32.mrb[0].mxu0
  %543 = vmatprep.mubr.bf16.mxu0 0
  %544 = vmatmul.mubr.bf16.gmra.mrb[0].mxu0 %v225
  %v545 = vpop.f32.mrb[0].mxu0
  %v546 = vadd.f32 0.0, %v545
  %v547 = vpop.f32.mrb[0].mxu0
  %v548 = vpop.f32.mrb[0].mxu0
  %v549 = vadd.f32 0.0, %v548
  %v550 = vpop.f32.mrb[0].mxu0
  %551 = vmatprep.mubr.bf16.mxu0 0
  %552 = vmatmul.mubr.bf16.gmra.mrb[0].mxu0 %v226
  %v553 = vpop.f32.mrb[0].mxu0
  %v554 = vadd.f32 0.0, %v553
  %v555 = vpop.f32.mrb[0].mxu0
  %v556 = vpop.f32.mrb[0].mxu0
  %v557 = vadd.f32 0.0, %v556
  %v558 = vpop.f32.mrb[0].mxu0
  %559 = vdwg.mxu0
  %v560 = vmax.f32 %v338, %v394
  %v561 = vmax.f32 %v341, %v397
  %v562 = vmax.f32 %v346, %v402
  %v563 = vmax.f32 %v349, %v405
  %v564 = vmax.f32 %v354, %v410
  %v565 = vmax.f32 %v357, %v413
  %v566 = vmax.f32 %v362, %v418
  %v567 = vmax.f32 %v365, %v421
  %v568 = vmax.f32 %v370, %v426
  %v569 = vmax.f32 %v373, %v429
  %v570 = vmax.f32 %v378, %v434
  %v571 = vmax.f32 %v381, %v437
  %v572 = vmax.f32 %v386, %v442
  %v573 = vmax.f32 %v389, %v445
  %v574 = vmax.f32 %v450, %v506
  %v575 = vmax.f32 %v453, %v509
  %v576 = vmax.f32 %v458, %v514
  %v577 = vmax.f32 %v461, %v517
  %v578 = vmax.f32 %v466, %v522
  %v579 = vmax.f32 %v469, %v525
  %v580 = vmax.f32 %v474, %v530
  %v581 = vmax.f32 %v477, %v533
  %v582 = vmax.f32 %v482, %v538
  %v583 = vmax.f32 %v485, %v541
  %v584 = vmax.f32 %v490, %v546
  %v585 = vmax.f32 %v493, %v549
  %v586 = vmax.f32 %v498, %v554
  %v587 = vmax.f32 %v501, %v557
  %v588 = vmax.f32 %v560, %v574
  %v589 = vmax.f32 %v561, %v575
  %v590 = vmax.f32 %v562, %v576
  %v591 = vmax.f32 %v563, %v577
  %v592 = vmax.f32 %v564, %v578
  %v593 = vmax.f32 %v565, %v579
  %v594 = vmax.f32 %v566, %v580
  %v595 = vmax.f32 %v567, %v581
  %v596 = vmax.f32 %v568, %v582
  %v597 = vmax.f32 %v569, %v583
  %v598 = vmax.f32 %v570, %v584
  %v599 = vmax.f32 %v571, %v585
  %v600 = vmax.f32 %v572, %v586
  %v601 = vmax.f32 %v573, %v587
  %v602 = vld [vmem:[%s2] sm:$0x1]
  %v604 = vlaneseq
  %v605 = vshrl.u32 %v604, 7
  %v606 = vsub.s32 0, %v605
  %v607 = vrot.slane %v602, %v606
  %v609 = vadd.f32 %v588, %v607
  %v610 = vadd.f32 %v589, %v607
  %v611 = vadd.f32 %v590, %v607
  %v612 = vadd.f32 %v591, %v607
  %v613 = vadd.f32 %v592, %v607
  %v614 = vadd.f32 %v593, %v607
  %v615 = vadd.f32 %v594, %v607
  %v616 = vadd.f32 %v595, %v607
  %v617 = vadd.f32 %v596, %v607
  %v618 = vadd.f32 %v597, %v607
  %v619 = vadd.f32 %v598, %v607
  %v620 = vadd.f32 %v599, %v607
  %v621 = vadd.f32 %v600, %v607
  %v622 = vadd.f32 %v601, %v607
  %v623 = vmax.f32 %v609, 0.0
  %v624 = vmax.f32 %v610, 0.0
  %v625 = vmax.f32 %v611, 0.0
  %v626 = vmax.f32 %v612, 0.0
  %v627 = vmax.f32 %v613, 0.0
  %v628 = vmax.f32 %v614, 0.0
  %v629 = vmax.f32 %v615, 0.0
  %v630 = vmax.f32 %v616, 0.0
  %v631 = vmax.f32 %v617, 0.0
  %v632 = vmax.f32 %v618, 0.0
  %v633 = vmax.f32 %v619, 0.0
  %v634 = vmax.f32 %v620, 0.0
  %v635 = vmax.f32 %v621, 0.0
  %v636 = vmax.f32 %v622, 0.0
  %v637 = vpack.c.bf16 %v624, %v623
  %v638 = vpack.c.bf16 %v626, %v625
  %v639 = vpack.c.bf16 %v628, %v627
  %v640 = vpack.c.bf16 %v630, %v629
  %v641 = vpack.c.bf16 %v632, %v631
  %v642 = vpack.c.bf16 %v634, %v633
  %v643 = vpack.c.bf16 %v636, %v635
  %v651 = vunpack.c.l.b16 %v637
  %v652 = vunpack.c.h.b16 %v637
  %v653 = vunpack.c.l.b16 %v638
  %v654 = vunpack.c.h.b16 %v638
  %v655 = vunpack.c.l.b16 %v639
  %v656 = vunpack.c.h.b16 %v639
  %v657 = vunpack.c.l.b16 %v640
  %v658 = vunpack.c.h.b16 %v640
  %v659 = vunpack.c.l.b16 %v641
  %v660 = vunpack.c.h.b16 %v641
  %v661 = vunpack.c.l.b16 %v642
  %v662 = vunpack.c.h.b16 %v642
  %v663 = vunpack.c.l.b16 %v643
  %v664 = vunpack.c.h.b16 %v643
  %v665 = vpack.c.b16 %v651, %v651
  %v666 = vpack.c.b16 %v652, %v652
  %v667 = vpack.c.b16 %v653, %v653
  %v668 = vpack.c.b16 %v654, %v654
  %v669 = vpack.c.b16 %v655, %v655
  %v670 = vpack.c.b16 %v656, %v656
  %v671 = vpack.c.b16 %v657, %v657
  %v672 = vpack.c.b16 %v658, %v658
  %v673 = vpack.c.b16 %v659, %v659
  %v674 = vpack.c.b16 %v660, %v660
  %v675 = vpack.c.b16 %v661, %v661
  %v676 = vpack.c.b16 %v662, %v662
  %v677 = vpack.c.b16 %v663, %v663
  %v678 = vpack.c.b16 %v664, %v664
  %693 = vst [vmem:[%s3] sm:$0xf] %v665
  %694 = vst [vmem:[%s3 + $0x4] sm:$0xf] %v666
  %695 = vst [vmem:[%s3 + $0x8] sm:$0xf] %v667
  %696 = vst [vmem:[%s3 + $0xc] sm:$0xf] %v668
  %697 = vst [vmem:[%s3 + $0x10] sm:$0xf] %v669
  %698 = vst [vmem:[%s3 + $0x14] sm:$0xf] %v670
  %699 = vst [vmem:[%s3 + $0x18] sm:$0xf] %v671
  %700 = vst [vmem:[%s3 + $0x1c] sm:$0xf] %v672
  %701 = vst [vmem:[%s3 + $0x20] sm:$0xf] %v673
  %702 = vst [vmem:[%s3 + $0x24] sm:$0xf] %v674
  %703 = vst [vmem:[%s3 + $0x28] sm:$0xf] %v675
  %704 = vst [vmem:[%s3 + $0x2c] sm:$0xf] %v676
  %705 = vst [vmem:[%s3 + $0x30] sm:$0xf] %v677
  %706 = vst [vmem:[%s3 + $0x34] sm:$0xf] %v678
  // Predicated region
  $region14: #{subnet_forward.4} parent=0 // pred_check
    _
  $region15: #{subnet_forward.4} parent=0 // pred_check_branch
    %708 = sbr.rel (0) target = $region17
  $region16: #{subnet_forward.4} parent=0 // pred_region
    _
  $region17: #{subnet_forward.4} parent=0 // pred_fallthru
    _
  // Predicated region
  $region18: #{subnet_forward.4} parent=0 // pred_check
    _
  $region19: #{subnet_forward.4} parent=0 // pred_check_branch
    %710 = sbr.rel (0) target = $region21
  $region20: #{subnet_forward.4} parent=0 // pred_region
    _
  $region21: #{subnet_forward.4} parent=0 // pred_fallthru
    _

// kernel: subnet_forward.5
$region0: #{subnet_forward.5}
  #allocation0 [shape = 'u32[]', space=smem, size = 0x4, offset = 0x4, fixed_abs, tag = 'smem constant byte address 0x4 - core index']
  #allocation1 [shape = 'u32[144,128]{1,0:T(1,128)}', space=vmem, size = 0x12000, scoped, tag = 'internal scratch']
  %s0 = inlined_call_operand.vmem [shape: bf16[2,3200], index: 0, kind: input, shape index: {}]
  %s1 = inlined_call_operand.vmem [shape: bf16[3200,256], index: 1, kind: input, shape index: {}]
  %s2 = inlined_call_operand.vmem [shape: f32[1,256], index: 2, kind: input, shape index: {}]
  %s3 = inlined_call_operand.vmem [shape: bf16[256,256], index: 3, kind: input, shape index: {}]
  %s4 = inlined_call_operand.vmem [shape: f32[1,256], index: 4, kind: input, shape index: {}]
  %s5 = inlined_call_operand.vmem [shape: bf16[256,128], index: 5, kind: input, shape index: {}]
  %s6 = inlined_call_operand.vmem [shape: f32[1,128], index: 6, kind: input, shape index: {}]
  %s7 = inlined_call_operand.hbm [shape: f32[2,128], index: 7, kind: output, shape index: {}]
  %s8 = sld [smem:[#allocation0]]
  $region38: #{subnet_forward.5} parent=0
    _
  %s10 = ssub.s32 1, %s8
  %s11 = scalar_select 0, %s10, %s8
  $region1: #{subnet_forward.5} parent=0
    #allocation2 [shape = 'u8[1024]{0}', space=vmem, size = 0x400, scoped, tag = 'output window, operand 0, single buffered']
    #allocation3 [shape = 's32[1]{0}', space=sflag, size = 0x4, scoped, tag = 'scoped memory for subnet_forward.5']
    %12 = vsyncpa [#allocation3], 0
    // Predicated region
    $region2: #{subnet_forward.5} parent=1 // pred_check
      _
    $region3: #{subnet_forward.5} parent=1 // pred_check_branch
      %14 = sbr.rel (0) target = $region5
    $region4: #{subnet_forward.5} parent=1 // pred_region
      _
    $region5: #{subnet_forward.5} parent=1 // pred_fallthru
      _
    // Predicated region
    $region6: #{subnet_forward.5} parent=1 // pred_check
      _
    $region7: #{subnet_forward.5} parent=1 // pred_check_branch
      %16 = sbr.rel (0) target = $region9
    $region8: #{subnet_forward.5} parent=1 // pred_region
      _
    $region9: #{subnet_forward.5} parent=1 // pred_fallthru
      _
    // Predicated region
    $region10: #{subnet_forward.5} parent=1 // pred_check
      _
    $region11: #{subnet_forward.5} parent=1 // pred_check_branch
      %18 = sbr.rel (0) target = $region13
    $region12: #{subnet_forward.5} parent=1 // pred_region
      _
    $region13: #{subnet_forward.5} parent=1 // pred_fallthru
      _
    // Predicated region
    $region14: #{subnet_forward.5} parent=1 // pred_check
      _
    $region15: #{subnet_forward.5} parent=1 // pred_check_branch
      %20 = sbr.rel (0) target = $region17
    $region16: #{subnet_forward.5} parent=1 // pred_region
      _
    $region17: #{subnet_forward.5} parent=1 // pred_fallthru
      _
    // Predicated region
    $region18: #{subnet_forward.5} parent=1 // pred_check
      _
    $region19: #{subnet_forward.5} parent=1 // pred_check_branch
      %22 = sbr.rel (0) target = $region21
    $region20: #{subnet_forward.5} parent=1 // pred_region
      _
    $region21: #{subnet_forward.5} parent=1 // pred_fallthru
      _
    // Predicated region
    $region22: #{subnet_forward.5} parent=1 // pred_check
      _
    $region23: #{subnet_forward.5} parent=1 // pred_check_branch
      %24 = sbr.rel (0) target = $region25
    $region24: #{subnet_forward.5} parent=1 // pred_region
      _
    $region25: #{subnet_forward.5} parent=1 // pred_fallthru
      _
    // Predicated region
    $region26: #{subnet_forward.5} parent=1 // pred_check
      _
    $region27: #{subnet_forward.5} parent=1 // pred_check_branch
      %26 = sbr.rel (0) target = $region29
    $region28: #{subnet_forward.5} parent=1 // pred_region
      _
    $region29: #{subnet_forward.5} parent=1 // pred_fallthru
      _
    %v28 = vld [vmem:[%s0] sm:$0xff]
    %v29 = vld [vmem:[%s0 + $0x8] sm:$0xff]
    %v30 = vld [vmem:[%s0 + $0x10] sm:$0xff]
    %v31 = vld [vmem:[%s0 + $0x18] sm:$0x1]
    %v32 = vld [vmem:[%s1] sm:$0xff]
    %v33 = vld [vmem:[%s1 + $0x8] sm:$0xff]
    %v34 = vld [vmem:[%s1 + $0x10] sm:$0xff]
    %v35 = vld [vmem:[%s1 + $0x18] sm:$0xff]
    %v36 = vld [vmem:[%s1 + $0x20] sm:$0xff]
    %v37 = vld [vmem:[%s1 + $0x28] sm:$0xff]
    %v38 = vld [vmem:[%s1 + $0x30] sm:$0xff]
    %v39 = vld [vmem:[%s1 + $0x38] sm:$0xff]
    %v40 = vld [vmem:[%s1 + $0x40] sm:$0xff]
    %v41 = vld [vmem:[%s1 + $0x48] sm:$0xff]
    %v42 = vld [vmem:[%s1 + $0x50] sm:$0xff]
    %v43 = vld [vmem:[%s1 + $0x58] sm:$0xff]
    %v44 = vld [vmem:[%s1 + $0x60] sm:$0xff]
    %v45 = vld [vmem:[%s1 + $0x68] sm:$0xff]
    %v46 = vld [vmem:[%s1 + $0x70] sm:$0xff]
    %v47 = vld [vmem:[%s1 + $0x78] sm:$0xff]
    %v48 = vld [vmem:[%s1 + $0x80] sm:$0xff]
    %v49 = vld [vmem:[%s1 + $0x88] sm:$0xff]
    %v50 = vld [vmem:[%s1 + $0x90] sm:$0xff]
    %v51 = vld [vmem:[%s1 + $0x98] sm:$0xff]
    %v52 = vld [vmem:[%s1 + $0xa0] sm:$0xff]
    %v53 = vld [vmem:[%s1 + $0xa8] sm:$0xff]
    %v54 = vld [vmem:[%s1 + $0xb0] sm:$0xff]
    %v55 = vld [vmem:[%s1 + $0xb8] sm:$0xff]
    %v56 = vld [vmem:[%s1 + $0xc0] sm:$0xff]
    %v57 = vld [vmem:[%s1 + $0xc8] sm:$0xff]
    %v58 = vld [vmem:[%s1 + $0xd0] sm:$0xff]
    %v59 = vld [vmem:[%s1 + $0xd8] sm:$0xff]
    %v60 = vld [vmem:[%s1 + $0xe0] sm:$0xff]
    %v61 = vld [vmem:[%s1 + $0xe8] sm:$0xff]
    %v62 = vld [vmem:[%s1 + $0xf0] sm:$0xff]
    %v63 = vld [vmem:[%s1 + $0xf8] sm:$0xff]
    %v64 = vld [vmem:[%s1 + $0x100] sm:$0xff]
    %v65 = vld [vmem:[%s1 + $0x108] sm:$0xff]
    %v66 = vld [vmem:[%s1 + $0x110] sm:$0xff]
    %v67 = vld [vmem:[%s1 + $0x118] sm:$0xff]
    %v68 = vld [vmem:[%s1 + $0x120] sm:$0xff]
    %v69 = vld [vmem:[%s1 + $0x128] sm:$0xff]
    %v70 = vld [vmem:[%s1 + $0x130] sm:$0xff]
    %v71 = vld [vmem:[%s1 + $0x138] sm:$0xff]
    %v72 = vld [vmem:[%s1 + $0x140] sm:$0xff]
    %v73 = vld [vmem:[%s1 + $0x148] sm:$0xff]
    %v74 = vld [vmem:[%s1 + $0x150] sm:$0xff]
    %v75 = vld [vmem:[%s1 + $0x158] sm:$0xff]
    %v76 = vld [vmem:[%s1 + $0x160] sm:$0xff]
    %v77 = vld [vmem:[%s1 + $0x168] sm:$0xff]
    %v78 = vld [vmem:[%s1 + $0x170] sm:$0xff]
    %v79 = vld [vmem:[%s1 + $0x178] sm:$0xff]
    %v80 = vld [vmem:[%s1 + $0x180] sm:$0xff]
    %v81 = vld [vmem:[%s1 + $0x188] sm:$0xff]
    %v82 = vld [vmem:[%s1 + $0x190] sm:$0xff]
    %v83 = vld [vmem:[%s1 + $0x198] sm:$0xff]
    %v84 = vld [vmem:[%s1 + $0x1a0] sm:$0xff]
    %v85 = vld [vmem:[%s1 + $0x1a8] sm:$0xff]
    %v86 = vld [vmem:[%s1 + $0x1b0] sm:$0xff]
    %v87 = vld [vmem:[%s1 + $0x1b8] sm:$0xff]
    %v88 = vld [vmem:[%s1 + $0x1c0] sm:$0xff]
    %v89 = vld [vmem:[%s1 + $0x1c8] sm:$0xff]
    %v90 = vld [vmem:[%s1 + $0x1d0] sm:$0xff]
    %v91 = vld [vmem:[%s1 + $0x1d8] sm:$0xff]
    %v92 = vld [vmem:[%s1 + $0x1e0] sm:$0xff]
    %v93 = vld [vmem:[%s1 + $0x1e8] sm:$0xff]
    %v94 = vld [vmem:[%s1 + $0x1f0] sm:$0xff]
    %v95 = vld [vmem:[%s1 + $0x1f8] sm:$0xff]
    %v96 = vld [vmem:[%s1 + $0x200] sm:$0xff]
    %v97 = vld [vmem:[%s1 + $0x208] sm:$0xff]
    %v98 = vld [vmem:[%s1 + $0x210] sm:$0xff]
    %v99 = vld [vmem:[%s1 + $0x218] sm:$0xff]
    %v100 = vld [vmem:[%s1 + $0x220] sm:$0xff]
    %v101 = vld [vmem:[%s1 + $0x228] sm:$0xff]
    %v102 = vld [vmem:[%s1 + $0x230] sm:$0xff]
    %v103 = vld [vmem:[%s1 + $0x238] sm:$0xff]
    %v104 = vld [vmem:[%s1 + $0x240] sm:$0xff]
    %v105 = vld [vmem:[%s1 + $0x248] sm:$0xff]
    %v106 = vld [vmem:[%s1 + $0x250] sm:$0xff]
    %v107 = vld [vmem:[%s1 + $0x258] sm:$0xff]
    %v108 = vld [vmem:[%s1 + $0x260] sm:$0xff]
    %v109 = vld [vmem:[%s1 + $0x268] sm:$0xff]
    %v110 = vld [vmem:[%s1 + $0x270] sm:$0xff]
    %v111 = vld [vmem:[%s1 + $0x278] sm:$0xff]
    %v112 = vld [vmem:[%s1 + $0x280] sm:$0xff]
    %v113 = vld [vmem:[%s1 + $0x288] sm:$0xff]
    %v114 = vld [vmem:[%s1 + $0x290] sm:$0xff]
    %v115 = vld [vmem:[%s1 + $0x298] sm:$0xff]
    %v116 = vld [vmem:[%s1 + $0x2a0] sm:$0xff]
    %v117 = vld [vmem:[%s1 + $0x2a8] sm:$0xff]
    %v118 = vld [vmem:[%s1 + $0x2b0] sm:$0xff]
    %v119 = vld [vmem:[%s1 + $0x2b8] sm:$0xff]
    %v120 = vld [vmem:[%s1 + $0x2c0] sm:$0xff]
    %v121 = vld [vmem:[%s1 + $0x2c8] sm:$0xff]
    %v122 = vld [vmem:[%s1 + $0x2d0] sm:$0xff]
    %v123 = vld [vmem:[%s1 + $0x2d8] sm:$0xff]
    %v124 = vld [vmem:[%s1 + $0x2e0] sm:$0xff]
    %v125 = vld [vmem:[%s1 + $0x2e8] sm:$0xff]
    %v126 = vld [vmem:[%s1 + $0x2f0] sm:$0xff]
    %v127 = vld [vmem:[%s1 + $0x2f8] sm:$0xff]
    %v128 = vld [vmem:[%s1 + $0x300] sm:$0xff]
    %v129 = vld [vmem:[%s1 + $0x308] sm:$0xff]
    %v130 = vld [vmem:[%s1 + $0x310] sm:$0xff]
    %v131 = vld [vmem:[%s1 + $0x318] sm:$0xff]
    %v132 = vld [vmem:[%s1 + $0x320] sm:$0xff]
    %v133 = vld [vmem:[%s1 + $0x328] sm:$0xff]
    %v134 = vld [vmem:[%s1 + $0x330] sm:$0xff]
    %v135 = vld [vmem:[%s1 + $0x338] sm:$0xff]
    %v136 = vld [vmem:[%s1 + $0x340] sm:$0xff]
    %v137 = vld [vmem:[%s1 + $0x348] sm:$0xff]
    %v138 = vld [vmem:[%s1 + $0x350] sm:$0xff]
    %v139 = vld [vmem:[%s1 + $0x358] sm:$0xff]
    %v140 = vld [vmem:[%s1 + $0x360] sm:$0xff]
    %v141 = vld [vmem:[%s1 + $0x368] sm:$0xff]
    %v142 = vld [vmem:[%s1 + $0x370] sm:$0xff]
    %v143 = vld [vmem:[%s1 + $0x378] sm:$0xff]
    %v144 = vld [vmem:[%s1 + $0x380] sm:$0xff]
    %v145 = vld [vmem:[%s1 + $0x388] sm:$0xff]
    %v146 = vld [vmem:[%s1 + $0x390] sm:$0xff]
    %v147 = vld [vmem:[%s1 + $0x398] sm:$0xff]
    %v148 = vld [vmem:[%s1 + $0x3a0] sm:$0xff]
    %v149 = vld [vmem:[%s1 + $0x3a8] sm:$0xff]
    %v150 = vld [vmem:[%s1 + $0x3b0] sm:$0xff]
    %v151 = vld [vmem:[%s1 + $0x3b8] sm:$0xff]
    %v152 = vld [vmem:[%s1 + $0x3c0] sm:$0xff]
    %v153 = vld [vmem:[%s1 + $0x3c8] sm:$0xff]
    %v154 = vld [vmem:[%s1 + $0x3d0] sm:$0xff]
    %v155 = vld [vmem:[%s1 + $0x3d8] sm:$0xff]
    %v156 = vld [vmem:[%s1 + $0x3e0] sm:$0xff]
    %v157 = vld [vmem:[%s1 + $0x3e8] sm:$0xff]
    %v158 = vld [vmem:[%s1 + $0x3f0] sm:$0xff]
    %v159 = vld [vmem:[%s1 + $0x3f8] sm:$0xff]
    %v160 = vld [vmem:[%s1 + $0x400] sm:$0xff]
    %v161 = vld [vmem:[%s1 + $0x408] sm:$0xff]
    %v162 = vld [vmem:[%s1 + $0x410] sm:$0xff]
    %v163 = vld [vmem:[%s1 + $0x418] sm:$0xff]
    %v164 = vld [vmem:[%s1 + $0x420] sm:$0xff]
    %v165 = vld [vmem:[%s1 + $0x428] sm:$0xff]
    %v166 = vld [vmem:[%s1 + $0x430] sm:$0xff]
    %v167 = vld [vmem:[%s1 + $0x438] sm:$0xff]
    %v168 = vld [vmem:[%s1 + $0x440] sm:$0xff]
    %v169 = vld [vmem:[%s1 + $0x448] sm:$0xff]
    %v170 = vld [vmem:[%s1 + $0x450] sm:$0xff]
    %v171 = vld [vmem:[%s1 + $0x458] sm:$0xff]
    %v172 = vld [vmem:[%s1 + $0x460] sm:$0xff]
    %v173 = vld [vmem:[%s1 + $0x468] sm:$0xff]
    %v174 = vld [vmem:[%s1 + $0x470] sm:$0xff]
    %v175 = vld [vmem:[%s1 + $0x478] sm:$0xff]
    %v176 = vld [vmem:[%s1 + $0x480] sm:$0xff]
    %v177 = vld [vmem:[%s1 + $0x488] sm:$0xff]
    %v178 = vld [vmem:[%s1 + $0x490] sm:$0xff]
    %v179 = vld [vmem:[%s1 + $0x498] sm:$0xff]
    %v180 = vld [vmem:[%s1 + $0x4a0] sm:$0xff]
    %v181 = vld [vmem:[%s1 + $0x4a8] sm:$0xff]
    %v182 = vld [vmem:[%s1 + $0x4b0] sm:$0xff]
    %v183 = vld [vmem:[%s1 + $0x4b8] sm:$0xff]
    %v184 = vld [vmem:[%s1 + $0x4c0] sm:$0xff]
    %v185 = vld [vmem:[%s1 + $0x4c8] sm:$0xff]
    %v186 = vld [vmem:[%s1 + $0x4d0] sm:$0xff]
    %v187 = vld [vmem:[%s1 + $0x4d8] sm:$0xff]
    %v188 = vld [vmem:[%s1 + $0x4e0] sm:$0xff]
    %v189 = vld [vmem:[%s1 + $0x4e8] sm:$0xff]
    %v190 = vld [vmem:[%s1 + $0x4f0] sm:$0xff]
    %v191 = vld [vmem:[%s1 + $0x4f8] sm:$0xff]
    %v192 = vld [vmem:[%s1 + $0x500] sm:$0xff]
    %v193 = vld [vmem:[%s1 + $0x508] sm:$0xff]
    %v194 = vld [vmem:[%s1 + $0x510] sm:$0xff]
    %v195 = vld [vmem:[%s1 + $0x518] sm:$0xff]
    %v196 = vld [vmem:[%s1 + $0x520] sm:$0xff]
    %v197 = vld [vmem:[%s1 + $0x528] sm:$0xff]
    %v198 = vld [vmem:[%s1 + $0x530] sm:$0xff]
    %v199 = vld [vmem:[%s1 + $0x538] sm:$0xff]
    %v200 = vld [vmem:[%s1 + $0x540] sm:$0xff]
    %v201 = vld [vmem:[%s1 + $0x548] sm:$0xff]
    %v202 = vld [vmem:[%s1 + $0x550] sm:$0xff]
    %v203 = vld [vmem:[%s1 + $0x558] sm:$0xff]
    %v204 = vld [vmem:[%s1 + $0x560] sm:$0xff]
    %v205 = vld [vmem:[%s1 + $0x568] sm:$0xff]
    %v206 = vld [vmem:[%s1 + $0x570] sm:$0xff]
    %v207 = vld [vmem:[%s1 + $0x578] sm:$0xff]
    %v208 = vld [vmem:[%s1 + $0x580] sm:$0xff]
    %v209 = vld [vmem:[%s1 + $0x588] sm:$0xff]
    %v210 = vld [vmem:[%s1 + $0x590] sm:$0xff]
    %v211 = vld [vmem:[%s1 + $0x598] sm:$0xff]
    %v212 = vld [vmem:[%s1 + $0x5a0] sm:$0xff]
    %v213 = vld [vmem:[%s1 + $0x5a8] sm:$0xff]
    %v214 = vld [vmem:[%s1 + $0x5b0] sm:$0xff]
    %v215 = vld [vmem:[%s1 + $0x5b8] sm:$0xff]
    %v216 = vld [vmem:[%s1 + $0x5c0] sm:$0xff]
    %v217 = vld [vmem:[%s1 + $0x5c8] sm:$0xff]
    %v218 = vld [vmem:[%s1 + $0x5d0] sm:$0xff]
    %v219 = vld [vmem:[%s1 + $0x5d8] sm:$0xff]
    %v220 = vld [vmem:[%s1 + $0x5e0] sm:$0xff]
    %v221 = vld [vmem:[%s1 + $0x5e8] sm:$0xff]
    %v222 = vld [vmem:[%s1 + $0x5f0] sm:$0xff]
    %v223 = vld [vmem:[%s1 + $0x5f8] sm:$0xff]
    %v224 = vld [vmem:[%s1 + $0x600] sm:$0xff]
    %v225 = vld [vmem:[%s1 + $0x608] sm:$0xff]
    %v226 = vld [vmem:[%s1 + $0x610] sm:$0xff]
    %v227 = vld [vmem:[%s1 + $0x618] sm:$0xff]
    %v228 = vld [vmem:[%s1 + $0x620] sm:$0xff]
    %v229 = vld [vmem:[%s1 + $0x628] sm:$0xff]
    %v230 = vld [vmem:[%s1 + $0x630] sm:$0xff]
    %v231 = vld [vmem:[%s1 + $0x638] sm:$0xff]
    %v232 = vld [vmem:[%s1 + $0x640] sm:$0xff]
    %v233 = vld [vmem:[%s1 + $0x648] sm:$0xff]
    %v234 = vld [vmem:[%s1 + $0x650] sm:$0xff]
    %v235 = vld [vmem:[%s1 + $0x658] sm:$0xff]
    %v236 = vld [vmem:[%s1 + $0x660] sm:$0xff]
    %v237 = vld [vmem:[%s1 + $0x668] sm:$0xff]
    %v238 = vld [vmem:[%s1 + $0x670] sm:$0xff]
    %v239 = vld [vmem:[%s1 + $0x678] sm:$0xff]
    %v240 = vld [vmem:[%s1 + $0x680] sm:$0xff]
    %v241 = vld [vmem:[%s1 + $0x688] sm:$0xff]
    %v242 = vld [vmem:[%s1 + $0x690] sm:$0xff]
    %v243 = vld [vmem:[%s1 + $0x698] sm:$0xff]
    %v244 = vld [vmem:[%s1 + $0x6a0] sm:$0xff]
    %v245 = vld [vmem:[%s1 + $0x6a8] sm:$0xff]
    %v246 = vld [vmem:[%s1 + $0x6b0] sm:$0xff]
    %v247 = vld [vmem:[%s1 + $0x6b8] sm:$0xff]
    %v248 = vld [vmem:[%s1 + $0x6c0] sm:$0xff]
    %v249 = vld [vmem:[%s1 + $0x6c8] sm:$0xff]
    %v250 = vld [vmem:[%s1 + $0x6d0] sm:$0xff]
    %v251 = vld [vmem:[%s1 + $0x6d8] sm:$0xff]
    %v252 = vld [vmem:[%s1 + $0x6e0] sm:$0xff]
    %v253 = vld [vmem:[%s1 + $0x6e8] sm:$0xff]
    %v254 = vld [vmem:[%s1 + $0x6f0] sm:$0xff]
    %v255 = vld [vmem:[%s1 + $0x6f8] sm:$0xff]
    %v256 = vld [vmem:[%s1 + $0x700] sm:$0xff]
    %v257 = vld [vmem:[%s1 + $0x708] sm:$0xff]
    %v258 = vld [vmem:[%s1 + $0x710] sm:$0xff]
    %v259 = vld [vmem:[%s1 + $0x718] sm:$0xff]
    %v260 = vld [vmem:[%s1 + $0x720] sm:$0xff]
    %v261 = vld [vmem:[%s1 + $0x728] sm:$0xff]
    %v262 = vld [vmem:[%s1 + $0x730] sm:$0xff]
    %v263 = vld [vmem:[%s1 + $0x738] sm:$0xff]
    %v264 = vld [vmem:[%s1 + $0x740] sm:$0xff]
    %v265 = vld [vmem:[%s1 + $0x748] sm:$0xff]
    %v266 = vld [vmem:[%s1 + $0x750] sm:$0xff]
    %v267 = vld [vmem:[%s1 + $0x758] sm:$0xff]
    %v268 = vld [vmem:[%s1 + $0x760] sm:$0xff]
    %v269 = vld [vmem:[%s1 + $0x768] sm:$0xff]
    %v270 = vld [vmem:[%s1 + $0x770] sm:$0xff]
    %v271 = vld [vmem:[%s1 + $0x778] sm:$0xff]
    %v272 = vld [vmem:[%s1 + $0x780] sm:$0xff]
    %v273 = vld [vmem:[%s1 + $0x788] sm:$0xff]
    %v274 = vld [vmem:[%s1 + $0x790] sm:$0xff]
    %v275 = vld [vmem:[%s1 + $0x798] sm:$0xff]
    %v276 = vld [vmem:[%s1 + $0x7a0] sm:$0xff]
    %v277 = vld [vmem:[%s1 + $0x7a8] sm:$0xff]
    %v278 = vld [vmem:[%s1 + $0x7b0] sm:$0xff]
    %v279 = vld [vmem:[%s1 + $0x7b8] sm:$0xff]
    %v280 = vld [vmem:[%s1 + $0x7c0] sm:$0xff]
    %v281 = vld [vmem:[%s1 + $0x7c8] sm:$0xff]
    %v282 = vld [vmem:[%s1 + $0x7d0] sm:$0xff]
    %v283 = vld [vmem:[%s1 + $0x7d8] sm:$0xff]
    %v284 = vld [vmem:[%s1 + $0x7e0] sm:$0xff]
    %v285 = vld [vmem:[%s1 + $0x7e8] sm:$0xff]
    %v286 = vld [vmem:[%s1 + $0x7f0] sm:$0xff]
    %v287 = vld [vmem:[%s1 + $0x7f8] sm:$0xff]
    %v288 = vld [vmem:[%s1 + $0x800] sm:$0xff]
    %v289 = vld [vmem:[%s1 + $0x808] sm:$0xff]
    %v290 = vld [vmem:[%s1 + $0x810] sm:$0xff]
    %v291 = vld [vmem:[%s1 + $0x818] sm:$0xff]
    %v292 = vld [vmem:[%s1 + $0x820] sm:$0xff]
    %v293 = vld [vmem:[%s1 + $0x828] sm:$0xff]
    %v294 = vld [vmem:[%s1 + $0x830] sm:$0xff]
    %v295 = vld [vmem:[%s1 + $0x838] sm:$0xff]
    %v296 = vld [vmem:[%s1 + $0x840] sm:$0xff]
    %v297 = vld [vmem:[%s1 + $0x848] sm:$0xff]
    %v298 = vld [vmem:[%s1 + $0x850] sm:$0xff]
    %v299 = vld [vmem:[%s1 + $0x858] sm:$0xff]
    %v300 = vld [vmem:[%s1 + $0x860] sm:$0xff]
    %v301 = vld [vmem:[%s1 + $0x868] sm:$0xff]
    %v302 = vld [vmem:[%s1 + $0x870] sm:$0xff]
    %v303 = vld [vmem:[%s1 + $0x878] sm:$0xff]
    %v304 = vld [vmem:[%s1 + $0x880] sm:$0xff]
    %v305 = vld [vmem:[%s1 + $0x888] sm:$0xff]
    %v306 = vld [vmem:[%s1 + $0x890] sm:$0xff]
    %v307 = vld [vmem:[%s1 + $0x898] sm:$0xff]
    %v308 = vld [vmem:[%s1 + $0x8a0] sm:$0xff]
    %v309 = vld [vmem:[%s1 + $0x8a8] sm:$0xff]
    %v310 = vld [vmem:[%s1 + $0x8b0] sm:$0xff]
    %v311 = vld [vmem:[%s1 + $0x8b8] sm:$0xff]
    %v312 = vld [vmem:[%s1 + $0x8c0] sm:$0xff]
    %v313 = vld [vmem:[%s1 + $0x8c8] sm:$0xff]
    %v314 = vld [vmem:[%s1 + $0x8d0] sm:$0xff]
    %v315 = vld [vmem:[%s1 + $0x8d8] sm:$0xff]
    %v316 = vld [vmem:[%s1 + $0x8e0] sm:$0xff]
    %v317 = vld [vmem:[%s1 + $0x8e8] sm:$0xff]
    %v318 = vld [vmem:[%s1 + $0x8f0] sm:$0xff]
    %v319 = vld [vmem:[%s1 + $0x8f8] sm:$0xff]
    %v320 = vld [vmem:[%s1 + $0x900] sm:$0xff]
    %v321 = vld [vmem:[%s1 + $0x908] sm:$0xff]
    %v322 = vld [vmem:[%s1 + $0x910] sm:$0xff]
    %v323 = vld [vmem:[%s1 + $0x918] sm:$0xff]
    %v324 = vld [vmem:[%s1 + $0x920] sm:$0xff]
    %v325 = vld [vmem:[%s1 + $0x928] sm:$0xff]
    %v326 = vld [vmem:[%s1 + $0x930] sm:$0xff]
    %v327 = vld [vmem:[%s1 + $0x938] sm:$0xff]
    %v328 = vld [vmem:[%s1 + $0x940] sm:$0xff]
    %v329 = vld [vmem:[%s1 + $0x948] sm:$0xff]
    %v330 = vld [vmem:[%s1 + $0x950] sm:$0xff]
    %v331 = vld [vmem:[%s1 + $0x958] sm:$0xff]
    %v332 = vld [vmem:[%s1 + $0x960] sm:$0xff]
    %v333 = vld [vmem:[%s1 + $0x968] sm:$0xff]
    %v334 = vld [vmem:[%s1 + $0x970] sm:$0xff]
    %v335 = vld [vmem:[%s1 + $0x978] sm:$0xff]
    %v336 = vld [vmem:[%s1 + $0x980] sm:$0xff]
    %v337 = vld [vmem:[%s1 + $0x988] sm:$0xff]
    %v338 = vld [vmem:[%s1 + $0x990] sm:$0xff]
    %v339 = vld [vmem:[%s1 + $0x998] sm:$0xff]
    %v340 = vld [vmem:[%s1 + $0x9a0] sm:$0xff]
    %v341 = vld [vmem:[%s1 + $0x9a8] sm:$0xff]
    %v342 = vld [vmem:[%s1 + $0x9b0] sm:$0xff]
    %v343 = vld [vmem:[%s1 + $0x9b8] sm:$0xff]
    %v344 = vld [vmem:[%s1 + $0x9c0] sm:$0xff]
    %v345 = vld [vmem:[%s1 + $0x9c8] sm:$0xff]
    %v346 = vld [vmem:[%s1 + $0x9d0] sm:$0xff]
    %v347 = vld [vmem:[%s1 + $0x9d8] sm:$0xff]
    %v348 = vld [vmem:[%s1 + $0x9e0] sm:$0xff]
    %v349 = vld [vmem:[%s1 + $0x9e8] sm:$0xff]
    %v350 = vld [vmem:[%s1 + $0x9f0] sm:$0xff]
    %v351 = vld [vmem:[%s1 + $0x9f8] sm:$0xff]
    %v352 = vld [vmem:[%s1 + $0xa00] sm:$0xff]
    %v353 = vld [vmem:[%s1 + $0xa08] sm:$0xff]
    %v354 = vld [vmem:[%s1 + $0xa10] sm:$0xff]
    %v355 = vld [vmem:[%s1 + $0xa18] sm:$0xff]
    %v356 = vld [vmem:[%s1 + $0xa20] sm:$0xff]
    %v357 = vld [vmem:[%s1 + $0xa28] sm:$0xff]
    %v358 = vld [vmem:[%s1 + $0xa30] sm:$0xff]
    %v359 = vld [vmem:[%s1 + $0xa38] sm:$0xff]
    %v360 = vld [vmem:[%s1 + $0xa40] sm:$0xff]
    %v361 = vld [vmem:[%s1 + $0xa48] sm:$0xff]
    %v362 = vld [vmem:[%s1 + $0xa50] sm:$0xff]
    %v363 = vld [vmem:[%s1 + $0xa58] sm:$0xff]
    %v364 = vld [vmem:[%s1 + $0xa60] sm:$0xff]
    %v365 = vld [vmem:[%s1 + $0xa68] sm:$0xff]
    %v366 = vld [vmem:[%s1 + $0xa70] sm:$0xff]
    %v367 = vld [vmem:[%s1 + $0xa78] sm:$0xff]
    %v368 = vld [vmem:[%s1 + $0xa80] sm:$0xff]
    %v369 = vld [vmem:[%s1 + $0xa88] sm:$0xff]
    %v370 = vld [vmem:[%s1 + $0xa90] sm:$0xff]
    %v371 = vld [vmem:[%s1 + $0xa98] sm:$0xff]
    %v372 = vld [vmem:[%s1 + $0xaa0] sm:$0xff]
    %v373 = vld [vmem:[%s1 + $0xaa8] sm:$0xff]
    %v374 = vld [vmem:[%s1 + $0xab0] sm:$0xff]
    %v375 = vld [vmem:[%s1 + $0xab8] sm:$0xff]
    %v376 = vld [vmem:[%s1 + $0xac0] sm:$0xff]
    %v377 = vld [vmem:[%s1 + $0xac8] sm:$0xff]
    %v378 = vld [vmem:[%s1 + $0xad0] sm:$0xff]
    %v379 = vld [vmem:[%s1 + $0xad8] sm:$0xff]
    %v380 = vld [vmem:[%s1 + $0xae0] sm:$0xff]
    %v381 = vld [vmem:[%s1 + $0xae8] sm:$0xff]
    %v382 = vld [vmem:[%s1 + $0xaf0] sm:$0xff]
    %v383 = vld [vmem:[%s1 + $0xaf8] sm:$0xff]
    %v384 = vld [vmem:[%s1 + $0xb00] sm:$0xff]
    %v385 = vld [vmem:[%s1 + $0xb08] sm:$0xff]
    %v386 = vld [vmem:[%s1 + $0xb10] sm:$0xff]
    %v387 = vld [vmem:[%s1 + $0xb18] sm:$0xff]
    %v388 = vld [vmem:[%s1 + $0xb20] sm:$0xff]
    %v389 = vld [vmem:[%s1 + $0xb28] sm:$0xff]
    %v390 = vld [vmem:[%s1 + $0xb30] sm:$0xff]
    %v391 = vld [vmem:[%s1 + $0xb38] sm:$0xff]
    %v392 = vld [vmem:[%s1 + $0xb40] sm:$0xff]
    %v393 = vld [vmem:[%s1 + $0xb48] sm:$0xff]
    %v394 = vld [vmem:[%s1 + $0xb50] sm:$0xff]
    %v395 = vld [vmem:[%s1 + $0xb58] sm:$0xff]
    %v396 = vld [vmem:[%s1 + $0xb60] sm:$0xff]
    %v397 = vld [vmem:[%s1 + $0xb68] sm:$0xff]
    %v398 = vld [vmem:[%s1 + $0xb70] sm:$0xff]
    %v399 = vld [vmem:[%s1 + $0xb78] sm:$0xff]
    %v400 = vld [vmem:[%s1 + $0xb80] sm:$0xff]
    %v401 = vld [vmem:[%s1 + $0xb88] sm:$0xff]
    %v402 = vld [vmem:[%s1 + $0xb90] sm:$0xff]
    %v403 = vld [vmem:[%s1 + $0xb98] sm:$0xff]
    %v404 = vld [vmem:[%s1 + $0xba0] sm:$0xff]
    %v405 = vld [vmem:[%s1 + $0xba8] sm:$0xff]
    %v406 = vld [vmem:[%s1 + $0xbb0] sm:$0xff]
    %v407 = vld [vmem:[%s1 + $0xbb8] sm:$0xff]
    %v408 = vld [vmem:[%s1 + $0xbc0] sm:$0xff]
    %v409 = vld [vmem:[%s1 + $0xbc8] sm:$0xff]
    %v410 = vld [vmem:[%s1 + $0xbd0] sm:$0xff]
    %v411 = vld [vmem:[%s1 + $0xbd8] sm:$0xff]
    %v412 = vld [vmem:[%s1 + $0xbe0] sm:$0xff]
    %v413 = vld [vmem:[%s1 + $0xbe8] sm:$0xff]
    %v414 = vld [vmem:[%s1 + $0xbf0] sm:$0xff]
    %v415 = vld [vmem:[%s1 + $0xbf8] sm:$0xff]
    %v416 = vld [vmem:[%s1 + $0xc00] sm:$0xff]
    %v417 = vld [vmem:[%s1 + $0xc08] sm:$0xff]
    %v418 = vld [vmem:[%s1 + $0xc10] sm:$0xff]
    %v419 = vld [vmem:[%s1 + $0xc18] sm:$0xff]
    %v420 = vld [vmem:[%s1 + $0xc20] sm:$0xff]
    %v421 = vld [vmem:[%s1 + $0xc28] sm:$0xff]
    %v422 = vld [vmem:[%s1 + $0xc30] sm:$0xff]
    %v423 = vld [vmem:[%s1 + $0xc38] sm:$0xff]
    %v424 = vld [vmem:[%s1 + $0xc40] sm:$0xff]
    %v425 = vld [vmem:[%s1 + $0xc48] sm:$0xff]
    %v426 = vld [vmem:[%s1 + $0xc50] sm:$0xff]
    %v427 = vld [vmem:[%s1 + $0xc58] sm:$0xff]
    %v428 = vld [vmem:[%s1 + $0xc60] sm:$0xff]
    %v429 = vld [vmem:[%s1 + $0xc68] sm:$0xff]
    %v430 = vld [vmem:[%s1 + $0xc70] sm:$0xff]
    %v431 = vld [vmem:[%s1 + $0xc78] sm:$0xff]
    %v432 = vld [vmem:[%s2] sm:$0x3]
    %v434 = vlaneseq
    %v435 = vshrl.u32 %v434, 7
    %v436 = vsub.s32 0, %v435
    %v437 = vrot.slane %v432, %v436
    %v438 = vlaneseq
    %v439 = vshrl.u32 %v438, 7
    %v440 = vsub.s32 1, %v439
    %v441 = vrot.slane %v432, %v440
    %v448 = vcombine.high %v28, %v28
    %v450 = vunpack.c.l.s4 1966171168
    %v451 = vunpack.c.0.s8 %v450
    %v452 = vlaneseq
    %v453 = vshrl.u32 %v452, 7
    %v454 = vsub.s32 %v451, %v453
    %v455 = vrot.slane %v28, %v454
    %v457 = vunpack.c.l.s4 1966171168
    %v458 = vunpack.c.0.s8 %v457
    %v459 = vlaneseq
    %v460 = vshrl.u32 %v459, 7
    %v461 = vsub.s32 %v458, %v460
    %v462 = vrot.slane %v448, %v461
    %v463 = vcombine.high %v455, %v455
    %v464 = vcombine.high %v462, %v462
    %v466 = vunpack.c.l.s4 1966171168
    %v467 = vunpack.c.0.s8 %v466
    %v468 = vlaneseq
    %v469 = vshrl.u32 %v468, 7
    %v470 = vsub.s32 %v467, %v469
    %v471 = vrot.slane %v455, %v470
    %v473 = vunpack.c.l.s4 1966171168
    %v474 = vunpack.c.0.s8 %v473
    %v475 = vlaneseq
    %v476 = vshrl.u32 %v475, 7
    %v477 = vsub.s32 %v474, %v476
    %v478 = vrot.slane %v462, %v477
    %v480 = vunpack.c.l.s4 1966171168
    %v481 = vunpack.c.0.s8 %v480
    %v482 = vlaneseq
    %v483 = vshrl.u32 %v482, 7
    %v484 = vsub.s32 %v481, %v483
    %v485 = vrot.slane %v463, %v484
    %v487 = vunpack.c.l.s4 1966171168
    %v488 = vunpack.c.0.s8 %v487
    %v489 = vlaneseq
    %v490 = vshrl.u32 %v489, 7
    %v491 = vsub.s32 %v488, %v490
    %v492 = vrot.slane %v464, %v491
    %v493 = vcombine.high %v471, %v471
    %v494 = vcombine.high %v478, %v478
    %v495 = vcombine.high %v485, %v485
    %v496 = vcombine.high %v492, %v492
    %v497 = vcombine.high %v29, %v29
    %v499 = vunpack.c.l.s4 1966171168
    %v500 = vunpack.c.0.s8 %v499
    %v501 = vlaneseq
    %v502 = vshrl.u32 %v501, 7
    %v503 = vsub.s32 %v500, %v502
    %v504 = vrot.slane %v29, %v503
    %v506 = vunpack.c.l.s4 1966171168
    %v507 = vunpack.c.0.s8 %v506
    %v508 = vlaneseq
    %v509 = vshrl.u32 %v508, 7
    %v510 = vsub.s32 %v507, %v509
    %v511 = vrot.slane %v497, %v510
    %v512 = vcombine.high %v504, %v504
    %v513 = vcombine.high %v511, %v511
    %v515 = vunpack.c.l.s4 1966171168
    %v516 = vunpack.c.0.s8 %v515
    %v517 = vlaneseq
    %v518 = vshrl.u32 %v517, 7
    %v519 = vsub.s32 %v516, %v518
    %v520 = vrot.slane %v504, %v519
    %v522 = vunpack.c.l.s4 1966171168
    %v523 = vunpack.c.0.s8 %v522
    %v524 = vlaneseq
    %v525 = vshrl.u32 %v524, 7
    %v526 = vsub.s32 %v523, %v525
    %v527 = vrot.slane %v511, %v526
    %v529 = vunpack.c.l.s4 1966171168
    %v530 = vunpack.c.0.s8 %v529
    %v531 = vlaneseq
    %v532 = vshrl.u32 %v531, 7
    %v533 = vsub.s32 %v530, %v532
    %v534 = vrot.slane %v512, %v533
    %v536 = vunpack.c.l.s4 1966171168
    %v537 = vunpack.c.0.s8 %v536
    %v538 = vlaneseq
    %v539 = vshrl.u32 %v538, 7
    %v540 = vsub.s32 %v537, %v539
    %v541 = vrot.slane %v513, %v540
    %v542 = vcombine.high %v520, %v520
    %v543 = vcombine.high %v527, %v527
    %v544 = vcombine.high %v534, %v534
    %v545 = vcombine.high %v541, %v541
    %v546 = vcombine.high %v30, %v30
    %v548 = vunpack.c.l.s4 1966171168
    %v549 = vunpack.c.0.s8 %v548
    %v550 = vlaneseq
    %v551 = vshrl.u32 %v550, 7
    %v552 = vsub.s32 %v549, %v551
    %v553 = vrot.slane %v30, %v552
    %v555 = vunpack.c.l.s4 1966171168
    %v556 = vunpack.c.0.s8 %v555
    %v557 = vlaneseq
    %v558 = vshrl.u32 %v557, 7
    %v559 = vsub.s32 %v556, %v558
    %v560 = vrot.slane %v546, %v559
    %v561 = vcombine.high %v553, %v553
    %v562 = vcombine.high %v560, %v560
    %v564 = vunpack.c.l.s4 1966171168
    %v565 = vunpack.c.0.s8 %v564
    %v566 = vlaneseq
    %v567 = vshrl.u32 %v566, 7
    %v568 = vsub.s32 %v565, %v567
    %v569 = vrot.slane %v553, %v568
    %v571 = vunpack.c.l.s4 1966171168
    %v572 = vunpack.c.0.s8 %v571
    %v573 = vlaneseq
    %v574 = vshrl.u32 %v573, 7
    %v575 = vsub.s32 %v572, %v574
    %v576 = vrot.slane %v560, %v575
    %v578 = vunpack.c.l.s4 1966171168
    %v579 = vunpack.c.0.s8 %v578
    %v580 = vlaneseq
    %v581 = vshrl.u32 %v580, 7
    %v582 = vsub.s32 %v579, %v581
    %v583 = vrot.slane %v561, %v582
    %v585 = vunpack.c.l.s4 1966171168
    %v586 = vunpack.c.0.s8 %v585
    %v587 = vlaneseq
    %v588 = vshrl.u32 %v587, 7
    %v589 = vsub.s32 %v586, %v588
    %v590 = vrot.slane %v562, %v589
    %v591 = vcombine.high %v569, %v569
    %v592 = vcombine.high %v576, %v576
    %v593 = vcombine.high %v583, %v583
    %v594 = vcombine.high %v590, %v590
    %v596 = vunpack.c.l.s4 1966171168
    %v597 = vunpack.c.0.s8 %v596
    %v598 = vlaneseq
    %v599 = vshrl.u32 %v598, 7
    %v600 = vsub.s32 %v597, %v599
    %v601 = vrot.slane %v31, %v600
    %v603 = vunpack.c.l.s4 1966171168
    %v604 = vunpack.c.0.s8 %v603
    %v605 = vlaneseq
    %v606 = vshrl.u32 %v605, 7
    %v607 = vsub.s32 %v604, %v606
    %v608 = vrot.slane %v601, %v607
    %v1034 = vunpack.c.l.b16 %v32
    %v1035 = vunpack.c.h.b16 %v32
    %v1036 = vunpack.c.l.b16 %v33
    %v1037 = vunpack.c.h.b16 %v33
    %v1038 = vunpack.c.l.b16 %v34
    %v1039 = vunpack.c.h.b16 %v34
    %v1040 = vunpack.c.l.b16 %v35
    %v1041 = vunpack.c.h.b16 %v35
    %v1042 = vunpack.c.l.b16 %v36
    %v1043 = vunpack.c.h.b16 %v36
    %v1044 = vunpack.c.l.b16 %v37
    %v1045 = vunpack.c.h.b16 %v37
    %v1046 = vunpack.c.l.b16 %v38
    %v1047 = vunpack.c.h.b16 %v38
    %v1048 = vunpack.c.l.b16 %v39
    %v1049 = vunpack.c.h.b16 %v39
    %v1050 = vunpack.c.l.b16 %v40
    %v1051 = vunpack.c.h.b16 %v40
    %v1052 = vunpack.c.l.b16 %v41
    %v1053 = vunpack.c.h.b16 %v41
    %v1054 = vunpack.c.l.b16 %v42
    %v1055 = vunpack.c.h.b16 %v42
    %v1056 = vunpack.c.l.b16 %v43
    %v1057 = vunpack.c.h.b16 %v43
    %v1058 = vunpack.c.l.b16 %v44
    %v1059 = vunpack.c.h.b16 %v44
    %v1060 = vunpack.c.l.b16 %v45
    %v1061 = vunpack.c.h.b16 %v45
    %v1062 = vunpack.c.l.b16 %v46
    %v1063 = vunpack.c.h.b16 %v46
    %v1064 = vunpack.c.l.b16 %v47
    %v1065 = vunpack.c.h.b16 %v47
    %v1066 = vunpack.c.l.b16 %v48
    %v1067 = vunpack.c.h.b16 %v48
    %v1068 = vunpack.c.l.b16 %v49
    %v1069 = vunpack.c.h.b16 %v49
    %v1070 = vunpack.c.l.b16 %v50
    %v1071 = vunpack.c.h.b16 %v50
    %v1072 = vunpack.c.l.b16 %v51
    %v1073 = vunpack.c.h.b16 %v51
    %v1074 = vunpack.c.l.b16 %v52
    %v1075 = vunpack.c.h.b16 %v52
    %v1076 = vunpack.c.l.b16 %v53
    %v1077 = vunpack.c.h.b16 %v53
    %v1078 = vunpack.c.l.b16 %v54
    %v1079 = vunpack.c.h.b16 %v54
    %v1080 = vunpack.c.l.b16 %v55
    %v1081 = vunpack.c.h.b16 %v55
    %v1082 = vunpack.c.l.b16 %v56
    %v1083 = vunpack.c.h.b16 %v56
    %v1084 = vunpack.c.l.b16 %v57
    %v1085 = vunpack.c.h.b16 %v57
    %v1086 = vunpack.c.l.b16 %v58
    %v1087 = vunpack.c.h.b16 %v58
    %v1088 = vunpack.c.l.b16 %v59
    %v1089 = vunpack.c.h.b16 %v59
    %v1090 = vunpack.c.l.b16 %v60
    %v1091 = vunpack.c.h.b16 %v60
    %v1092 = vunpack.c.l.b16 %v61
    %v1093 = vunpack.c.h.b16 %v61
    %v1094 = vunpack.c.l.b16 %v62
    %v1095 = vunpack.c.h.b16 %v62
    %v1096 = vunpack.c.l.b16 %v63
    %v1097 = vunpack.c.h.b16 %v63
    %v1098 = vunpack.c.l.b16 %v64
    %v1099 = vunpack.c.h.b16 %v64
    %v1100 = vunpack.c.l.b16 %v65
    %v1101 = vunpack.c.h.b16 %v65
    %v1102 = vunpack.c.l.b16 %v66
    %v1103 = vunpack.c.h.b16 %v66
    %v1104 = vunpack.c.l.b16 %v67
    %v1105 = vunpack.c.h.b16 %v67
    %v1106 = vunpack.c.l.b16 %v68
    %v1107 = vunpack.c.h.b16 %v68
    %v1108 = vunpack.c.l.b16 %v69
    %v1109 = vunpack.c.h.b16 %v69
    %v1110 = vunpack.c.l.b16 %v70
    %v1111 = vunpack.c.h.b16 %v70
    %v1112 = vunpack.c.l.b16 %v71
    %v1113 = vunpack.c.h.b16 %v71
    %v1114 = vunpack.c.l.b16 %v72
    %v1115 = vunpack.c.h.b16 %v72
    %v1116 = vunpack.c.l.b16 %v73
    %v1117 = vunpack.c.h.b16 %v73
    %v1118 = vunpack.c.l.b16 %v74
    %v1119 = vunpack.c.h.b16 %v74
    %v1120 = vunpack.c.l.b16 %v75
    %v1121 = vunpack.c.h.b16 %v75
    %v1122 = vunpack.c.l.b16 %v76
    %v1123 = vunpack.c.h.b16 %v76
    %v1124 = vunpack.c.l.b16 %v77
    %v1125 = vunpack.c.h.b16 %v77
    %v1126 = vunpack.c.l.b16 %v78
    %v1127 = vunpack.c.h.b16 %v78
    %v1128 = vunpack.c.l.b16 %v79
    %v1129 = vunpack.c.h.b16 %v79
    %v1130 = vunpack.c.l.b16 %v80
    %v1131 = vunpack.c.h.b16 %v80
    %v1132 = vunpack.c.l.b16 %v81
    %v1133 = vunpack.c.h.b16 %v81
    %v1134 = vunpack.c.l.b16 %v82
    %v1135 = vunpack.c.h.b16 %v82
    %v1136 = vunpack.c.l.b16 %v83
    %v1137 = vunpack.c.h.b16 %v83
    %v1138 = vunpack.c.l.b16 %v84
    %v1139 = vunpack.c.h.b16 %v84
    %v1140 = vunpack.c.l.b16 %v85
    %v1141 = vunpack.c.h.b16 %v85
    %v1142 = vunpack.c.l.b16 %v86
    %v1143 = vunpack.c.h.b16 %v86
    %v1144 = vunpack.c.l.b16 %v87
    %v1145 = vunpack.c.h.b16 %v87
    %v1146 = vunpack.c.l.b16 %v88
    %v1147 = vunpack.c.h.b16 %v88
    %v1148 = vunpack.c.l.b16 %v89
    %v1149 = vunpack.c.h.b16 %v89
    %v1150 = vunpack.c.l.b16 %v90
    %v1151 = vunpack.c.h.b16 %v90
    %v1152 = vunpack.c.l.b16 %v91
    %v1153 = vunpack.c.h.b16 %v91
    %v1154 = vunpack.c.l.b16 %v92
    %v1155 = vunpack.c.h.b16 %v92
    %v1156 = vunpack.c.l.b16 %v93
    %v1157 = vunpack.c.h.b16 %v93
    %v1158 = vunpack.c.l.b16 %v94
    %v1159 = vunpack.c.h.b16 %v94
    %v1160 = vunpack.c.l.b16 %v95
    %v1161 = vunpack.c.h.b16 %v95
    %v1162 = vunpack.c.l.b16 %v96
    %v1163 = vunpack.c.h.b16 %v96
    %v1164 = vunpack.c.l.b16 %v97
    %v1165 = vunpack.c.h.b16 %v97
    %v1166 = vunpack.c.l.b16 %v98
    %v1167 = vunpack.c.h.b16 %v98
    %v1168 = vunpack.c.l.b16 %v99
    %v1169 = vunpack.c.h.b16 %v99
    %v1170 = vunpack.c.l.b16 %v100
    %v1171 = vunpack.c.h.b16 %v100
    %v1172 = vunpack.c.l.b16 %v101
    %v1173 = vunpack.c.h.b16 %v101
    %v1174 = vunpack.c.l.b16 %v102
    %v1175 = vunpack.c.h.b16 %v102
    %v1176 = vunpack.c.l.b16 %v103
    %v1177 = vunpack.c.h.b16 %v103
    %v1178 = vunpack.c.l.b16 %v104
    %v1179 = vunpack.c.h.b16 %v104
    %v1180 = vunpack.c.l.b16 %v105
    %v1181 = vunpack.c.h.b16 %v105
    %v1182 = vunpack.c.l.b16 %v106
    %v1183 = vunpack.c.h.b16 %v106
    %v1184 = vunpack.c.l.b16 %v107
    %v1185 = vunpack.c.h.b16 %v107
    %v1186 = vunpack.c.l.b16 %v108
    %v1187 = vunpack.c.h.b16 %v108
    %v1188 = vunpack.c.l.b16 %v109
    %v1189 = vunpack.c.h.b16 %v109
    %v1190 = vunpack.c.l.b16 %v110
    %v1191 = vunpack.c.h.b16 %v110
    %v1192 = vunpack.c.l.b16 %v111
    %v1193 = vunpack.c.h.b16 %v111
    %v1194 = vunpack.c.l.b16 %v112
    %v1195 = vunpack.c.h.b16 %v112
    %v1196 = vunpack.c.l.b16 %v113
    %v1197 = vunpack.c.h.b16 %v113
    %v1198 = vunpack.c.l.b16 %v114
    %v1199 = vunpack.c.h.b16 %v114
    %v1200 = vunpack.c.l.b16 %v115
    %v1201 = vunpack.c.h.b16 %v115
    %v1202 = vunpack.c.l.b16 %v116
    %v1203 = vunpack.c.h.b16 %v116
    %v1204 = vunpack.c.l.b16 %v117
    %v1205 = vunpack.c.h.b16 %v117
    %v1206 = vunpack.c.l.b16 %v118
    %v1207 = vunpack.c.h.b16 %v118
    %v1208 = vunpack.c.l.b16 %v119
    %v1209 = vunpack.c.h.b16 %v119
    %v1210 = vunpack.c.l.b16 %v120
    %v1211 = vunpack.c.h.b16 %v120
    %v1212 = vunpack.c.l.b16 %v121
    %v1213 = vunpack.c.h.b16 %v121
    %v1214 = vunpack.c.l.b16 %v122
    %v1215 = vunpack.c.h.b16 %v122
    %v1216 = vunpack.c.l.b16 %v123
    %v1217 = vunpack.c.h.b16 %v123
    %v1218 = vunpack.c.l.b16 %v124
    %v1219 = vunpack.c.h.b16 %v124
    %v1220 = vunpack.c.l.b16 %v125
    %v1221 = vunpack.c.h.b16 %v125
    %v1222 = vunpack.c.l.b16 %v126
    %v1223 = vunpack.c.h.b16 %v126
    %v1224 = vunpack.c.l.b16 %v127
    %v1225 = vunpack.c.h.b16 %v127
    %v1226 = vunpack.c.l.b16 %v128
    %v1227 = vunpack.c.h.b16 %v128
    %v1228 = vunpack.c.l.b16 %v129
    %v1229 = vunpack.c.h.b16 %v129
    %v1230 = vunpack.c.l.b16 %v130
    %v1231 = vunpack.c.h.b16 %v130
    %v1232 = vunpack.c.l.b16 %v131
    %v1233 = vunpack.c.h.b16 %v131
    %v1234 = vunpack.c.l.b16 %v132
    %v1235 = vunpack.c.h.b16 %v132
    %v1236 = vunpack.c.l.b16 %v133
    %v1237 = vunpack.c.h.b16 %v133
    %v1238 = vunpack.c.l.b16 %v134
    %v1239 = vunpack.c.h.b16 %v134
    %v1240 = vunpack.c.l.b16 %v135
    %v1241 = vunpack.c.h.b16 %v135
    %v1242 = vunpack.c.l.b16 %v136
    %v1243 = vunpack.c.h.b16 %v136
    %v1244 = vunpack.c.l.b16 %v137
    %v1245 = vunpack.c.h.b16 %v137
    %v1246 = vunpack.c.l.b16 %v138
    %v1247 = vunpack.c.h.b16 %v138
    %v1248 = vunpack.c.l.b16 %v139
    %v1249 = vunpack.c.h.b16 %v139
    %v1250 = vunpack.c.l.b16 %v140
    %v1251 = vunpack.c.h.b16 %v140
    %v1252 = vunpack.c.l.b16 %v141
    %v1253 = vunpack.c.h.b16 %v141
    %v1254 = vunpack.c.l.b16 %v142
    %v1255 = vunpack.c.h.b16 %v142
    %v1256 = vunpack.c.l.b16 %v143
    %v1257 = vunpack.c.h.b16 %v143
    %v1258 = vunpack.c.l.b16 %v144
    %v1259 = vunpack.c.h.b16 %v144
    %v1260 = vunpack.c.l.b16 %v145
    %v1261 = vunpack.c.h.b16 %v145
    %v1262 = vunpack.c.l.b16 %v146
    %v1263 = vunpack.c.h.b16 %v146
    %v1264 = vunpack.c.l.b16 %v147
    %v1265 = vunpack.c.h.b16 %v147
    %v1266 = vunpack.c.l.b16 %v148
    %v1267 = vunpack.c.h.b16 %v148
    %v1268 = vunpack.c.l.b16 %v149
    %v1269 = vunpack.c.h.b16 %v149
    %v1270 = vunpack.c.l.b16 %v150
    %v1271 = vunpack.c.h.b16 %v150
    %v1272 = vunpack.c.l.b16 %v151
    %v1273 = vunpack.c.h.b16 %v151
    %v1274 = vunpack.c.l.b16 %v152
    %v1275 = vunpack.c.h.b16 %v152
    %v1276 = vunpack.c.l.b16 %v153
    %v1277 = vunpack.c.h.b16 %v153
    %v1278 = vunpack.c.l.b16 %v154
    %v1279 = vunpack.c.h.b16 %v154
    %v1280 = vunpack.c.l.b16 %v155
    %v1281 = vunpack.c.h.b16 %v155
    %v1282 = vunpack.c.l.b16 %v156
    %v1283 = vunpack.c.h.b16 %v156
    %v1284 = vunpack.c.l.b16 %v157
    %v1285 = vunpack.c.h.b16 %v157
    %v1286 = vunpack.c.l.b16 %v158
    %v1287 = vunpack.c.h.b16 %v158
    %v1288 = vunpack.c.l.b16 %v159
    %v1289 = vunpack.c.h.b16 %v159
    %v1290 = vunpack.c.l.b16 %v160
    %v1291 = vunpack.c.h.b16 %v160
    %v1292 = vunpack.c.l.b16 %v161
    %v1293 = vunpack.c.h.b16 %v161
    %v1294 = vunpack.c.l.b16 %v162
    %v1295 = vunpack.c.h.b16 %v162
    %v1296 = vunpack.c.l.b16 %v163
    %v1297 = vunpack.c.h.b16 %v163
    %v1298 = vunpack.c.l.b16 %v164
    %v1299 = vunpack.c.h.b16 %v164
    %v1300 = vunpack.c.l.b16 %v165
    %v1301 = vunpack.c.h.b16 %v165
    %v1302 = vunpack.c.l.b16 %v166
    %v1303 = vunpack.c.h.b16 %v166
    %v1304 = vunpack.c.l.b16 %v167
    %v1305 = vunpack.c.h.b16 %v167
    %v1306 = vunpack.c.l.b16 %v168
    %v1307 = vunpack.c.h.b16 %v168
    %v1308 = vunpack.c.l.b16 %v169
    %v1309 = vunpack.c.h.b16 %v169
    %v1310 = vunpack.c.l.b16 %v170
    %v1311 = vunpack.c.h.b16 %v170
    %v1312 = vunpack.c.l.b16 %v171
    %v1313 = vunpack.c.h.b16 %v171
    %v1314 = vunpack.c.l.b16 %v172
    %v1315 = vunpack.c.h.b16 %v172
    %v1316 = vunpack.c.l.b16 %v173
    %v1317 = vunpack.c.h.b16 %v173
    %v1318 = vunpack.c.l.b16 %v174
    %v1319 = vunpack.c.h.b16 %v174
    %v1320 = vunpack.c.l.b16 %v175
    %v1321 = vunpack.c.h.b16 %v175
    %v1322 = vunpack.c.l.b16 %v176
    %v1323 = vunpack.c.h.b16 %v176
    %v1324 = vunpack.c.l.b16 %v177
    %v1325 = vunpack.c.h.b16 %v177
    %v1326 = vunpack.c.l.b16 %v178
    %v1327 = vunpack.c.h.b16 %v178
    %v1328 = vunpack.c.l.b16 %v179
    %v1329 = vunpack.c.h.b16 %v179
    %v1330 = vunpack.c.l.b16 %v180
    %v1331 = vunpack.c.h.b16 %v180
    %v1332 = vunpack.c.l.b16 %v181
    %v1333 = vunpack.c.h.b16 %v181
    %v1334 = vunpack.c.l.b16 %v182
    %v1335 = vunpack.c.h.b16 %v182
    %v1336 = vunpack.c.l.b16 %v183
    %v1337 = vunpack.c.h.b16 %v183
    %v1338 = vunpack.c.l.b16 %v184
    %v1339 = vunpack.c.h.b16 %v184
    %v1340 = vunpack.c.l.b16 %v185
    %v1341 = vunpack.c.h.b16 %v185
    %v1342 = vunpack.c.l.b16 %v186
    %v1343 = vunpack.c.h.b16 %v186
    %v1344 = vunpack.c.l.b16 %v187
    %v1345 = vunpack.c.h.b16 %v187
    %v1346 = vunpack.c.l.b16 %v188
    %v1347 = vunpack.c.h.b16 %v188
    %v1348 = vunpack.c.l.b16 %v189
    %v1349 = vunpack.c.h.b16 %v189
    %v1350 = vunpack.c.l.b16 %v190
    %v1351 = vunpack.c.h.b16 %v190
    %v1352 = vunpack.c.l.b16 %v191
    %v1353 = vunpack.c.h.b16 %v191
    %v1354 = vunpack.c.l.b16 %v192
    %v1355 = vunpack.c.h.b16 %v192
    %v1356 = vunpack.c.l.b16 %v193
    %v1357 = vunpack.c.h.b16 %v193
    %v1358 = vunpack.c.l.b16 %v194
    %v1359 = vunpack.c.h.b16 %v194
    %v1360 = vunpack.c.l.b16 %v195
    %v1361 = vunpack.c.h.b16 %v195
    %v1362 = vunpack.c.l.b16 %v196
    %v1363 = vunpack.c.h.b16 %v196
    %v1364 = vunpack.c.l.b16 %v197
    %v1365 = vunpack.c.h.b16 %v197
    %v1366 = vunpack.c.l.b16 %v198
    %v1367 = vunpack.c.h.b16 %v198
    %v1368 = vunpack.c.l.b16 %v199
    %v1369 = vunpack.c.h.b16 %v199
    %v1370 = vunpack.c.l.b16 %v200
    %v1371 = vunpack.c.h.b16 %v200
    %v1372 = vunpack.c.l.b16 %v201
    %v1373 = vunpack.c.h.b16 %v201
    %v1374 = vunpack.c.l.b16 %v202
    %v1375 = vunpack.c.h.b16 %v202
    %v1376 = vunpack.c.l.b16 %v203
    %v1377 = vunpack.c.h.b16 %v203
    %v1378 = vunpack.c.l.b16 %v204
    %v1379 = vunpack.c.h.b16 %v204
    %v1380 = vunpack.c.l.b16 %v205
    %v1381 = vunpack.c.h.b16 %v205
    %v1382 = vunpack.c.l.b16 %v206
    %v1383 = vunpack.c.h.b16 %v206
    %v1384 = vunpack.c.l.b16 %v207
    %v1385 = vunpack.c.h.b16 %v207
    %v1386 = vunpack.c.l.b16 %v208
    %v1387 = vunpack.c.h.b16 %v208
    %v1388 = vunpack.c.l.b16 %v209
    %v1389 = vunpack.c.h.b16 %v209
    %v1390 = vunpack.c.l.b16 %v210
    %v1391 = vunpack.c.h.b16 %v210
    %v1392 = vunpack.c.l.b16 %v211
    %v1393 = vunpack.c.h.b16 %v211
    %v1394 = vunpack.c.l.b16 %v212
    %v1395 = vunpack.c.h.b16 %v212
    %v1396 = vunpack.c.l.b16 %v213
    %v1397 = vunpack.c.h.b16 %v213
    %v1398 = vunpack.c.l.b16 %v214
    %v1399 = vunpack.c.h.b16 %v214
    %v1400 = vunpack.c.l.b16 %v215
    %v1401 = vunpack.c.h.b16 %v215
    %v1402 = vunpack.c.l.b16 %v216
    %v1403 = vunpack.c.h.b16 %v216
    %v1404 = vunpack.c.l.b16 %v217
    %v1405 = vunpack.c.h.b16 %v217
    %v1406 = vunpack.c.l.b16 %v218
    %v1407 = vunpack.c.h.b16 %v218
    %v1408 = vunpack.c.l.b16 %v219
    %v1409 = vunpack.c.h.b16 %v219
    %v1410 = vunpack.c.l.b16 %v220
    %v1411 = vunpack.c.h.b16 %v220
    %v1412 = vunpack.c.l.b16 %v221
    %v1413 = vunpack.c.h.b16 %v221
    %v1414 = vunpack.c.l.b16 %v222
    %v1415 = vunpack.c.h.b16 %v222
    %v1416 = vunpack.c.l.b16 %v223
    %v1417 = vunpack.c.h.b16 %v223
    %v1418 = vunpack.c.l.b16 %v224
    %v1419 = vunpack.c.h.b16 %v224
    %v1420 = vunpack.c.l.b16 %v225
    %v1421 = vunpack.c.h.b16 %v225
    %v1422 = vunpack.c.l.b16 %v226
    %v1423 = vunpack.c.h.b16 %v226
    %v1424 = vunpack.c.l.b16 %v227
    %v1425 = vunpack.c.h.b16 %v227
    %v1426 = vunpack.c.l.b16 %v228
    %v1427 = vunpack.c.h.b16 %v228
    %v1428 = vunpack.c.l.b16 %v229
    %v1429 = vunpack.c.h.b16 %v229
    %v1430 = vunpack.c.l.b16 %v230
    %v1431 = vunpack.c.h.b16 %v230
    %v1432 = vunpack.c.l.b16 %v231
    %v1433 = vunpack.c.h.b16 %v231
    %v1434 = vunpack.c.l.b16 %v232
    %v1435 = vunpack.c.h.b16 %v232
    %v1436 = vunpack.c.l.b16 %v233
    %v1437 = vunpack.c.h.b16 %v233
    %v1438 = vunpack.c.l.b16 %v234
    %v1439 = vunpack.c.h.b16 %v234
    %v1440 = vunpack.c.l.b16 %v235
    %v1441 = vunpack.c.h.b16 %v235
    %v1442 = vunpack.c.l.b16 %v236
    %v1443 = vunpack.c.h.b16 %v236
    %v1444 = vunpack.c.l.b16 %v237
    %v1445 = vunpack.c.h.b16 %v237
    %v1446 = vunpack.c.l.b16 %v238
    %v1447 = vunpack.c.h.b16 %v238
    %v1448 = vunpack.c.l.b16 %v239
    %v1449 = vunpack.c.h.b16 %v239
    %v1450 = vunpack.c.l.b16 %v240
    %v1451 = vunpack.c.h.b16 %v240
    %v1452 = vunpack.c.l.b16 %v241
    %v1453 = vunpack.c.h.b16 %v241
    %v1454 = vunpack.c.l.b16 %v242
    %v1455 = vunpack.c.h.b16 %v242
    %v1456 = vunpack.c.l.b16 %v243
    %v1457 = vunpack.c.h.b16 %v243
    %v1458 = vunpack.c.l.b16 %v244
    %v1459 = vunpack.c.h.b16 %v244
    %v1460 = vunpack.c.l.b16 %v245
    %v1461 = vunpack.c.h.b16 %v245
    %v1462 = vunpack.c.l.b16 %v246
    %v1463 = vunpack.c.h.b16 %v246
    %v1464 = vunpack.c.l.b16 %v247
    %v1465 = vunpack.c.h.b16 %v247
    %v1466 = vunpack.c.l.b16 %v248
    %v1467 = vunpack.c.h.b16 %v248
    %v1468 = vunpack.c.l.b16 %v249
    %v1469 = vunpack.c.h.b16 %v249
    %v1470 = vunpack.c.l.b16 %v250
    %v1471 = vunpack.c.h.b16 %v250
    %v1472 = vunpack.c.l.b16 %v251
    %v1473 = vunpack.c.h.b16 %v251
    %v1474 = vunpack.c.l.b16 %v252
    %v1475 = vunpack.c.h.b16 %v252
    %v1476 = vunpack.c.l.b16 %v253
    %v1477 = vunpack.c.h.b16 %v253
    %v1478 = vunpack.c.l.b16 %v254
    %v1479 = vunpack.c.h.b16 %v254
    %v1480 = vunpack.c.l.b16 %v255
    %v1481 = vunpack.c.h.b16 %v255
    %v1482 = vunpack.c.l.b16 %v256
    %v1483 = vunpack.c.h.b16 %v256
    %v1484 = vunpack.c.l.b16 %v257
    %v1485 = vunpack.c.h.b16 %v257
    %v1486 = vunpack.c.l.b16 %v258
    %v1487 = vunpack.c.h.b16 %v258
    %v1488 = vunpack.c.l.b16 %v259
    %v1489 = vunpack.c.h.b16 %v259
    %v1490 = vunpack.c.l.b16 %v260
    %v1491 = vunpack.c.h.b16 %v260
    %v1492 = vunpack.c.l.b16 %v261
    %v1493 = vunpack.c.h.b16 %v261
    %v1494 = vunpack.c.l.b16 %v262
    %v1495 = vunpack.c.h.b16 %v262
    %v1496 = vunpack.c.l.b16 %v263
    %v1497 = vunpack.c.h.b16 %v263
    %v1498 = vunpack.c.l.b16 %v264
    %v1499 = vunpack.c.h.b16 %v264
    %v1500 = vunpack.c.l.b16 %v265
    %v1501 = vunpack.c.h.b16 %v265
    %v1502 = vunpack.c.l.b16 %v266
    %v1503 = vunpack.c.h.b16 %v266
    %v1504 = vunpack.c.l.b16 %v267
    %v1505 = vunpack.c.h.b16 %v267
    %v1506 = vunpack.c.l.b16 %v268
    %v1507 = vunpack.c.h.b16 %v268
    %v1508 = vunpack.c.l.b16 %v269
    %v1509 = vunpack.c.h.b16 %v269
    %v1510 = vunpack.c.l.b16 %v270
    %v1511 = vunpack.c.h.b16 %v270
    %v1512 = vunpack.c.l.b16 %v271
    %v1513 = vunpack.c.h.b16 %v271
    %v1514 = vunpack.c.l.b16 %v272
    %v1515 = vunpack.c.h.b16 %v272
    %v1516 = vunpack.c.l.b16 %v273
    %v1517 = vunpack.c.h.b16 %v273
    %v1518 = vunpack.c.l.b16 %v274
    %v1519 = vunpack.c.h.b16 %v274
    %v1520 = vunpack.c.l.b16 %v275
    %v1521 = vunpack.c.h.b16 %v275
    %v1522 = vunpack.c.l.b16 %v276
    %v1523 = vunpack.c.h.b16 %v276
    %v1524 = vunpack.c.l.b16 %v277
    %v1525 = vunpack.c.h.b16 %v277
    %v1526 = vunpack.c.l.b16 %v278
    %v1527 = vunpack.c.h.b16 %v278
    %v1528 = vunpack.c.l.b16 %v279
    %v1529 = vunpack.c.h.b16 %v279
    %v1530 = vunpack.c.l.b16 %v280
    %v1531 = vunpack.c.h.b16 %v280
    %v1532 = vunpack.c.l.b16 %v281
    %v1533 = vunpack.c.h.b16 %v281
    %v1534 = vunpack.c.l.b16 %v282
    %v1535 = vunpack.c.h.b16 %v282
    %v1536 = vunpack.c.l.b16 %v283
    %v1537 = vunpack.c.h.b16 %v283
    %v1538 = vunpack.c.l.b16 %v284
    %v1539 = vunpack.c.h.b16 %v284
    %v1540 = vunpack.c.l.b16 %v285
    %v1541 = vunpack.c.h.b16 %v285
    %v1542 = vunpack.c.l.b16 %v286
    %v1543 = vunpack.c.h.b16 %v286
    %v1544 = vunpack.c.l.b16 %v287
    %v1545 = vunpack.c.h.b16 %v287
    %v1546 = vunpack.c.l.b16 %v288
    %v1547 = vunpack.c.h.b16 %v288
    %v1548 = vunpack.c.l.b16 %v289
    %v1549 = vunpack.c.h.b16 %v289
    %v1550 = vunpack.c.l.b16 %v290
    %v1551 = vunpack.c.h.b16 %v290
    %v1552 = vunpack.c.l.b16 %v291
    %v1553 = vunpack.c.h.b16 %v291
    %v1554 = vunpack.c.l.b16 %v292
    %v1555 = vunpack.c.h.b16 %v292
    %v1556 = vunpack.c.l.b16 %v293
    %v1557 = vunpack.c.h.b16 %v293
    %v1558 = vunpack.c.l.b16 %v294
    %v1559 = vunpack.c.h.b16 %v294
    %v1560 = vunpack.c.l.b16 %v295
    %v1561 = vunpack.c.h.b16 %v295
    %v1562 = vunpack.c.l.b16 %v296
    %v1563 = vunpack.c.h.b16 %v296
    %v1564 = vunpack.c.l.b16 %v297
    %v1565 = vunpack.c.h.b16 %v297
    %v1566 = vunpack.c.l.b16 %v298
    %v1567 = vunpack.c.h.b16 %v298
    %v1568 = vunpack.c.l.b16 %v299
    %v1569 = vunpack.c.h.b16 %v299
    %v1570 = vunpack.c.l.b16 %v300
    %v1571 = vunpack.c.h.b16 %v300
    %v1572 = vunpack.c.l.b16 %v301
    %v1573 = vunpack.c.h.b16 %v301
    %v1574 = vunpack.c.l.b16 %v302
    %v1575 = vunpack.c.h.b16 %v302
    %v1576 = vunpack.c.l.b16 %v303
    %v1577 = vunpack.c.h.b16 %v303
    %v1578 = vunpack.c.l.b16 %v304
    %v1579 = vunpack.c.h.b16 %v304
    %v1580 = vunpack.c.l.b16 %v305
    %v1581 = vunpack.c.h.b16 %v305
    %v1582 = vunpack.c.l.b16 %v306
    %v1583 = vunpack.c.h.b16 %v306
    %v1584 = vunpack.c.l.b16 %v307
    %v1585 = vunpack.c.h.b16 %v307
    %v1586 = vunpack.c.l.b16 %v308
    %v1587 = vunpack.c.h.b16 %v308
    %v1588 = vunpack.c.l.b16 %v309
    %v1589 = vunpack.c.h.b16 %v309
    %v1590 = vunpack.c.l.b16 %v310
    %v1591 = vunpack.c.h.b16 %v310
    %v1592 = vunpack.c.l.b16 %v311
    %v1593 = vunpack.c.h.b16 %v311
    %v1594 = vunpack.c.l.b16 %v312
    %v1595 = vunpack.c.h.b16 %v312
    %v1596 = vunpack.c.l.b16 %v313
    %v1597 = vunpack.c.h.b16 %v313
    %v1598 = vunpack.c.l.b16 %v314
    %v1599 = vunpack.c.h.b16 %v314
    %v1600 = vunpack.c.l.b16 %v315
    %v1601 = vunpack.c.h.b16 %v315
    %v1602 = vunpack.c.l.b16 %v316
    %v1603 = vunpack.c.h.b16 %v316
    %v1604 = vunpack.c.l.b16 %v317
    %v1605 = vunpack.c.h.b16 %v317
    %v1606 = vunpack.c.l.b16 %v318
    %v1607 = vunpack.c.h.b16 %v318
    %v1608 = vunpack.c.l.b16 %v319
    %v1609 = vunpack.c.h.b16 %v319
    %v1610 = vunpack.c.l.b16 %v320
    %v1611 = vunpack.c.h.b16 %v320
    %v1612 = vunpack.c.l.b16 %v321
    %v1613 = vunpack.c.h.b16 %v321
    %v1614 = vunpack.c.l.b16 %v322
    %v1615 = vunpack.c.h.b16 %v322
    %v1616 = vunpack.c.l.b16 %v323
    %v1617 = vunpack.c.h.b16 %v323
    %v1618 = vunpack.c.l.b16 %v324
    %v1619 = vunpack.c.h.b16 %v324
    %v1620 = vunpack.c.l.b16 %v325
    %v1621 = vunpack.c.h.b16 %v325
    %v1622 = vunpack.c.l.b16 %v326
    %v1623 = vunpack.c.h.b16 %v326
    %v1624 = vunpack.c.l.b16 %v327
    %v1625 = vunpack.c.h.b16 %v327
    %v1626 = vunpack.c.l.b16 %v328
    %v1627 = vunpack.c.h.b16 %v328
    %v1628 = vunpack.c.l.b16 %v329
    %v1629 = vunpack.c.h.b16 %v329
    %v1630 = vunpack.c.l.b16 %v330
    %v1631 = vunpack.c.h.b16 %v330
    %v1632 = vunpack.c.l.b16 %v331
    %v1633 = vunpack.c.h.b16 %v331
    %v1634 = vunpack.c.l.b16 %v332
    %v1635 = vunpack.c.h.b16 %v332
    %v1636 = vunpack.c.l.b16 %v333
    %v1637 = vunpack.c.h.b16 %v333
    %v1638 = vunpack.c.l.b16 %v334
    %v1639 = vunpack.c.h.b16 %v334
    %v1640 = vunpack.c.l.b16 %v335
    %v1641 = vunpack.c.h.b16 %v335
    %v1642 = vunpack.c.l.b16 %v336
    %v1643 = vunpack.c.h.b16 %v336
    %v1644 = vunpack.c.l.b16 %v337
    %v1645 = vunpack.c.h.b16 %v337
    %v1646 = vunpack.c.l.b16 %v338
    %v1647 = vunpack.c.h.b16 %v338
    %v1648 = vunpack.c.l.b16 %v339
    %v1649 = vunpack.c.h.b16 %v339
    %v1650 = vunpack.c.l.b16 %v340
    %v1651 = vunpack.c.h.b16 %v340
    %v1652 = vunpack.c.l.b16 %v341
    %v1653 = vunpack.c.h.b16 %v341
    %v1654 = vunpack.c.l.b16 %v342
    %v1655 = vunpack.c.h.b16 %v342
    %v1656 = vunpack.c.l.b16 %v343
    %v1657 = vunpack.c.h.b16 %v343
    %v1658 = vunpack.c.l.b16 %v344
    %v1659 = vunpack.c.h.b16 %v344
    %v1660 = vunpack.c.l.b16 %v345
    %v1661 = vunpack.c.h.b16 %v345
    %v1662 = vunpack.c.l.b16 %v346
    %v1663 = vunpack.c.h.b16 %v346
    %v1664 = vunpack.c.l.b16 %v347
    %v1665 = vunpack.c.h.b16 %v347
    %v1666 = vunpack.c.l.b16 %v348
    %v1667 = vunpack.c.h.b16 %v348
    %v1668 = vunpack.c.l.b16 %v349
    %v1669 = vunpack.c.h.b16 %v349
    %v1670 = vunpack.c.l.b16 %v350
    %v1671 = vunpack.c.h.b16 %v350
    %v1672 = vunpack.c.l.b16 %v351
    %v1673 = vunpack.c.h.b16 %v351
    %v1674 = vunpack.c.l.b16 %v352
    %v1675 = vunpack.c.h.b16 %v352
    %v1676 = vunpack.c.l.b16 %v353
    %v1677 = vunpack.c.h.b16 %v353
    %v1678 = vunpack.c.l.b16 %v354
    %v1679 = vunpack.c.h.b16 %v354
    %v1680 = vunpack.c.l.b16 %v355
    %v1681 = vunpack.c.h.b16 %v355
    %v1682 = vunpack.c.l.b16 %v356
    %v1683 = vunpack.c.h.b16 %v356
    %v1684 = vunpack.c.l.b16 %v357
    %v1685 = vunpack.c.h.b16 %v357
    %v1686 = vunpack.c.l.b16 %v358
    %v1687 = vunpack.c.h.b16 %v358
    %v1688 = vunpack.c.l.b16 %v359
    %v1689 = vunpack.c.h.b16 %v359
    %v1690 = vunpack.c.l.b16 %v360
    %v1691 = vunpack.c.h.b16 %v360
    %v1692 = vunpack.c.l.b16 %v361
    %v1693 = vunpack.c.h.b16 %v361
    %v1694 = vunpack.c.l.b16 %v362
    %v1695 = vunpack.c.h.b16 %v362
    %v1696 = vunpack.c.l.b16 %v363
    %v1697 = vunpack.c.h.b16 %v363
    %v1698 = vunpack.c.l.b16 %v364
    %v1699 = vunpack.c.h.b16 %v364
    %v1700 = vunpack.c.l.b16 %v365
    %v1701 = vunpack.c.h.b16 %v365
    %v1702 = vunpack.c.l.b16 %v366
    %v1703 = vunpack.c.h.b16 %v366
    %v1704 = vunpack.c.l.b16 %v367
    %v1705 = vunpack.c.h.b16 %v367
    %v1706 = vunpack.c.l.b16 %v368
    %v1707 = vunpack.c.h.b16 %v368
    %v1708 = vunpack.c.l.b16 %v369
    %v1709 = vunpack.c.h.b16 %v369
    %v1710 = vunpack.c.l.b16 %v370
    %v1711 = vunpack.c.h.b16 %v370
    %v1712 = vunpack.c.l.b16 %v371
    %v1713 = vunpack.c.h.b16 %v371
    %v1714 = vunpack.c.l.b16 %v372
    %v1715 = vunpack.c.h.b16 %v372
    %v1716 = vunpack.c.l.b16 %v373
    %v1717 = vunpack.c.h.b16 %v373
    %v1718 = vunpack.c.l.b16 %v374
    %v1719 = vunpack.c.h.b16 %v374
    %v1720 = vunpack.c.l.b16 %v375
    %v1721 = vunpack.c.h.b16 %v375
    %v1722 = vunpack.c.l.b16 %v376
    %v1723 = vunpack.c.h.b16 %v376
    %v1724 = vunpack.c.l.b16 %v377
    %v1725 = vunpack.c.h.b16 %v377
    %v1726 = vunpack.c.l.b16 %v378
    %v1727 = vunpack.c.h.b16 %v378
    %v1728 = vunpack.c.l.b16 %v379
    %v1729 = vunpack.c.h.b16 %v379
    %v1730 = vunpack.c.l.b16 %v380
    %v1731 = vunpack.c.h.b16 %v380
    %v1732 = vunpack.c.l.b16 %v381
    %v1733 = vunpack.c.h.b16 %v381
    %v1734 = vunpack.c.l.b16 %v382
    %v1735 = vunpack.c.h.b16 %v382
    %v1736 = vunpack.c.l.b16 %v383
    %v1737 = vunpack.c.h.b16 %v383
    %v1738 = vunpack.c.l.b16 %v384
    %v1739 = vunpack.c.h.b16 %v384
    %v1740 = vunpack.c.l.b16 %v385
    %v1741 = vunpack.c.h.b16 %v385
    %v1742 = vunpack.c.l.b16 %v386
    %v1743 = vunpack.c.h.b16 %v386
    %v1744 = vunpack.c.l.b16 %v387
    %v1745 = vunpack.c.h.b16 %v387
    %v1746 = vunpack.c.l.b16 %v388
    %v1747 = vunpack.c.h.b16 %v388
    %v1748 = vunpack.c.l.b16 %v389
    %v1749 = vunpack.c.h.b16 %v389
    %v1750 = vunpack.c.l.b16 %v390
    %v1751 = vunpack.c.h.b16 %v390
    %v1752 = vunpack.c.l.b16 %v391
    %v1753 = vunpack.c.h.b16 %v391
    %v1754 = vunpack.c.l.b16 %v392
    %v1755 = vunpack.c.h.b16 %v392
    %v1756 = vunpack.c.l.b16 %v393
    %v1757 = vunpack.c.h.b16 %v393
    %v1758 = vunpack.c.l.b16 %v394
    %v1759 = vunpack.c.h.b16 %v394
    %v1760 = vunpack.c.l.b16 %v395
    %v1761 = vunpack.c.h.b16 %v395
    %v1762 = vunpack.c.l.b16 %v396
    %v1763 = vunpack.c.h.b16 %v396
    %v1764 = vunpack.c.l.b16 %v397
    %v1765 = vunpack.c.h.b16 %v397
    %v1766 = vunpack.c.l.b16 %v398
    %v1767 = vunpack.c.h.b16 %v398
    %v1768 = vunpack.c.l.b16 %v399
    %v1769 = vunpack.c.h.b16 %v399
    %v1770 = vunpack.c.l.b16 %v400
    %v1771 = vunpack.c.h.b16 %v400
    %v1772 = vunpack.c.l.b16 %v401
    %v1773 = vunpack.c.h.b16 %v401
    %v1774 = vunpack.c.l.b16 %v402
    %v1775 = vunpack.c.h.b16 %v402
    %v1776 = vunpack.c.l.b16 %v403
    %v1777 = vunpack.c.h.b16 %v403
    %v1778 = vunpack.c.l.b16 %v404
    %v1779 = vunpack.c.h.b16 %v404
    %v1780 = vunpack.c.l.b16 %v405
    %v1781 = vunpack.c.h.b16 %v405
    %v1782 = vunpack.c.l.b16 %v406
    %v1783 = vunpack.c.h.b16 %v406
    %v1784 = vunpack.c.l.b16 %v407
    %v1785 = vunpack.c.h.b16 %v407
    %v1786 = vunpack.c.l.b16 %v408
    %v1787 = vunpack.c.h.b16 %v408
    %v1788 = vunpack.c.l.b16 %v409
    %v1789 = vunpack.c.h.b16 %v409
    %v1790 = vunpack.c.l.b16 %v410
    %v1791 = vunpack.c.h.b16 %v410
    %v1792 = vunpack.c.l.b16 %v411
    %v1793 = vunpack.c.h.b16 %v411
    %v1794 = vunpack.c.l.b16 %v412
    %v1795 = vunpack.c.h.b16 %v412
    %v1796 = vunpack.c.l.b16 %v413
    %v1797 = vunpack.c.h.b16 %v413
    %v1798 = vunpack.c.l.b16 %v414
    %v1799 = vunpack.c.h.b16 %v414
    %v1800 = vunpack.c.l.b16 %v415
    %v1801 = vunpack.c.h.b16 %v415
    %v1802 = vunpack.c.l.b16 %v416
    %v1803 = vunpack.c.h.b16 %v416
    %v1804 = vunpack.c.l.b16 %v417
    %v1805 = vunpack.c.h.b16 %v417
    %v1806 = vunpack.c.l.b16 %v418
    %v1807 = vunpack.c.h.b16 %v418
    %v1808 = vunpack.c.l.b16 %v419
    %v1809 = vunpack.c.h.b16 %v419
    %v1810 = vunpack.c.l.b16 %v420
    %v1811 = vunpack.c.h.b16 %v420
    %v1812 = vunpack.c.l.b16 %v421
    %v1813 = vunpack.c.h.b16 %v421
    %v1814 = vunpack.c.l.b16 %v422
    %v1815 = vunpack.c.h.b16 %v422
    %v1816 = vunpack.c.l.b16 %v423
    %v1817 = vunpack.c.h.b16 %v423
    %v1818 = vunpack.c.l.b16 %v424
    %v1819 = vunpack.c.h.b16 %v424
    %v1820 = vunpack.c.l.b16 %v425
    %v1821 = vunpack.c.h.b16 %v425
    %v1822 = vunpack.c.l.b16 %v426
    %v1823 = vunpack.c.h.b16 %v426
    %v1824 = vunpack.c.l.b16 %v427
    %v1825 = vunpack.c.h.b16 %v427
    %v1826 = vunpack.c.l.b16 %v428
    %v1827 = vunpack.c.h.b16 %v428
    %v1828 = vunpack.c.l.b16 %v429
    %v1829 = vunpack.c.h.b16 %v429
    %v1830 = vunpack.c.l.b16 %v430
    %v1831 = vunpack.c.h.b16 %v430
    %v1832 = vunpack.c.l.b16 %v431
    %v1833 = vunpack.c.h.b16 %v431
    %v1834 = vpack.c.b16 %v1036, %v1034
    %v1835 = vpack.c.b16 %v1037, %v1035
    %v1836 = vpack.c.b16 %v1040, %v1038
    %v1837 = vpack.c.b16 %v1041, %v1039
    %v1838 = vpack.c.b16 %v1044, %v1042
    %v1839 = vpack.c.b16 %v1045, %v1043
    %v1840 = vpack.c.b16 %v1048, %v1046
    %v1841 = vpack.c.b16 %v1049, %v1047
    %v1842 = vpack.c.b16 %v1052, %v1050
    %v1843 = vpack.c.b16 %v1053, %v1051
    %v1844 = vpack.c.b16 %v1056, %v1054
    %v1845 = vpack.c.b16 %v1057, %v1055
    %v1846 = vpack.c.b16 %v1060, %v1058
    %v1847 = vpack.c.b16 %v1061, %v1059
    %v1848 = vpack.c.b16 %v1064, %v1062
    %v1849 = vpack.c.b16 %v1065, %v1063
    %v1850 = vpack.c.b16 %v1068, %v1066
    %v1851 = vpack.c.b16 %v1069, %v1067
    %v1852 = vpack.c.b16 %v1072, %v1070
    %v1853 = vpack.c.b16 %v1073, %v1071
    %v1854 = vpack.c.b16 %v1076, %v1074
    %v1855 = vpack.c.b16 %v1077, %v1075
    %v1856 = vpack.c.b16 %v1080, %v1078
    %v1857 = vpack.c.b16 %v1081, %v1079
    %v1858 = vpack.c.b16 %v1084, %v1082
    %v1859 = vpack.c.b16 %v1085, %v1083
    %v1860 = vpack.c.b16 %v1088, %v1086
    %v1861 = vpack.c.b16 %v1089, %v1087
    %v1862 = vpack.c.b16 %v1092, %v1090
    %v1863 = vpack.c.b16 %v1093, %v1091
    %v1864 = vpack.c.b16 %v1096, %v1094
    %v1865 = vpack.c.b16 %v1097, %v1095
    %v1866 = vpack.c.b16 %v1100, %v1098
    %v1867 = vpack.c.b16 %v1101, %v1099
    %v1868 = vpack.c.b16 %v1104, %v1102
    %v1869 = vpack.c.b16 %v1105, %v1103
    %v1870 = vpack.c.b16 %v1108, %v1106
    %v1871 = vpack.c.b16 %v1109, %v1107
    %v1872 = vpack.c.b16 %v1112, %v1110
    %v1873 = vpack.c.b16 %v1113, %v1111
    %v1874 = vpack.c.b16 %v1116, %v1114
    %v1875 = vpack.c.b16 %v1117, %v1115
    %v1876 = vpack.c.b16 %v1120, %v1118
    %v1877 = vpack.c.b16 %v1121, %v1119
    %v1878 = vpack.c.b16 %v1124, %v1122
    %v1879 = vpack.c.b16 %v1125, %v1123
    %v1880 = vpack.c.b16 %v1128, %v1126
    %v1881 = vpack.c.b16 %v1129, %v1127
    %v1882 = vpack.c.b16 %v1132, %v1130
    %v1883 = vpack.c.b16 %v1133, %v1131
    %v1884 = vpack.c.b16 %v1136, %v1134
    %v1885 = vpack.c.b16 %v1137, %v1135
    %v1886 = vpack.c.b16 %v1140, %v1138
    %v1887 = vpack.c.b16 %v1141, %v1139
    %v1888 = vpack.c.b16 %v1144, %v1142
    %v1889 = vpack.c.b16 %v1145, %v1143
    %v1890 = vpack.c.b16 %v1148, %v1146
    %v1891 = vpack.c.b16 %v1149, %v1147
    %v1892 = vpack.c.b16 %v1152, %v1150
    %v1893 = vpack.c.b16 %v1153, %v1151
    %v1894 = vpack.c.b16 %v1156, %v1154
    %v1895 = vpack.c.b16 %v1157, %v1155
    %v1896 = vpack.c.b16 %v1160, %v1158
    %v1897 = vpack.c.b16 %v1161, %v1159
    %v1898 = vpack.c.b16 %v1164, %v1162
    %v1899 = vpack.c.b16 %v1165, %v1163
    %v1900 = vpack.c.b16 %v1168, %v1166
    %v1901 = vpack.c.b16 %v1169, %v1167
    %v1902 = vpack.c.b16 %v1172, %v1170
    %v1903 = vpack.c.b16 %v1173, %v1171
    %v1904 = vpack.c.b16 %v1176, %v1174
    %v1905 = vpack.c.b16 %v1177, %v1175
    %v1906 = vpack.c.b16 %v1180, %v1178
    %v1907 = vpack.c.b16 %v1181, %v1179
    %v1908 = vpack.c.b16 %v1184, %v1182
    %v1909 = vpack.c.b16 %v1185, %v1183
    %v1910 = vpack.c.b16 %v1188, %v1186
    %v1911 = vpack.c.b16 %v1189, %v1187
    %v1912 = vpack.c.b16 %v1192, %v1190
    %v1913 = vpack.c.b16 %v1193, %v1191
    %v1914 = vpack.c.b16 %v1196, %v1194
    %v1915 = vpack.c.b16 %v1197, %v1195
    %v1916 = vpack.c.b16 %v1200, %v1198
    %v1917 = vpack.c.b16 %v1201, %v1199
    %v1918 = vpack.c.b16 %v1204, %v1202
    %v1919 = vpack.c.b16 %v1205, %v1203
    %v1920 = vpack.c.b16 %v1208, %v1206
    %v1921 = vpack.c.b16 %v1209, %v1207
    %v1922 = vpack.c.b16 %v1212, %v1210
    %v1923 = vpack.c.b16 %v1213, %v1211
    %v1924 = vpack.c.b16 %v1216, %v1214
    %v1925 = vpack.c.b16 %v1217, %v1215
    %v1926 = vpack.c.b16 %v1220, %v1218
    %v1927 = vpack.c.b16 %v1221, %v1219
    %v1928 = vpack.c.b16 %v1224, %v1222
    %v1929 = vpack.c.b16 %v1225, %v1223
    %v1930 = vpack.c.b16 %v1228, %v1226
    %v1931 = vpack.c.b16 %v1229, %v1227
    %v1932 = vpack.c.b16 %v1232, %v1230
    %v1933 = vpack.c.b16 %v1233, %v1231
    %v1934 = vpack.c.b16 %v1236, %v1234
    %v1935 = vpack.c.b16 %v1237, %v1235
    %v1936 = vpack.c.b16 %v1240, %v1238
    %v1937 = vpack.c.b16 %v1241, %v1239
    %v1938 = vpack.c.b16 %v1244, %v1242
    %v1939 = vpack.c.b16 %v1245, %v1243
    %v1940 = vpack.c.b16 %v1248, %v1246
    %v1941 = vpack.c.b16 %v1249, %v1247
    %v1942 = vpack.c.b16 %v1252, %v1250
    %v1943 = vpack.c.b16 %v1253, %v1251
    %v1944 = vpack.c.b16 %v1256, %v1254
    %v1945 = vpack.c.b16 %v1257, %v1255
    %v1946 = vpack.c.b16 %v1260, %v1258
    %v1947 = vpack.c.b16 %v1261, %v1259
    %v1948 = vpack.c.b16 %v1264, %v1262
    %v1949 = vpack.c.b16 %v1265, %v1263
    %v1950 = vpack.c.b16 %v1268, %v1266
    %v1951 = vpack.c.b16 %v1269, %v1267
    %v1952 = vpack.c.b16 %v1272, %v1270
    %v1953 = vpack.c.b16 %v1273, %v1271
    %v1954 = vpack.c.b16 %v1276, %v1274
    %v1955 = vpack.c.b16 %v1277, %v1275
    %v1956 = vpack.c.b16 %v1280, %v1278
    %v1957 = vpack.c.b16 %v1281, %v1279
    %v1958 = vpack.c.b16 %v1284, %v1282
    %v1959 = vpack.c.b16 %v1285, %v1283
    %v1960 = vpack.c.b16 %v1288, %v1286
    %v1961 = vpack.c.b16 %v1289, %v1287
    %v1962 = vpack.c.b16 %v1292, %v1290
    %v1963 = vpack.c.b16 %v1293, %v1291
    %v1964 = vpack.c.b16 %v1296, %v1294
    %v1965 = vpack.c.b16 %v1297, %v1295
    %v1966 = vpack.c.b16 %v1300, %v1298
    %v1967 = vpack.c.b16 %v1301, %v1299
    %v1968 = vpack.c.b16 %v1304, %v1302
    %v1969 = vpack.c.b16 %v1305, %v1303
    %v1970 = vpack.c.b16 %v1308, %v1306
    %v1971 = vpack.c.b16 %v1309, %v1307
    %v1972 = vpack.c.b16 %v1312, %v1310
    %v1973 = vpack.c.b16 %v1313, %v1311
    %v1974 = vpack.c.b16 %v1316, %v1314
    %v1975 = vpack.c.b16 %v1317, %v1315
    %v1976 = vpack.c.b16 %v1320, %v1318
    %v1977 = vpack.c.b16 %v1321, %v1319
    %v1978 = vpack.c.b16 %v1324, %v1322
    %v1979 = vpack.c.b16 %v1325, %v1323
    %v1980 = vpack.c.b16 %v1328, %v1326
    %v1981 = vpack.c.b16 %v1329, %v1327
    %v1982 = vpack.c.b16 %v1332, %v1330
    %v1983 = vpack.c.b16 %v1333, %v1331
    %v1984 = vpack.c.b16 %v1336, %v1334
    %v1985 = vpack.c.b16 %v1337, %v1335
    %v1986 = vpack.c.b16 %v1340, %v1338
    %v1987 = vpack.c.b16 %v1341, %v1339
    %v1988 = vpack.c.b16 %v1344, %v1342
    %v1989 = vpack.c.b16 %v1345, %v1343
    %v1990 = vpack.c.b16 %v1348, %v1346
    %v1991 = vpack.c.b16 %v1349, %v1347
    %v1992 = vpack.c.b16 %v1352, %v1350
    %v1993 = vpack.c.b16 %v1353, %v1351
    %v1994 = vpack.c.b16 %v1356, %v1354
    %v1995 = vpack.c.b16 %v1357, %v1355
    %v1996 = vpack.c.b16 %v1360, %v1358
    %v1997 = vpack.c.b16 %v1361, %v1359
    %v1998 = vpack.c.b16 %v1364, %v1362
    %v1999 = vpack.c.b16 %v1365, %v1363
    %v2000 = vpack.c.b16 %v1368, %v1366
    %v2001 = vpack.c.b16 %v1369, %v1367
    %v2002 = vpack.c.b16 %v1372, %v1370
    %v2003 = vpack.c.b16 %v1373, %v1371
    %v2004 = vpack.c.b16 %v1376, %v1374
    %v2005 = vpack.c.b16 %v1377, %v1375
    %v2006 = vpack.c.b16 %v1380, %v1378
    %v2007 = vpack.c.b16 %v1381, %v1379
    %v2008 = vpack.c.b16 %v1384, %v1382
    %v2009 = vpack.c.b16 %v1385, %v1383
    %v2010 = vpack.c.b16 %v1388, %v1386
    %v2011 = vpack.c.b16 %v1389, %v1387
    %v2012 = vpack.c.b16 %v1392, %v1390
    %v2013 = vpack.c.b16 %v1393, %v1391
    %v2014 = vpack.c.b16 %v1396, %v1394
    %v2015 = vpack.c.b16 %v1397, %v1395
    %v2016 = vpack.c.b16 %v1400, %v1398
    %v2017 = vpack.c.b16 %v1401, %v1399
    %v2018 = vpack.c.b16 %v1404, %v1402
    %v2019 = vpack.c.b16 %v1405, %v1403
    %v2020 = vpack.c.b16 %v1408, %v1406
    %v2021 = vpack.c.b16 %v1409, %v1407
    %v2022 = vpack.c.b16 %v1412, %v1410
    %v2023 = vpack.c.b16 %v1413, %v1411
    %v2024 = vpack.c.b16 %v1416, %v1414
    %v2025 = vpack.c.b16 %v1417, %v1415
    %v2026 = vpack.c.b16 %v1420, %v1418
    %v2027 = vpack.c.b16 %v1421, %v1419
    %v2028 = vpack.c.b16 %v1424, %v1422
    %v2029 = vpack.c.b16 %v1425, %v1423
    %v2030 = vpack.c.b16 %v1428, %v1426
    %v2031 = vpack.c.b16 %v1429, %v1427
    %v2032 = vpack.c.b16 %v1432, %v1430
    %v2033 = vpack.c.b16 %v1433, %v1431
    %v2034 = vpack.c.b16 %v1436, %v1434
    %v2035 = vpack.c.b16 %v1437, %v1435
    %v2036 = vpack.c.b16 %v1440, %v1438
    %v2037 = vpack.c.b16 %v1441, %v1439
    %v2038 = vpack.c.b16 %v1444, %v1442
    %v2039 = vpack.c.b16 %v1445, %v1443
    %v2040 = vpack.c.b16 %v1448, %v1446
    %v2041 = vpack.c.b16 %v1449, %v1447
    %v2042 = vpack.c.b16 %v1452, %v1450
    %v2043 = vpack.c.b16 %v1453, %v1451
    %v2044 = vpack.c.b16 %v1456, %v1454
    %v2045 = vpack.c.b16 %v1457, %v1455
    %v2046 = vpack.c.b16 %v1460, %v1458
    %v2047 = vpack.c.b16 %v1461, %v1459
    %v2048 = vpack.c.b16 %v1464, %v1462
    %v2049 = vpack.c.b16 %v1465, %v1463
    %v2050 = vpack.c.b16 %v1468, %v1466
    %v2051 = vpack.c.b16 %v1469, %v1467
    %v2052 = vpack.c.b16 %v1472, %v1470
    %v2053 = vpack.c.b16 %v1473, %v1471
    %v2054 = vpack.c.b16 %v1476, %v1474
    %v2055 = vpack.c.b16 %v1477, %v1475
    %v2056 = vpack.c.b16 %v1480, %v1478
    %v2057 = vpack.c.b16 %v1481, %v1479
    %v2058 = vpack.c.b16 %v1484, %v1482
    %v2059 = vpack.c.b16 %v1485, %v1483
    %v2060 = vpack.c.b16 %v1488, %v1486
    %v2061 = vpack.c.b16 %v1489, %v1487
    %v2062 = vpack.c.b16 %v1492, %v1490
    %v2063 = vpack.c.b16 %v1493, %v1491
    %v2064 = vpack.c.b16 %v1496, %v1494
    %v2065 = vpack.c.b16 %v1497, %v1495
    %v2066 = vpack.c.b16 %v1500, %v1498
    %v2067 = vpack.c.b16 %v1501, %v1499
    %v2068 = vpack.c.b16 %v1504, %v1502
    %v2069 = vpack.c.b16 %v1505, %v1503
    %v2070 = vpack.c.b16 %v1508, %v1506
    %v2071 = vpack.c.b16 %v1509, %v1507
    %v2072 = vpack.c.b16 %v1512, %v1510
    %v2073 = vpack.c.b16 %v1513, %v1511
    %v2074 = vpack.c.b16 %v1516, %v1514
    %v2075 = vpack.c.b16 %v1517, %v1515
    %v2076 = vpack.c.b16 %v1520, %v1518
    %v2077 = vpack.c.b16 %v1521, %v1519
    %v2078 = vpack.c.b16 %v1524, %v1522
    %v2079 = vpack.c.b16 %v1525, %v1523
    %v2080 = vpack.c.b16 %v1528, %v1526
    %v2081 = vpack.c.b16 %v1529, %v1527
    %v2082 = vpack.c.b16 %v1532, %v1530
    %v2083 = vpack.c.b16 %v1533, %v1531
    %v2084 = vpack.c.b16 %v1536, %v1534
    %v2085 = vpack.c.b16 %v1537, %v1535
    %v2086 = vpack.c.b16 %v1540, %v1538
    %v2087 = vpack.c.b16 %v1541, %v1539
    %v2088 = vpack.c.b16 %v1544, %v1542
    %v2089 = vpack.c.b16 %v1545, %v1543
    %v2090 = vpack.c.b16 %v1548, %v1546
    %v2091 = vpack.c.b16 %v1549, %v1547
    %v2092 = vpack.c.b16 %v1552, %v1550
    %v2093 = vpack.c.b16 %v1553, %v1551
    %v2094 = vpack.c.b16 %v1556, %v1554
    %v2095 = vpack.c.b16 %v1557, %v1555
    %v2096 = vpack.c.b16 %v1560, %v1558
    %v2097 = vpack.c.b16 %v1561, %v1559
    %v2098 = vpack.c.b16 %v1564, %v1562
    %v2099 = vpack.c.b16 %v1565, %v1563
    %v2100 = vpack.c.b16 %v1568, %v1566
    %v2101 = vpack.c.b16 %v1569, %v1567
    %v2102 = vpack.c.b16 %v1572, %v1570
    %v2103 = vpack.c.b16 %v1573, %v1571
    %v2104 = vpack.c.b16 %v1576, %v1574
    %v2105 = vpack.c.b16 %v1577, %v1575
    %v2106 = vpack.c.b16 %v1580, %v1578
    %v2107 = vpack.c.b16 %v1581, %v1579
    %v2108 = vpack.c.b16 %v1584, %v1582
    %v2109 = vpack.c.b16 %v1585, %v1583
    %v2110 = vpack.c.b16 %v1588, %v1586
    %v2111 = vpack.c.b16 %v1589, %v1587
    %v2112 = vpack.c.b16 %v1592, %v1590
    %v2113 = vpack.c.b16 %v1593, %v1591
    %v2114 = vpack.c.b16 %v1596, %v1594
    %v2115 = vpack.c.b16 %v1597, %v1595
    %v2116 = vpack.c.b16 %v1600, %v1598
    %v2117 = vpack.c.b16 %v1601, %v1599
    %v2118 = vpack.c.b16 %v1604, %v1602
    %v2119 = vpack.c.b16 %v1605, %v1603
    %v2120 = vpack.c.b16 %v1608, %v1606
    %v2121 = vpack.c.b16 %v1609, %v1607
    %v2122 = vpack.c.b16 %v1612, %v1610
    %v2123 = vpack.c.b16 %v1613, %v1611
    %v2124 = vpack.c.b16 %v1616, %v1614
    %v2125 = vpack.c.b16 %v1617, %v1615
    %v2126 = vpack.c.b16 %v1620, %v1618
    %v2127 = vpack.c.b16 %v1621, %v1619
    %v2128 = vpack.c.b16 %v1624, %v1622
    %v2129 = vpack.c.b16 %v1625, %v1623
    %v2130 = vpack.c.b16 %v1628, %v1626
    %v2131 = vpack.c.b16 %v1629, %v1627
    %v2132 = vpack.c.b16 %v1632, %v1630
    %v2133 = vpack.c.b16 %v1633, %v1631
    %v2134 = vpack.c.b16 %v1636, %v1634
    %v2135 = vpack.c.b16 %v1637, %v1635
    %v2136 = vpack.c.b16 %v1640, %v1638
    %v2137 = vpack.c.b16 %v1641, %v1639
    %v2138 = vpack.c.b16 %v1644, %v1642
    %v2139 = vpack.c.b16 %v1645, %v1643
    %v2140 = vpack.c.b16 %v1648, %v1646
    %v2141 = vpack.c.b16 %v1649, %v1647
    %v2142 = vpack.c.b16 %v1652, %v1650
    %v2143 = vpack.c.b16 %v1653, %v1651
    %v2144 = vpack.c.b16 %v1656, %v1654
    %v2145 = vpack.c.b16 %v1657, %v1655
    %v2146 = vpack.c.b16 %v1660, %v1658
    %v2147 = vpack.c.b16 %v1661, %v1659
    %v2148 = vpack.c.b16 %v1664, %v1662
    %v2149 = vpack.c.b16 %v1665, %v1663
    %v2150 = vpack.c.b16 %v1668, %v1666
    %v2151 = vpack.c.b16 %v1669, %v1667
    %v2152 = vpack.c.b16 %v1672, %v1670
    %v2153 = vpack.c.b16 %v1673, %v1671
    %v2154 = vpack.c.b16 %v1676, %v1674
    %v2155 = vpack.c.b16 %v1677, %v1675
    %v2156 = vpack.c.b16 %v1680, %v1678
    %v2157 = vpack.c.b16 %v1681, %v1679
    %v2158 = vpack.c.b16 %v1684, %v1682
    %v2159 = vpack.c.b16 %v1685, %v1683
    %v2160 = vpack.c.b16 %v1688, %v1686
    %v2161 = vpack.c.b16 %v1689, %v1687
    %v2162 = vpack.c.b16 %v1692, %v1690
    %v2163 = vpack.c.b16 %v1693, %v1691
    %v2164 = vpack.c.b16 %v1696, %v1694
    %v2165 = vpack.c.b16 %v1697, %v1695
    %v2166 = vpack.c.b16 %v1700, %v1698
    %v2167 = vpack.c.b16 %v1701, %v1699
    %v2168 = vpack.c.b16 %v1704, %v1702
    %v2169 = vpack.c.b16 %v1705, %v1703
    %v2170 = vpack.c.b16 %v1708, %v1706
    %v2171 = vpack.c.b16 %v1709, %v1707
    %v2172 = vpack.c.b16 %v1712, %v1710
    %v2173 = vpack.c.b16 %v1713, %v1711
    %v2174 = vpack.c.b16 %v1716, %v1714
    %v2175 = vpack.c.b16 %v1717, %v1715
    %v2176 = vpack.c.b16 %v1720, %v1718
    %v2177 = vpack.c.b16 %v1721, %v1719
    %v2178 = vpack.c.b16 %v1724, %v1722
    %v2179 = vpack.c.b16 %v1725, %v1723
    %v2180 = vpack.c.b16 %v1728, %v1726
    %v2181 = vpack.c.b16 %v1729, %v1727
    %v2182 = vpack.c.b16 %v1732, %v1730
    %v2183 = vpack.c.b16 %v1733, %v1731
    %v2184 = vpack.c.b16 %v1736, %v1734
    %v2185 = vpack.c.b16 %v1737, %v1735
    %v2186 = vpack.c.b16 %v1740, %v1738
    %v2187 = vpack.c.b16 %v1741, %v1739
    %v2188 = vpack.c.b16 %v1744, %v1742
    %v2189 = vpack.c.b16 %v1745, %v1743
    %v2190 = vpack.c.b16 %v1748, %v1746
    %v2191 = vpack.c.b16 %v1749, %v1747
    %v2192 = vpack.c.b16 %v1752, %v1750
    %v2193 = vpack.c.b16 %v1753, %v1751
    %v2194 = vpack.c.b16 %v1756, %v1754
    %v2195 = vpack.c.b16 %v1757, %v1755
    %v2196 = vpack.c.b16 %v1760, %v1758
    %v2197 = vpack.c.b16 %v1761, %v1759
    %v2198 = vpack.c.b16 %v1764, %v1762
    %v2199 = vpack.c.b16 %v1765, %v1763
    %v2200 = vpack.c.b16 %v1768, %v1766
    %v2201 = vpack.c.b16 %v1769, %v1767
    %v2202 = vpack.c.b16 %v1772, %v1770
    %v2203 = vpack.c.b16 %v1773, %v1771
    %v2204 = vpack.c.b16 %v1776, %v1774
    %v2205 = vpack.c.b16 %v1777, %v1775
    %v2206 = vpack.c.b16 %v1780, %v1778
    %v2207 = vpack.c.b16 %v1781, %v1779
    %v2208 = vpack.c.b16 %v1784, %v1782
    %v2209 = vpack.c.b16 %v1785, %v1783
    %v2210 = vpack.c.b16 %v1788, %v1786
    %v2211 = vpack.c.b16 %v1789, %v1787
    %v2212 = vpack.c.b16 %v1792, %v1790
    %v2213 = vpack.c.b16 %v1793, %v1791
    %v2214 = vpack.c.b16 %v1796, %v1794
    %v2215 = vpack.c.b16 %v1797, %v1795
    %v2216 = vpack.c.b16 %v1800, %v1798
    %v2217 = vpack.c.b16 %v1801, %v1799
    %v2218 = vpack.c.b16 %v1804, %v1802
    %v2219 = vpack.c.b16 %v1805, %v1803
    %v2220 = vpack.c.b16 %v1808, %v1806
    %v2221 = vpack.c.b16 %v1809, %v1807
    %v2222 = vpack.c.b16 %v1812, %v1810
    %v2223 = vpack.c.b16 %v1813, %v1811
    %v2224 = vpack.c.b16 %v1816, %v1814
    %v2225 = vpack.c.b16 %v1817, %v1815
    %v2226 = vpack.c.b16 %v1820, %v1818
    %v2227 = vpack.c.b16 %v1821, %v1819
    %v2228 = vpack.c.b16 %v1824, %v1822
    %v2229 = vpack.c.b16 %v1825, %v1823
    %v2230 = vpack.c.b16 %v1828, %v1826
    %v2231 = vpack.c.b16 %v1829, %v1827
    %v2232 = vpack.c.b16 %v1832, %v1830
    %v2233 = vpack.c.b16 %v1833, %v1831
    %2634 = vmatprep.subr.bf16.mxu0 %v1835
    %2635 = vmatpush1.bf16.msra.mxu0 %v1834
    %2636 = vmatprep.subr.bf16.mxu0 %v1837
    %2637 = vmatpush1.bf16.msra.mxu0 %v1836
    %2638 = vmatprep.subr.bf16.mxu0 %v1839
    %2639 = vmatpush1.bf16.msra.mxu0 %v1838
    %2640 = vmatprep.subr.bf16.mxu0 %v1841
    %2641 = vmatpush1.bf16.msra.mxu0 %v1840
    %2642 = vmatprep.subr.bf16.mxu0 %v1843
    %2643 = vmatpush1.bf16.msra.mxu0 %v1842
    %2644 = vmatprep.subr.bf16.mxu0 %v1845
    %2645 = vmatpush1.bf16.msra.mxu0 %v1844
    %2646 = vmatprep.subr.bf16.mxu0 %v1847
    %2647 = vmatpush1.bf16.msra.mxu0 %v1846
    %2648 = vmatprep.subr.bf16.mxu0 %v1849
    %2649 = vmatpush1.bf16.msra.mxu0 %v1848
    %2650 = vmatprep.subr.bf16.mxu0 %v1851
    %2651 = vmatpush1.bf16.msra.mxu0 %v1850
    %2652 = vmatprep.subr.bf16.mxu0 %v1853
    %2653 = vmatpush1.bf16.msra.mxu0 %v1852
    %2654 = vmatprep.subr.bf16.mxu0 %v1855
    %2655 = vmatpush1.bf16.msra.mxu0 %v1854
    %2656 = vmatprep.subr.bf16.mxu0 %v1857
    %2657 = vmatpush1.bf16.msra.mxu0 %v1856
    %2658 = vmatprep.subr.bf16.mxu0 %v1859
    %2659 = vmatpush1.bf16.msra.mxu0 %v1858
    %2660 = vmatprep.subr.bf16.mxu0 %v1861
    %2661 = vmatpush1.bf16.msra.mxu0 %v1860
    %2662 = vmatprep.subr.bf16.mxu0 %v1863
    %2663 = vmatpush1.bf16.msra.mxu0 %v1862
    %2664 = vmatprep.subr.bf16.mxu0 %v1865
    %2665 = vmatpush1.bf16.msra.mxu0 %v1864
    %2666 = vmatprep.mubr.bf16.mxu0 %v485
    %2667 = vmatmul.mubr.bf16.gmra.mrb[0].mxu0 %v471
    %v2668 = vpop.f32.mrb[0].mxu0
    %v2669 = vadd.f32 %v437, %v2668
    %v2670 = vpop.f32.mrb[0].mxu0
    %v2671 = vadd.f32 %v441, %v2670
    %v2672 = vpop.f32.mrb[0].mxu0
    %v2673 = vpop.f32.mrb[0].mxu0
    %2674 = vdwg.mxu0
    %2675 = vmatprep.subr.bf16.mxu0 %v1867
    %2676 = vmatpush1.bf16.msra.mxu0 %v1866
    %2677 = vmatprep.subr.bf16.mxu0 %v1869
    %2678 = vmatpush1.bf16.msra.mxu0 %v1868
    %2679 = vmatprep.subr.bf16.mxu0 %v1871
    %2680 = vmatpush1.bf16.msra.mxu0 %v1870
    %2681 = vmatprep.subr.bf16.mxu0 %v1873
    %2682 = vmatpush1.bf16.msra.mxu0 %v1872
    %2683 = vmatprep.subr.bf16.mxu0 %v1875
    %2684 = vmatpush1.bf16.msra.mxu0 %v1874
    %2685 = vmatprep.subr.bf16.mxu0 %v1877
    %2686 = vmatpush1.bf16.msra.mxu0 %v1876
    %2687 = vmatprep.subr.bf16.mxu0 %v1879
    %2688 = vmatpush1.bf16.msra.mxu0 %v1878
    %2689 = vmatprep.subr.bf16.mxu0 %v1881
    %2690 = vmatpush1.bf16.msra.mxu0 %v1880
    %2691 = vmatprep.subr.bf16.mxu0 %v1883
    %2692 = vmatpush1.bf16.msra.mxu0 %v1882
    %2693 = vmatprep.subr.bf16.mxu0 %v1885
    %2694 = vmatpush1.bf16.msra.mxu0 %v1884
    %2695 = vmatprep.subr.bf16.mxu0 %v1887
    %2696 = vmatpush1.bf16.msra.mxu0 %v1886
    %2697 = vmatprep.subr.bf16.mxu0 %v1889
    %2698 = vmatpush1.bf16.msra.mxu0 %v1888
    %2699 = vmatprep.subr.bf16.mxu0 %v1891
    %2700 = vmatpush1.bf16.msra.mxu0 %v1890
    %2701 = vmatprep.subr.bf16.mxu0 %v1893
    %2702 = vmatpush1.bf16.msra.mxu0 %v1892
    %2703 = vmatprep.subr.bf16.mxu0 %v1895
    %2704 = vmatpush1.bf16.msra.mxu0 %v1894
    %2705 = vmatprep.subr.bf16.mxu0 %v1897
    %2706 = vmatpush1.bf16.msra.mxu0 %v1896
    %2707 = vmatprep.mubr.bf16.mxu0 %v495
    %2708 = vmatmul.mubr.bf16.gmra.mrb[0].mxu0 %v493
    %v2709 = vpop.f32.mrb[0].mxu0
    %v2710 = vadd.f32 %v2669, %v2709
    %v2711 = vpop.f32.mrb[0].mxu0
    %v2712 = vadd.f32 %v2671, %v2711
    %v2713 = vpop.f32.mrb[0].mxu0
    %v2714 = vpop.f32.mrb[0].mxu0
    %2715 = vdwg.mxu0
    %2716 = vmatprep.subr.bf16.mxu0 %v1899
    %2717 = vmatpush1.bf16.msra.mxu0 %v1898
    %2718 = vmatprep.subr.bf16.mxu0 %v1901
    %2719 = vmatpush1.bf16.msra.mxu0 %v1900
    %2720 = vmatprep.subr.bf16.mxu0 %v1903
    %2721 = vmatpush1.bf16.msra.mxu0 %v1902
    %2722 = vmatprep.subr.bf16.mxu0 %v1905
    %2723 = vmatpush1.bf16.msra.mxu0 %v1904
    %2724 = vmatprep.subr.bf16.mxu0 %v1907
    %2725 = vmatpush1.bf16.msra.mxu0 %v1906
    %2726 = vmatprep.subr.bf16.mxu0 %v1909
    %2727 = vmatpush1.bf16.msra.mxu0 %v1908
    %2728 = vmatprep.subr.bf16.mxu0 %v1911
    %2729 = vmatpush1.bf16.msra.mxu0 %v1910
    %2730 = vmatprep.subr.bf16.mxu0 %v1913
    %2731 = vmatpush1.bf16.msra.mxu0 %v1912
    %2732 = vmatprep.subr.bf16.mxu0 %v1915
    %2733 = vmatpush1.bf16.msra.mxu0 %v1914
    %2734 = vmatprep.subr.bf16.mxu0 %v1917
    %2735 = vmatpush1.bf16.msra.mxu0 %v1916
    %2736 = vmatprep.subr.bf16.mxu0 %v1919
    %2737 = vmatpush1.bf16.msra.mxu0 %v1918
    %2738 = vmatprep.subr.bf16.mxu0 %v1921
    %2739 = vmatpush1.bf16.msra.mxu0 %v1920
    %2740 = vmatprep.subr.bf16.mxu0 %v1923
    %2741 = vmatpush1.bf16.msra.mxu0 %v1922
    %2742 = vmatprep.subr.bf16.mxu0 %v1925
    %2743 = vmatpush1.bf16.msra.mxu0 %v1924
    %2744 = vmatprep.subr.bf16.mxu0 %v1927
    %2745 = vmatpush1.bf16.msra.mxu0 %v1926
    %2746 = vmatprep.subr.bf16.mxu0 %v1929
    %2747 = vmatpush1.bf16.msra.mxu0 %v1928
    %2748 = vmatprep.mubr.bf16.mxu0 %v492
    %2749 = vmatmul.mubr.bf16.gmra.mrb[0].mxu0 %v478
    %v2750 = vpop.f32.mrb[0].mxu0
    %v2751 = vadd.f32 %v2710, %v2750
    %v2752 = vpop.f32.mrb[0].mxu0
    %v2753 = vadd.f32 %v2712, %v2752
    %v2754 = vpop.f32.mrb[0].mxu0
    %v2755 = vpop.f32.mrb[0].mxu0
    %2756 = vdwg.mxu0
    %2757 = vmatprep.subr.bf16.mxu0 %v1931
    %2758 = vmatpush1.bf16.msra.mxu0 %v1930
    %2759 = vmatprep.subr.bf16.mxu0 %v1933
    %2760 = vmatpush1.bf16.msra.mxu0 %v1932
    %2761 = vmatprep.subr.bf16.mxu0 %v1935
    %2762 = vmatpush1.bf16.msra.mxu0 %v1934
    %2763 = vmatprep.subr.bf16.mxu0 %v1937
    %2764 = vmatpush1.bf16.msra.mxu0 %v1936
    %2765 = vmatprep.subr.bf16.mxu0 %v1939
    %2766 = vmatpush1.bf16.msra.mxu0 %v1938
    %2767 = vmatprep.subr.bf16.mxu0 %v1941
    %2768 = vmatpush1.bf16.msra.mxu0 %v1940
    %2769 = vmatprep.subr.bf16.mxu0 %v1943
    %2770 = vmatpush1.bf16.msra.mxu0 %v1942
    %2771 = vmatprep.subr.bf16.mxu0 %v1945
    %2772 = vmatpush1.bf16.msra.mxu0 %v1944
    %2773 = vmatprep.subr.bf16.mxu0 %v1947
    %2774 = vmatpush1.bf16.msra.mxu0 %v1946
    %2775 = vmatprep.subr.bf16.mxu0 %v1949
    %2776 = vmatpush1.bf16.msra.mxu0 %v1948
    %2777 = vmatprep.subr.bf16.mxu0 %v1951
    %2778 = vmatpush1.bf16.msra.mxu0 %v1950
    %2779 = vmatprep.subr.bf16.mxu0 %v1953
    %2780 = vmatpush1.bf16.msra.mxu0 %v1952
    %2781 = vmatprep.subr.bf16.mxu0 %v1955
    %2782 = vmatpush1.bf16.msra.mxu0 %v1954
    %2783 = vmatprep.subr.bf16.mxu0 %v1957
    %2784 = vmatpush1.bf16.msra.mxu0 %v1956
    %2785 = vmatprep.subr.bf16.mxu0 %v1959
    %2786 = vmatpush1.bf16.msra.mxu0 %v1958
    %2787 = vmatprep.subr.bf16.mxu0 %v1961
    %2788 = vmatpush1.bf16.msra.mxu0 %v1960
    %2789 = vmatprep.mubr.bf16.mxu0 %v496
    %2790 = vmatmul.mubr.bf16.gmra.mrb[0].mxu0 %v494
    %v2791 = vpop.f32.mrb[0].mxu0
    %v2792 = vadd.f32 %v2751, %v2791
    %v2793 = vpop.f32.mrb[0].mxu0
    %v2794 = vadd.f32 %v2753, %v2793
    %v2795 = vpop.f32.mrb[0].mxu0
    %v2796 = vpop.f32.mrb[0].mxu0
    %2797 = vdwg.mxu0
    %2798 = vmatprep.subr.bf16.mxu0 %v1963
    %2799 = vmatpush1.bf16.msra.mxu0 %v1962
    %2800 = vmatprep.subr.bf16.mxu0 %v1965
    %2801 = vmatpush1.bf16.msra.mxu0 %v1964
    %2802 = vmatprep.subr.bf16.mxu0 %v1967
    %2803 = vmatpush1.bf16.msra.mxu0 %v1966
    %2804 = vmatprep.subr.bf16.mxu0 %v1969
    %2805 = vmatpush1.bf16.msra.mxu0 %v1968
    %2806 = vmatprep.subr.bf16.mxu0 %v1971
    %2807 = vmatpush1.bf16.msra.mxu0 %v1970
    %2808 = vmatprep.subr.bf16.mxu0 %v1973
    %2809 = vmatpush1.bf16.msra.mxu0 %v1972
    %2810 = vmatprep.subr.bf16.mxu0 %v1975
    %2811 = vmatpush1.bf16.msra.mxu0 %v1974
    %2812 = vmatprep.subr.bf16.mxu0 %v1977
    %2813 = vmatpush1.bf16.msra.mxu0 %v1976
    %2814 = vmatprep.subr.bf16.mxu0 %v1979
    %2815 = vmatpush1.bf16.msra.mxu0 %v1978
    %2816 = vmatprep.subr.bf16.mxu0 %v1981
    %2817 = vmatpush1.bf16.msra.mxu0 %v1980
    %2818 = vmatprep.subr.bf16.mxu0 %v1983
    %2819 = vmatpush1.bf16.msra.mxu0 %v1982
    %2820 = vmatprep.subr.bf16.mxu0 %v1985
    %2821 = vmatpush1.bf16.msra.mxu0 %v1984
    %2822 = vmatprep.subr.bf16.mxu0 %v1987
    %2823 = vmatpush1.bf16.msra.mxu0 %v1986
    %2824 = vmatprep.subr.bf16.mxu0 %v1989
    %2825 = vmatpush1.bf16.msra.mxu0 %v1988
    %2826 = vmatprep.subr.bf16.mxu0 %v1991
    %2827 = vmatpush1.bf16.msra.mxu0 %v1990
    %2828 = vmatprep.subr.bf16.mxu0 %v1993
    %2829 = vmatpush1.bf16.msra.mxu0 %v1992
    %2830 = vmatprep.mubr.bf16.mxu0 %v534
    %2831 = vmatmul.mubr.bf16.gmra.mrb[0].mxu0 %v520
    %v2832 = vpop.f32.mrb[0].mxu0
    %v2833 = vadd.f32 %v2792, %v2832
    %v2834 = vpop.f32.mrb[0].mxu0
    %v2835 = vadd.f32 %v2794, %v2834
    %v2836 = vpop.f32.mrb[0].mxu0
    %v2837 = vpop.f32.mrb[0].mxu0
    %2838 = vdwg.mxu0
    %2839 = vmatprep.subr.bf16.mxu0 %v1995
    %2840 = vmatpush1.bf16.msra.mxu0 %v1994
    %2841 = vmatprep.subr.bf16.mxu0 %v1997
    %2842 = vmatpush1.bf16.msra.mxu0 %v1996
    %2843 = vmatprep.subr.bf16.mxu0 %v1999
    %2844 = vmatpush1.bf16.msra.mxu0 %v1998
    %2845 = vmatprep.subr.bf16.mxu0 %v2001
    %2846 = vmatpush1.bf16.msra.mxu0 %v2000
    %2847 = vmatprep.subr.bf16.mxu0 %v2003
    %2848 = vmatpush1.bf16.msra.mxu0 %v2002
    %2849 = vmatprep.subr.bf16.mxu0 %v2005
    %2850 = vmatpush1.bf16.msra.mxu0 %v2004
    %2851 = vmatprep.subr.bf16.mxu0 %v2007
    %2852 = vmatpush1.bf16.msra.mxu0 %v2006
    %2853 = vmatprep.subr.bf16.mxu0 %v2009
    %2854 = vmatpush1.bf16.msra.mxu0 %v2008
    %2855 = vmatprep.subr.bf16.mxu0 %v2011
    %2856 = vmatpush1.bf16.msra.mxu0 %v2010
    %2857 = vmatprep.subr.bf16.mxu0 %v2013
    %2858 = vmatpush1.bf16.msra.mxu0 %v2012
    %2859 = vmatprep.subr.bf16.mxu0 %v2015
    %2860 = vmatpush1.bf16.msra.mxu0 %v2014
    %2861 = vmatprep.subr.bf16.mxu0 %v2017
    %2862 = vmatpush1.bf16.msra.mxu0 %v2016
    %2863 = vmatprep.subr.bf16.mxu0 %v2019
    %2864 = vmatpush1.bf16.msra.mxu0 %v2018
    %2865 = vmatprep.subr.bf16.mxu0 %v2021
    %2866 = vmatpush1.bf16.msra.mxu0 %v2020
    %2867 = vmatprep.subr.bf16.mxu0 %v2023
    %2868 = vmatpush1.bf16.msra.mxu0 %v2022
    %2869 = vmatprep.subr.bf16.mxu0 %v2025
    %2870 = vmatpush1.bf16.msra.mxu0 %v2024
    %2871 = vmatprep.mubr.bf16.mxu0 %v544
    %2872 = vmatmul.mubr.bf16.gmra.mrb[0].mxu0 %v542
    %v2873 = vpop.f32.mrb[0].mxu0
    %v2874 = vadd.f32 %v2833, %v2873
    %v2875 = vpop.f32.mrb[0].mxu0
    %v2876 = vadd.f32 %v2835, %v2875
    %v2877 = vpop.f32.mrb[0].mxu0
    %v2878 = vpop.f32.mrb[0].mxu0
    %2879 = vdwg.mxu0
    %2880 = vmatprep.subr.bf16.mxu0 %v2027
    %2881 = vmatpush1.bf16.msra.mxu0 %v2026
    %2882 = vmatprep.subr.bf16.mxu0 %v2029
    %2883 = vmatpush1.bf16.msra.mxu0 %v2028
    %2884 = vmatprep.subr.bf16.mxu0 %v2031
    %2885 = vmatpush1.bf16.msra.mxu0 %v2030
    %2886 = vmatprep.subr.bf16.mxu0 %v2033
    %2887 = vmatpush1.bf16.msra.mxu0 %v2032
    %2888 = vmatprep.subr.bf16.mxu0 %v2035
    %2889 = vmatpush1.bf16.msra.mxu0 %v2034
    %2890 = vmatprep.subr.bf16.mxu0 %v2037
    %2891 = vmatpush1.bf16.msra.mxu0 %v2036
    %2892 = vmatprep.subr.bf16.mxu0 %v2039
    %2893 = vmatpush1.bf16.msra.mxu0 %v2038
    %2894 = vmatprep.subr.bf16.mxu0 %v2041
    %2895 = vmatpush1.bf16.msra.mxu0 %v2040
    %2896 = vmatprep.subr.bf16.mxu0 %v2043
    %2897 = vmatpush1.bf16.msra.mxu0 %v2042
    %2898 = vmatprep.subr.bf16.mxu0 %v2045
    %2899 = vmatpush1.bf16.msra.mxu0 %v2044
    %2900 = vmatprep.subr.bf16.mxu0 %v2047
    %2901 = vmatpush1.bf16.msra.mxu0 %v2046
    %2902 = vmatprep.subr.bf16.mxu0 %v2049
    %2903 = vmatpush1.bf16.msra.mxu0 %v2048
    %2904 = vmatprep.subr.bf16.mxu0 %v2051
    %2905 = vmatpush1.bf16.msra.mxu0 %v2050
    %2906 = vmatprep.subr.bf16.mxu0 %v2053
    %2907 = vmatpush1.bf16.msra.mxu0 %v2052
    %2908 = vmatprep.subr.bf16.mxu0 %v2055
    %2909 = vmatpush1.bf16.msra.mxu0 %v2054
    %2910 = vmatprep.subr.bf16.mxu0 %v2057
    %2911 = vmatpush1.bf16.msra.mxu0 %v2056
    %2912 = vmatprep.mubr.bf16.mxu0 %v541
    %2913 = vmatmul.mubr.bf16.gmra.mrb[0].mxu0 %v527
    %v2914 = vpop.f32.mrb[0].mxu0
    %v2915 = vadd.f32 %v2874, %v2914
    %v2916 = vpop.f32.mrb[0].mxu0
    %v2917 = vadd.f32 %v2876, %v2916
    %v2918 = vpop.f32.mrb[0].mxu0
    %v2919 = vpop.f32.mrb[0].mxu0
    %2920 = vdwg.mxu0
    %2921 = vmatprep.subr.bf16.mxu0 %v2059
    %2922 = vmatpush1.bf16.msra.mxu0 %v2058
    %2923 = vmatprep.subr.bf16.mxu0 %v2061
    %2924 = vmatpush1.bf16.msra.mxu0 %v2060
    %2925 = vmatprep.subr.bf16.mxu0 %v2063
    %2926 = vmatpush1.bf16.msra.mxu0 %v2062
    %2927 = vmatprep.subr.bf16.mxu0 %v2065
    %2928 = vmatpush1.bf16.msra.mxu0 %v2064
    %2929 = vmatprep.subr.bf16.mxu0 %v2067
    %2930 = vmatpush1.bf16.msra.mxu0 %v2066
    %2931 = vmatprep.subr.bf16.mxu0 %v2069
    %2932 = vmatpush1.bf16.msra.mxu0 %v2068
    %2933 = vmatprep.subr.bf16.mxu0 %v2071
    %2934 = vmatpush1.bf16.msra.mxu0 %v2070
    %2935 = vmatprep.subr.bf16.mxu0 %v2073
    %2936 = vmatpush1.bf16.msra.mxu0 %v2072
    %2937 = vmatprep.subr.bf16.mxu0 %v2075
    %2938 = vmatpush1.bf16.msra.mxu0 %v2074
    %2939 = vmatprep.subr.bf16.mxu0 %v2077
    %2940 = vmatpush1.bf16.msra.mxu0 %v2076
    %2941 = vmatprep.subr.bf16.mxu0 %v2079
    %2942 = vmatpush1.bf16.msra.mxu0 %v2078
    %2943 = vmatprep.subr.bf16.mxu0 %v2081
    %2944 = vmatpush1.bf16.msra.mxu0 %v2080
    %2945 = vmatprep.subr.bf16.mxu0 %v2083
    %2946 = vmatpush1.bf16.msra.mxu0 %v2082
    %2947 = vmatprep.subr.bf16.mxu0 %v2085
    %2948 = vmatpush1.bf16.msra.mxu0 %v2084
    %2949 = vmatprep.subr.bf16.mxu0 %v2087
    %2950 = vmatpush1.bf16.msra.mxu0 %v2086
    %2951 = vmatprep.subr.bf16.mxu0 %v2089
    %2952 = vmatpush1.bf16.msra.mxu0 %v2088
    %2953 = vmatprep.mubr.bf16.mxu0 %v545
    %2954 = vmatmul.mubr.bf16.gmra.mrb[0].mxu0 %v543
    %v2955 = vpop.f32.mrb[0].mxu0
    %v2956 = vadd.f32 %v2915, %v2955
    %v2957 = vpop.f32.mrb[0].mxu0
    %v2958 = vadd.f32 %v2917, %v2957
    %v2959 = vpop.f32.mrb[0].mxu0
    %v2960 = vpop.f32.mrb[0].mxu0
    %2961 = vdwg.mxu0
    %2962 = vmatprep.subr.bf16.mxu0 %v2091
    %2963 = vmatpush1.bf16.msra.mxu0 %v2090
    %2964 = vmatprep.subr.bf16.mxu0 %v2093
    %2965 = vmatpush1.bf16.msra.mxu0 %v2092
    %2966 = vmatprep.subr.bf16.mxu0 %v2095
    %2967 = vmatpush1.bf16.msra.mxu0 %v2094
    %2968 = vmatprep.subr.bf16.mxu0 %v2097
    %2969 = vmatpush1.bf16.msra.mxu0 %v2096
    %2970 = vmatprep.subr.bf16.mxu0 %v2099
    %2971 = vmatpush1.bf16.msra.mxu0 %v2098
    %2972 = vmatprep.subr.bf16.mxu0 %v2101
    %2973 = vmatpush1.bf16.msra.mxu0 %v2100
    %2974 = vmatprep.subr.bf16.mxu0 %v2103
    %2975 = vmatpush1.bf16.msra.mxu0 %v2102
    %2976 = vmatprep.subr.bf16.mxu0 %v2105
    %2977 = vmatpush1.bf16.msra.mxu0 %v2104
    %2978 = vmatprep.subr.bf16.mxu0 %v2107
    %2979 = vmatpush1.bf16.msra.mxu0 %v2106
    %2980 = vmatprep.subr.bf16.mxu0 %v2109
    %2981 = vmatpush1.bf16.msra.mxu0 %v2108
    %2982 = vmatprep.subr.bf16.mxu0 %v2111
    %2983 = vmatpush1.bf16.msra.mxu0 %v2110
    %2984 = vmatprep.subr.bf16.mxu0 %v2113
    %2985 = vmatpush1.bf16.msra.mxu0 %v2112
    %2986 = vmatprep.subr.bf16.mxu0 %v2115
    %2987 = vmatpush1.bf16.msra.mxu0 %v2114
    %2988 = vmatprep.subr.bf16.mxu0 %v2117
    %2989 = vmatpush1.bf16.msra.mxu0 %v2116
    %2990 = vmatprep.subr.bf16.mxu0 %v2119
    %2991 = vmatpush1.bf16.msra.mxu0 %v2118
    %2992 = vmatprep.subr.bf16.mxu0 %v2121
    %2993 = vmatpush1.bf16.msra.mxu0 %v2120
    %2994 = vmatprep.mubr.bf16.mxu0 %v583
    %2995 = vmatmul.mubr.bf16.gmra.mrb[0].mxu0 %v569
    %v2996 = vpop.f32.mrb[0].mxu0
    %v2997 = vadd.f32 %v2956, %v2996
    %v2998 = vpop.f32.mrb[0].mxu0
    %v2999 = vadd.f32 %v2958, %v2998
    %v3000 = vpop.f32.mrb[0].mxu0
    %v3001 = vpop.f32.mrb[0].mxu0
    %3002 = vdwg.mxu0
    %3003 = vmatprep.subr.bf16.mxu0 %v2123
    %3004 = vmatpush1.bf16.msra.mxu0 %v2122
    %3005 = vmatprep.subr.bf16.mxu0 %v2125
    %3006 = vmatpush1.bf16.msra.mxu0 %v2124
    %3007 = vmatprep.subr.bf16.mxu0 %v2127
    %3008 = vmatpush1.bf16.msra.mxu0 %v2126
    %3009 = vmatprep.subr.bf16.mxu0 %v2129
    %3010 = vmatpush1.bf16.msra.mxu0 %v2128
    %3011 = vmatprep.subr.bf16.mxu0 %v2131
    %3012 = vmatpush1.bf16.msra.mxu0 %v2130
    %3013 = vmatprep.subr.bf16.mxu0 %v2133
    %3014 = vmatpush1.bf16.msra.mxu0 %v2132
    %3015 = vmatprep.subr.bf16.mxu0 %v2135
    %3016 = vmatpush1.bf16.msra.mxu0 %v2134
    %3017 = vmatprep.subr.bf16.mxu0 %v2137
    %3018 = vmatpush1.bf16.msra.mxu0 %v2136
    %3019 = vmatprep.subr.bf16.mxu0 %v2139
    %3020 = vmatpush1.bf16.msra.mxu0 %v2138
    %3021 = vmatprep.subr.bf16.mxu0 %v2141
    %3022 = vmatpush1.bf16.msra.mxu0 %v2140
    %3023 = vmatprep.subr.bf16.mxu0 %v2143
    %3024 = vmatpush1.bf16.msra.mxu0 %v2142
    %3025 = vmatprep.subr.bf16.mxu0 %v2145
    %3026 = vmatpush1.bf16.msra.mxu0 %v2144
    %3027 = vmatprep.subr.bf16.mxu0 %v2147
    %3028 = vmatpush1.bf16.msra.mxu0 %v2146
    %3029 = vmatprep.subr.bf16.mxu0 %v2149
    %3030 = vmatpush1.bf16.msra.mxu0 %v2148
    %3031 = vmatprep.subr.bf16.mxu0 %v2151
    %3032 = vmatpush1.bf16.msra.mxu0 %v2150
    %3033 = vmatprep.subr.bf16.mxu0 %v2153
    %3034 = vmatpush1.bf16.msra.mxu0 %v2152
    %3035 = vmatprep.mubr.bf16.mxu0 %v593
    %3036 = vmatmul.mubr.bf16.gmra.mrb[0].mxu0 %v591
    %v3037 = vpop.f32.mrb[0].mxu0
    %v3038 = vadd.f32 %v2997, %v3037
    %v3039 = vpop.f32.mrb[0].mxu0
    %v3040 = vadd.f32 %v2999, %v3039
    %v3041 = vpop.f32.mrb[0].mxu0
    %v3042 = vpop.f32.mrb[0].mxu0
    %3043 = vdwg.mxu0
    %3044 = vmatprep.subr.bf16.mxu0 %v2155
    %3045 = vmatpush1.bf16.msra.mxu0 %v2154
    %3046 = vmatprep.subr.bf16.mxu0 %v2157
    %3047 = vmatpush1.bf16.msra.mxu0 %v2156
    %3048 = vmatprep.subr.bf16.mxu0 %v2159
    %3049 = vmatpush1.bf16.msra.mxu0 %v2158
    %3050 = vmatprep.subr.bf16.mxu0 %v2161
    %3051 = vmatpush1.bf16.msra.mxu0 %v2160
    %3052 = vmatprep.subr.bf16.mxu0 %v2163
    %3053 = vmatpush1.bf16.msra.mxu0 %v2162
    %3054 = vmatprep.subr.bf16.mxu0 %v2165
    %3055 = vmatpush1.bf16.msra.mxu0 %v2164
    %3056 = vmatprep.subr.bf16.mxu0 %v2167
    %3057 = vmatpush1.bf16.msra.mxu0 %v2166
    %3058 = vmatprep.subr.bf16.mxu0 %v2169
    %3059 = vmatpush1.bf16.msra.mxu0 %v2168
    %3060 = vmatprep.subr.bf16.mxu0 %v2171
    %3061 = vmatpush1.bf16.msra.mxu0 %v2170
    %3062 = vmatprep.subr.bf16.mxu0 %v2173
    %3063 = vmatpush1.bf16.msra.mxu0 %v2172
    %3064 = vmatprep.subr.bf16.mxu0 %v2175
    %3065 = vmatpush1.bf16.msra.mxu0 %v2174
    %3066 = vmatprep.subr.bf16.mxu0 %v2177
    %3067 = vmatpush1.bf16.msra.mxu0 %v2176
    %3068 = vmatprep.subr.bf16.mxu0 %v2179
    %3069 = vmatpush1.bf16.msra.mxu0 %v2178
    %3070 = vmatprep.subr.bf16.mxu0 %v2181
    %3071 = vmatpush1.bf16.msra.mxu0 %v2180
    %3072 = vmatprep.subr.bf16.mxu0 %v2183
    %3073 = vmatpush1.bf16.msra.mxu0 %v2182
    %3074 = vmatprep.subr.bf16.mxu0 %v2185
    %3075 = vmatpush1.bf16.msra.mxu0 %v2184
    %3076 = vmatprep.mubr.bf16.mxu0 %v590
    %3077 = vmatmul.mubr.bf16.gmra.mrb[0].mxu0 %v576
    %v3078 = vpop.f32.mrb[0].mxu0
    %v3079 = vadd.f32 %v3038, %v3078
    %v3080 = vpop.f32.mrb[0].mxu0
    %v3081 = vadd.f32 %v3040, %v3080
    %v3082 = vpop.f32.mrb[0].mxu0
    %v3083 = vpop.f32.mrb[0].mxu0
    %3084 = vdwg.mxu0
    %3085 = vmatprep.subr.bf16.mxu0 %v2187
    %3086 = vmatpush1.bf16.msra.mxu0 %v2186
    %3087 = vmatprep.subr.bf16.mxu0 %v2189
    %3088 = vmatpush1.bf16.msra.mxu0 %v2188
    %3089 = vmatprep.subr.bf16.mxu0 %v2191
    %3090 = vmatpush1.bf16.msra.mxu0 %v2190
    %3091 = vmatprep.subr.bf16.mxu0 %v2193
    %3092 = vmatpush1.bf16.msra.mxu0 %v2192
    %3093 = vmatprep.subr.bf16.mxu0 %v2195
    %3094 = vmatpush1.bf16.msra.mxu0 %v2194
    %3095 = vmatprep.subr.bf16.mxu0 %v2197
    %3096 = vmatpush1.bf16.msra.mxu0 %v2196
    %3097 = vmatprep.subr.bf16.mxu0 %v2199
    %3098 = vmatpush1.bf16.msra.mxu0 %v2198
    %3099 = vmatprep.subr.bf16.mxu0 %v2201
    %3100 = vmatpush1.bf16.msra.mxu0 %v2200
    %3101 = vmatprep.subr.bf16.mxu0 %v2203
    %3102 = vmatpush1.bf16.msra.mxu0 %v2202
    %3103 = vmatprep.subr.bf16.mxu0 %v2205
    %3104 = vmatpush1.bf16.msra.mxu0 %v2204
    %3105 = vmatprep.subr.bf16.mxu0 %v2207
    %3106 = vmatpush1.bf16.msra.mxu0 %v2206
    %3107 = vmatprep.subr.bf16.mxu0 %v2209
    %3108 = vmatpush1.bf16.msra.mxu0 %v2208
    %3109 = vmatprep.subr.bf16.mxu0 %v2211
    %3110 = vmatpush1.bf16.msra.mxu0 %v2210
    %3111 = vmatprep.subr.bf16.mxu0 %v2213
    %3112 = vmatpush1.bf16.msra.mxu0 %v2212
    %3113 = vmatprep.subr.bf16.mxu0 %v2215
    %3114 = vmatpush1.bf16.msra.mxu0 %v2214
    %3115 = vmatprep.subr.bf16.mxu0 %v2217
    %3116 = vmatpush1.bf16.msra.mxu0 %v2216
    %3117 = vmatprep.mubr.bf16.mxu0 %v594
    %3118 = vmatmul.mubr.bf16.gmra.mrb[0].mxu0 %v592
    %v3119 = vpop.f32.mrb[0].mxu0
    %v3120 = vadd.f32 %v3079, %v3119
    %v3121 = vpop.f32.mrb[0].mxu0
    %v3122 = vadd.f32 %v3081, %v3121
    %v3123 = vpop.f32.mrb[0].mxu0
    %v3124 = vpop.f32.mrb[0].mxu0
    %3125 = vdwg.mxu0
    %3126 = vmatprep.subr.bf16.mxu0 %v2219
    %3127 = vmatpush1.bf16.msra.mxu0 %v2218
    %3128 = vmatprep.subr.bf16.mxu0 %v2221
    %3129 = vmatpush1.bf16.msra.mxu0 %v2220
    %3130 = vmatprep.subr.bf16.mxu0 %v2223
    %3131 = vmatpush1.bf16.msra.mxu0 %v2222
    %3132 = vmatprep.subr.bf16.mxu0 %v2225
    %3133 = vmatpush1.bf16.msra.mxu0 %v2224
    %3134 = vmatprep.subr.bf16.mxu0 %v2227
    %3135 = vmatpush1.bf16.msra.mxu0 %v2226
    %3136 = vmatprep.subr.bf16.mxu0 %v2229
    %3137 = vmatpush1.bf16.msra.mxu0 %v2228
    %3138 = vmatprep.subr.bf16.mxu0 %v2231
    %3139 = vmatpush1.bf16.msra.mxu0 %v2230
    %3140 = vmatprep.subr.bf16.mxu0 %v2233
    %3141 = vmatpush1.bf16.msra.mxu0 %v2232
    %3142 = vmatprep.subr.bf16.mxu0 0
    %3143 = vmatpush1.bf16.msra.mxu0 0
    %3144 = vmatprep.subr.bf16.mxu0 0
    %3145 = vmatpush1.bf16.msra.mxu0 0
    %3146 = vmatprep.subr.bf16.mxu0 0
    %3147 = vmatpush1.bf16.msra.mxu0 0
    %3148 = vmatprep.subr.bf16.mxu0 0
    %3149 = vmatpush1.bf16.msra.mxu0 0
    %3150 = vmatprep.subr.bf16.mxu0 0
    %3151 = vmatpush1.bf16.msra.mxu0 0
    %3152 = vmatprep.subr.bf16.mxu0 0
    %3153 = vmatpush1.bf16.msra.mxu0 0
    %3154 = vmatprep.subr.bf16.mxu0 0
    %3155 = vmatpush1.bf16.msra.mxu0 0
    %3156 = vmatprep.subr.bf16.mxu0 0
    %3157 = vmatpush1.bf16.msra.mxu0 0
    %3158 = vmatprep.mubr.bf16.mxu0 0
    %3159 = vmatmul.mubr.bf16.gmra.mrb[0].mxu0 %v608
    %v3160 = vpop.f32.mrb[0].mxu0
    %v3161 = vadd.f32 %v3120, %v3160
    %v3162 = vpop.f32.mrb[0].mxu0
    %v3163 = vadd.f32 %v3122, %v3162
    %v3164 = vpop.f32.mrb[0].mxu0
    %v3165 = vpop.f32.mrb[0].mxu0
    %3166 = vdwg.mxu0
    %v3167 = vmax.f32 %v3161, 0.0
    %v3168 = vmax.f32 %v3163, 0.0
    %v3169 = vpack.c.bf16 %v3167, %v3167
    %v3170 = vpack.c.bf16 %v3168, %v3168
    %v3171 = vld [vmem:[%s3] sm:$0xff]
    %v3172 = vld [vmem:[%s3 + $0x8] sm:$0xff]
    %v3173 = vld [vmem:[%s3 + $0x10] sm:$0xff]
    %v3174 = vld [vmem:[%s3 + $0x18] sm:$0xff]
    %v3175 = vld [vmem:[%s3 + $0x20] sm:$0xff]
    %v3176 = vld [vmem:[%s3 + $0x28] sm:$0xff]
    %v3177 = vld [vmem:[%s3 + $0x30] sm:$0xff]
    %v3178 = vld [vmem:[%s3 + $0x38] sm:$0xff]
    %v3179 = vld [vmem:[%s3 + $0x40] sm:$0xff]
    %v3180 = vld [vmem:[%s3 + $0x48] sm:$0xff]
    %v3181 = vld [vmem:[%s3 + $0x50] sm:$0xff]
    %v3182 = vld [vmem:[%s3 + $0x58] sm:$0xff]
    %v3183 = vld [vmem:[%s3 + $0x60] sm:$0xff]
    %v3184 = vld [vmem:[%s3 + $0x68] sm:$0xff]
    %v3185 = vld [vmem:[%s3 + $0x70] sm:$0xff]
    %v3186 = vld [vmem:[%s3 + $0x78] sm:$0xff]
    %v3187 = vld [vmem:[%s3 + $0x80] sm:$0xff]
    %v3188 = vld [vmem:[%s3 + $0x88] sm:$0xff]
    %v3189 = vld [vmem:[%s3 + $0x90] sm:$0xff]
    %v3190 = vld [vmem:[%s3 + $0x98] sm:$0xff]
    %v3191 = vld [vmem:[%s3 + $0xa0] sm:$0xff]
    %v3192 = vld [vmem:[%s3 + $0xa8] sm:$0xff]
    %v3193 = vld [vmem:[%s3 + $0xb0] sm:$0xff]
    %v3194 = vld [vmem:[%s3 + $0xb8] sm:$0xff]
    %v3195 = vld [vmem:[%s3 + $0xc0] sm:$0xff]
    %v3196 = vld [vmem:[%s3 + $0xc8] sm:$0xff]
    %v3197 = vld [vmem:[%s3 + $0xd0] sm:$0xff]
    %v3198 = vld [vmem:[%s3 + $0xd8] sm:$0xff]
    %v3199 = vld [vmem:[%s3 + $0xe0] sm:$0xff]
    %v3200 = vld [vmem:[%s3 + $0xe8] sm:$0xff]
    %v3201 = vld [vmem:[%s3 + $0xf0] sm:$0xff]
    %v3202 = vld [vmem:[%s3 + $0xf8] sm:$0xff]
    %v3203 = vld [vmem:[%s4] sm:$0x3]
    %v3205 = vlaneseq
    %v3206 = vshrl.u32 %v3205, 7
    %v3207 = vsub.s32 0, %v3206
    %v3208 = vrot.slane %v3203, %v3207
    %v3209 = vlaneseq
    %v3210 = vshrl.u32 %v3209, 7
    %v3211 = vsub.s32 1, %v3210
    %v3212 = vrot.slane %v3203, %v3211
    %v3247 = vunpack.c.l.b16 %v3171
    %v3248 = vunpack.c.h.b16 %v3171
    %v3249 = vunpack.c.l.b16 %v3172
    %v3250 = vunpack.c.h.b16 %v3172
    %v3251 = vunpack.c.l.b16 %v3173
    %v3252 = vunpack.c.h.b16 %v3173
    %v3253 = vunpack.c.l.b16 %v3174
    %v3254 = vunpack.c.h.b16 %v3174
    %v3255 = vunpack.c.l.b16 %v3175
    %v3256 = vunpack.c.h.b16 %v3175
    %v3257 = vunpack.c.l.b16 %v3176
    %v3258 = vunpack.c.h.b16 %v3176
    %v3259 = vunpack.c.l.b16 %v3177
    %v3260 = vunpack.c.h.b16 %v3177
    %v3261 = vunpack.c.l.b16 %v3178
    %v3262 = vunpack.c.h.b16 %v3178
    %v3263 = vunpack.c.l.b16 %v3179
    %v3264 = vunpack.c.h.b16 %v3179
    %v3265 = vunpack.c.l.b16 %v3180
    %v3266 = vunpack.c.h.b16 %v3180
    %v3267 = vunpack.c.l.b16 %v3181
    %v3268 = vunpack.c.h.b16 %v3181
    %v3269 = vunpack.c.l.b16 %v3182
    %v3270 = vunpack.c.h.b16 %v3182
    %v3271 = vunpack.c.l.b16 %v3183
    %v3272 = vunpack.c.h.b16 %v3183
    %v3273 = vunpack.c.l.b16 %v3184
    %v3274 = vunpack.c.h.b16 %v3184
    %v3275 = vunpack.c.l.b16 %v3185
    %v3276 = vunpack.c.h.b16 %v3185
    %v3277 = vunpack.c.l.b16 %v3186
    %v3278 = vunpack.c.h.b16 %v3186
    %v3279 = vunpack.c.l.b16 %v3187
    %v3280 = vunpack.c.h.b16 %v3187
    %v3281 = vunpack.c.l.b16 %v3188
    %v3282 = vunpack.c.h.b16 %v3188
    %v3283 = vunpack.c.l.b16 %v3189
    %v3284 = vunpack.c.h.b16 %v3189
    %v3285 = vunpack.c.l.b16 %v3190
    %v3286 = vunpack.c.h.b16 %v3190
    %v3287 = vunpack.c.l.b16 %v3191
    %v3288 = vunpack.c.h.b16 %v3191
    %v3289 = vunpack.c.l.b16 %v3192
    %v3290 = vunpack.c.h.b16 %v3192
    %v3291 = vunpack.c.l.b16 %v3193
    %v3292 = vunpack.c.h.b16 %v3193
    %v3293 = vunpack.c.l.b16 %v3194
    %v3294 = vunpack.c.h.b16 %v3194
    %v3295 = vunpack.c.l.b16 %v3195
    %v3296 = vunpack.c.h.b16 %v3195
    %v3297 = vunpack.c.l.b16 %v3196
    %v3298 = vunpack.c.h.b16 %v3196
    %v3299 = vunpack.c.l.b16 %v3197
    %v3300 = vunpack.c.h.b16 %v3197
    %v3301 = vunpack.c.l.b16 %v3198
    %v3302 = vunpack.c.h.b16 %v3198
    %v3303 = vunpack.c.l.b16 %v3199
    %v3304 = vunpack.c.h.b16 %v3199
    %v3305 = vunpack.c.l.b16 %v3200
    %v3306 = vunpack.c.h.b16 %v3200
    %v3307 = vunpack.c.l.b16 %v3201
    %v3308 = vunpack.c.h.b16 %v3201
    %v3309 = vunpack.c.l.b16 %v3202
    %v3310 = vunpack.c.h.b16 %v3202
    %v3311 = vpack.c.b16 %v3249, %v3247
    %v3312 = vpack.c.b16 %v3250, %v3248
    %v3313 = vpack.c.b16 %v3253, %v3251
    %v3314 = vpack.c.b16 %v3254, %v3252
    %v3315 = vpack.c.b16 %v3257, %v3255
    %v3316 = vpack.c.b16 %v3258, %v3256
    %v3317 = vpack.c.b16 %v3261, %v3259
    %v3318 = vpack.c.b16 %v3262, %v3260
    %v3319 = vpack.c.b16 %v3265, %v3263
    %v3320 = vpack.c.b16 %v3266, %v3264
    %v3321 = vpack.c.b16 %v3269, %v3267
    %v3322 = vpack.c.b16 %v3270, %v3268
    %v3323 = vpack.c.b16 %v3273, %v3271
    %v3324 = vpack.c.b16 %v3274, %v3272
    %v3325 = vpack.c.b16 %v3277, %v3275
    %v3326 = vpack.c.b16 %v3278, %v3276
    %v3327 = vpack.c.b16 %v3281, %v3279
    %v3328 = vpack.c.b16 %v3282, %v3280
    %v3329 = vpack.c.b16 %v3285, %v3283
    %v3330 = vpack.c.b16 %v3286, %v3284
    %v3331 = vpack.c.b16 %v3289, %v3287
    %v3332 = vpack.c.b16 %v3290, %v3288
    %v3333 = vpack.c.b16 %v3293, %v3291
    %v3334 = vpack.c.b16 %v3294, %v3292
    %v3335 = vpack.c.b16 %v3297, %v3295
    %v3336 = vpack.c.b16 %v3298, %v3296
    %v3337 = vpack.c.b16 %v3301, %v3299
    %v3338 = vpack.c.b16 %v3302, %v3300
    %v3339 = vpack.c.b16 %v3305, %v3303
    %v3340 = vpack.c.b16 %v3306, %v3304
    %v3341 = vpack.c.b16 %v3309, %v3307
    %v3342 = vpack.c.b16 %v3310, %v3308
    %3375 = vmatprep.subr.bf16.mxu0 %v3312
    %3376 = vmatpush1.bf16.msra.mxu0 %v3311
    %3377 = vmatprep.subr.bf16.mxu0 %v3314
    %3378 = vmatpush1.bf16.msra.mxu0 %v3313
    %3379 = vmatprep.subr.bf16.mxu0 %v3316
    %3380 = vmatpush1.bf16.msra.mxu0 %v3315
    %3381 = vmatprep.subr.bf16.mxu0 %v3318
    %3382 = vmatpush1.bf16.msra.mxu0 %v3317
    %3383 = vmatprep.subr.bf16.mxu0 %v3320
    %3384 = vmatpush1.bf16.msra.mxu0 %v3319
    %3385 = vmatprep.subr.bf16.mxu0 %v3322
    %3386 = vmatpush1.bf16.msra.mxu0 %v3321
    %3387 = vmatprep.subr.bf16.mxu0 %v3324
    %3388 = vmatpush1.bf16.msra.mxu0 %v3323
    %3389 = vmatprep.subr.bf16.mxu0 %v3326
    %3390 = vmatpush1.bf16.msra.mxu0 %v3325
    %3391 = vmatprep.subr.bf16.mxu0 %v3328
    %3392 = vmatpush1.bf16.msra.mxu0 %v3327
    %3393 = vmatprep.subr.bf16.mxu0 %v3330
    %3394 = vmatpush1.bf16.msra.mxu0 %v3329
    %3395 = vmatprep.subr.bf16.mxu0 %v3332
    %3396 = vmatpush1.bf16.msra.mxu0 %v3331
    %3397 = vmatprep.subr.bf16.mxu0 %v3334
    %3398 = vmatpush1.bf16.msra.mxu0 %v3333
    %3399 = vmatprep.subr.bf16.mxu0 %v3336
    %3400 = vmatpush1.bf16.msra.mxu0 %v3335
    %3401 = vmatprep.subr.bf16.mxu0 %v3338
    %3402 = vmatpush1.bf16.msra.mxu0 %v3337
    %3403 = vmatprep.subr.bf16.mxu0 %v3340
    %3404 = vmatpush1.bf16.msra.mxu0 %v3339
    %3405 = vmatprep.subr.bf16.mxu0 %v3342
    %3406 = vmatpush1.bf16.msra.mxu0 %v3341
    %3407 = vmatprep.mubr.bf16.mxu0 %v3170
    %3408 = vmatmul.mubr.bf16.gmra.mrb[0].mxu0 %v3169
    %v3409 = vpop.f32.mrb[0].mxu0
    %v3410 = vadd.f32 %v3208, %v3409
    %v3411 = vpop.f32.mrb[0].mxu0
    %v3412 = vadd.f32 %v3212, %v3411
    %v3413 = vpop.f32.mrb[0].mxu0
    %v3414 = vpop.f32.mrb[0].mxu0
    %3415 = vdwg.mxu0
    %v3416 = vmax.f32 %v3410, 0.0
    %v3417 = vmax.f32 %v3412, 0.0
    %v3418 = vpack.c.bf16 %v3416, %v3416
    %v3419 = vpack.c.bf16 %v3417, %v3417
    %v3420 = vld [vmem:[%s5] sm:$0xf]
    %v3421 = vld [vmem:[%s5 + $0x4] sm:$0xf]
    %v3422 = vld [vmem:[%s5 + $0x8] sm:$0xf]
    %v3423 = vld [vmem:[%s5 + $0xc] sm:$0xf]
    %v3424 = vld [vmem:[%s5 + $0x10] sm:$0xf]
    %v3425 = vld [vmem:[%s5 + $0x14] sm:$0xf]
    %v3426 = vld [vmem:[%s5 + $0x18] sm:$0xf]
    %v3427 = vld [vmem:[%s5 + $0x1c] sm:$0xf]
    %v3428 = vld [vmem:[%s5 + $0x20] sm:$0xf]
    %v3429 = vld [vmem:[%s5 + $0x24] sm:$0xf]
    %v3430 = vld [vmem:[%s5 + $0x28] sm:$0xf]
    %v3431 = vld [vmem:[%s5 + $0x2c] sm:$0xf]
    %v3432 = vld [vmem:[%s5 + $0x30] sm:$0xf]
    %v3433 = vld [vmem:[%s5 + $0x34] sm:$0xf]
    %v3434 = vld [vmem:[%s5 + $0x38] sm:$0xf]
    %v3435 = vld [vmem:[%s5 + $0x3c] sm:$0xf]
    %v3436 = vld [vmem:[%s5 + $0x40] sm:$0xf]
    %v3437 = vld [vmem:[%s5 + $0x44] sm:$0xf]
    %v3438 = vld [vmem:[%s5 + $0x48] sm:$0xf]
    %v3439 = vld [vmem:[%s5 + $0x4c] sm:$0xf]
    %v3440 = vld [vmem:[%s5 + $0x50] sm:$0xf]
    %v3441 = vld [vmem:[%s5 + $0x54] sm:$0xf]
    %v3442 = vld [vmem:[%s5 + $0x58] sm:$0xf]
    %v3443 = vld [vmem:[%s5 + $0x5c] sm:$0xf]
    %v3444 = vld [vmem:[%s5 + $0x60] sm:$0xf]
    %v3445 = vld [vmem:[%s5 + $0x64] sm:$0xf]
    %v3446 = vld [vmem:[%s5 + $0x68] sm:$0xf]
    %v3447 = vld [vmem:[%s5 + $0x6c] sm:$0xf]
    %v3448 = vld [vmem:[%s5 + $0x70] sm:$0xf]
    %v3449 = vld [vmem:[%s5 + $0x74] sm:$0xf]
    %v3450 = vld [vmem:[%s5 + $0x78] sm:$0xf]
    %v3451 = vld [vmem:[%s5 + $0x7c] sm:$0xf]
    %v3452 = vld [vmem:[%s6] sm:$0x1]
    %v3454 = vlaneseq
    %v3455 = vshrl.u32 %v3454, 7
    %v3456 = vsub.s32 0, %v3455
    %v3457 = vrot.slane %v3452, %v3456
    %v3491 = vunpack.c.l.b16 %v3420
    %v3492 = vunpack.c.l.b16 %v3421
    %v3493 = vunpack.c.l.b16 %v3422
    %v3494 = vunpack.c.l.b16 %v3423
    %v3495 = vunpack.c.l.b16 %v3424
    %v3496 = vunpack.c.l.b16 %v3425
    %v3497 = vunpack.c.l.b16 %v3426
    %v3498 = vunpack.c.l.b16 %v3427
    %v3499 = vunpack.c.l.b16 %v3428
    %v3500 = vunpack.c.l.b16 %v3429
    %v3501 = vunpack.c.l.b16 %v3430
    %v3502 = vunpack.c.l.b16 %v3431
    %v3503 = vunpack.c.l.b16 %v3432
    %v3504 = vunpack.c.l.b16 %v3433
    %v3505 = vunpack.c.l.b16 %v3434
    %v3506 = vunpack.c.l.b16 %v3435
    %v3507 = vunpack.c.l.b16 %v3436
    %v3508 = vunpack.c.l.b16 %v3437
    %v3509 = vunpack.c.l.b16 %v3438
    %v3510 = vunpack.c.l.b16 %v3439
    %v3511 = vunpack.c.l.b16 %v3440
    %v3512 = vunpack.c.l.b16 %v3441
    %v3513 = vunpack.c.l.b16 %v3442
    %v3514 = vunpack.c.l.b16 %v3443
    %v3515 = vunpack.c.l.b16 %v3444
    %v3516 = vunpack.c.l.b16 %v3445
    %v3517 = vunpack.c.l.b16 %v3446
    %v3518 = vunpack.c.l.b16 %v3447
    %v3519 = vunpack.c.l.b16 %v3448
    %v3520 = vunpack.c.l.b16 %v3449
    %v3521 = vunpack.c.l.b16 %v3450
    %v3522 = vunpack.c.l.b16 %v3451
    %v3523 = vpack.c.b16 %v3492, %v3491
    %v3524 = vpack.c.b16 %v3494, %v3493
    %v3525 = vpack.c.b16 %v3496, %v3495
    %v3526 = vpack.c.b16 %v3498, %v3497
    %v3527 = vpack.c.b16 %v3500, %v3499
    %v3528 = vpack.c.b16 %v3502, %v3501
    %v3529 = vpack.c.b16 %v3504, %v3503
    %v3530 = vpack.c.b16 %v3506, %v3505
    %v3531 = vpack.c.b16 %v3508, %v3507
    %v3532 = vpack.c.b16 %v3510, %v3509
    %v3533 = vpack.c.b16 %v3512, %v3511
    %v3534 = vpack.c.b16 %v3514, %v3513
    %v3535 = vpack.c.b16 %v3516, %v3515
    %v3536 = vpack.c.b16 %v3518, %v3517
    %v3537 = vpack.c.b16 %v3520, %v3519
    %v3538 = vpack.c.b16 %v3522, %v3521
    %3555 = vmatprep.subr.bf16.mxu0 0
    %3556 = vmatpush1.bf16.msra.mxu0 %v3523
    %3557 = vmatprep.subr.bf16.mxu0 0
    %3558 = vmatpush1.bf16.msra.mxu0 %v3524
    %3559 = vmatprep.subr.bf16.mxu0 0
    %3560 = vmatpush1.bf16.msra.mxu0 %v3525
    %3561 = vmatprep.subr.bf16.mxu0 0
    %3562 = vmatpush1.bf16.msra.mxu0 %v3526
    %3563 = vmatprep.subr.bf16.mxu0 0
    %3564 = vmatpush1.bf16.msra.mxu0 %v3527
    %3565 = vmatprep.subr.bf16.mxu0 0
    %3566 = vmatpush1.bf16.msra.mxu0 %v3528
    %3567 = vmatprep.subr.bf16.mxu0 0
    %3568 = vmatpush1.bf16.msra.mxu0 %v3529
    %3569 = vmatprep.subr.bf16.mxu0 0
    %3570 = vmatpush1.bf16.msra.mxu0 %v3530
    %3571 = vmatprep.subr.bf16.mxu0 0
    %3572 = vmatpush1.bf16.msra.mxu0 %v3531
    %3573 = vmatprep.subr.bf16.mxu0 0
    %3574 = vmatpush1.bf16.msra.mxu0 %v3532
    %3575 = vmatprep.subr.bf16.mxu0 0
    %3576 = vmatpush1.bf16.msra.mxu0 %v3533
    %3577 = vmatprep.subr.bf16.mxu0 0
    %3578 = vmatpush1.bf16.msra.mxu0 %v3534
    %3579 = vmatprep.subr.bf16.mxu0 0
    %3580 = vmatpush1.bf16.msra.mxu0 %v3535
    %3581 = vmatprep.subr.bf16.mxu0 0
    %3582 = vmatpush1.bf16.msra.mxu0 %v3536
    %3583 = vmatprep.subr.bf16.mxu0 0
    %3584 = vmatpush1.bf16.msra.mxu0 %v3537
    %3585 = vmatprep.subr.bf16.mxu0 0
    %3586 = vmatpush1.bf16.msra.mxu0 %v3538
    %3587 = vmatprep.mubr.bf16.mxu0 %v3419
    %3588 = vmatmul.mubr.bf16.gmra.mrb[0].mxu0 %v3418
    %v3589 = vpop.f32.mrb[0].mxu0
    %v3590 = vadd.f32 %v3457, %v3589
    %v3591 = vpop.f32.mrb[0].mxu0
    %v3592 = vpop.f32.mrb[0].mxu0
    %v3593 = vpop.f32.mrb[0].mxu0
    %3594 = vdwg.mxu0
    %3595 = vst [vmem:[#allocation2] sm:$0x3] %v3590
    // Predicated region
    $region30: #{subnet_forward.5} parent=1 // pred_check
      _
    $region31: #{subnet_forward.5} parent=1 // pred_check_branch
      %3597 = sbr.rel (0) target = $region33
    $region32: #{subnet_forward.5} parent=1 // pred_region
      %s3599 = ssub.s32 32, 32
      %3600 = vsyncadd [#allocation3], %s3599
      %s3602 = sshll.u32 [#allocation2], 4
      %s3603 = int_to_ptr.vmem [resolvable:$true] %s3602
      %3605 = dma.vmem_to_hbm [thread:$0]  %s3603, 32, %s7, [#allocation3]
    $region33: #{subnet_forward.5} parent=1 // pred_fallthru
      _
    // Predicated region
    $region34: #{subnet_forward.5} parent=1 // pred_check
      _
    $region35: #{subnet_forward.5} parent=1 // pred_check_branch
      %3607 = sbr.rel (0) target = $region37
    $region36: #{subnet_forward.5} parent=1 // pred_region
      %3608 = dma.done [#allocation3], 32
    $region37: #{subnet_forward.5} parent=1 // pred_fallthru
      _
    %3609 = vsyncpa [#allocation3], 1

</llo_original>
